<compile_context>
chip_gen: v5e
topology: v5e:2x2
jax: 0.10.0
libtpu: 0.0.40
codegen_flags: <defaults>
</compile_context>

<pallas_src>
import jax
import jax.numpy as jnp
from jax.experimental import pallas as pl
from jax.experimental.pallas import tpu as pltpu

LANE, SUBLANE = 128, 8


def _round_up(x, m):
    return (x + m - 1) // m * m


# --------------------------------------------------------------------------
# Pallas kernel
# --------------------------------------------------------------------------
def decoder_kernel(x_ref, len_ref, ses_ref,
                   w_in_ref, b_in_ref, whh_ref, bhh_n_ref,
                   w_s2d_ref, b_s2d_ref, w_sinf_ref, w_dec_ref, w_out_ref,
                   out_ref,
                   h_carry, proj_sc, hid_sc, emb_sc, sesinf_sc):
    # x_ref   : (tT, B, E)  bf16 embedded tokens, chunk min(i, nblk-1)
    # len_ref : (B, 1)      int32 lengths (loaded once)
    # ses_ref : (B, C)      f32 session encoding
    # w_in    : (E, 3Hp+Fp) bf16  [W_ih (gate-padded) | W_emb_inf (maxout-permuted, lane-padded)]
    # b_in    : (1, 3Hp+Fp) f32   [b_ih + b_hh(r,z)   | b_emb_inf]
    # whh     : (Hp, 3Hp)   f32, bhh_n: (1, Hp) f32 (stays inside r*(...))
    # w_s2d/b_s2d : (C,Hp)/(1,Hp) f32   ses_to_dec
    # w_sinf  : (C, Fp) f32,  w_dec: (Hp, Fp) bf16,  w_out: (Ep, Vp) bf16
    # out_ref : (tT, B, Vp) f32 logits of chunk i-1 (pipeline-shifted)
    i = pl.program_id(0)
    nblk = pl.num_programs(0) - 1          # number of real T-chunks (grid = nblk+1)
    cur = i % 2
    prev = 1 - cur

    tT, Bp, E = x_ref.shape
    Hp = h_carry.shape[1]
    Fp = sesinf_sc.shape[1]
    halfp = Fp // 2
    Vp = out_ref.shape[-1]

    # ---- one-time init: h0 = tanh(ses @ W_s2d + b), ses_inf (grid-invariant) ----
    @pl.when(i == 0)
    def _():
        ses = ses_ref[...]
        h_carry[...] = jnp.tanh(
            jnp.dot(ses, w_s2d_ref[...], preferred_element_type=jnp.float32)
            + b_s2d_ref[...])
        sesinf_sc[...] = jnp.dot(ses, w_sinf_ref[...],
                                 preferred_element_type=jnp.float32)

    # ===================== phase R: recurrence for chunk ci =====================
    # ci is clamped: the trailing pipeline step (i == nblk) recomputes the last
    # chunk redundantly into buffer `cur`, which is never consumed -> harmless.
    ci = jnp.minimum(i, nblk - 1)

    # fused input projection: one wide bf16 MXU matmul per chunk
    x_flat = x_ref[...].reshape(tT * Bp, E)                             # bf16
    full = jnp.dot(x_flat, w_in_ref[...],
                   preferred_element_type=jnp.float32) + b_in_ref[...]
    proj_sc[...] = full[:, :3 * Hp].reshape(tT, Bp, 3 * Hp)             # GRU input proj
    emb_sc[cur] = full[:, 3 * Hp:]                                      # emb_inf (tT*B, Fp)

    whh = whh_ref[...]
    bhh_n = jnp.broadcast_to(bhh_n_ref[...], (Bp, Hp))                  # hoisted broadcast

    # latency-bound recurrence: only the small dependent matmul + gate math.
    h = h_carry[...]
    hs = []
    for t in range(tT):
        xp = proj_sc[t]                                                 # (B, 3Hp)
        hp = jnp.dot(h, whh, preferred_element_type=jnp.float32)
        r = jax.nn.sigmoid(xp[:, :Hp] + hp[:, :Hp])
        z = jax.nn.sigmoid(xp[:, Hp:2 * Hp] + hp[:, Hp:2 * Hp])
        n = jnp.tanh(xp[:, 2 * Hp:] + r * (hp[:, 2 * Hp:] + bhh_n))
        h = (1.0 - z) * n + z * h
        hs.append(h)
    h_carry[...] = h

    # pad_packed mask, built in-kernel (no per-chunk mask DMA), applied once
    # off the critical h chain.
    cs = ci * tT
    lenv = len_ref[...]                                                 # (B, 1) int32
    mask = jnp.stack([((cs + t) < lenv) for t in range(tT)],
                     axis=0).astype(jnp.float32)                        # (tT, B, 1)
    hid_sc[cur] = jnp.stack(hs, axis=0) * mask

    # ======= phase P: post-processing of chunk i-1 (buffer `prev`) =======
    # At i == 0 this consumes an uninitialized buffer; the resulting garbage is
    # stored into the resident output block 0 and overwritten at i == 1 before
    # any HBM writeback, so it never reaches the output.
    hid_prev = hid_sc[prev].reshape(tT * Bp, Hp)
    dec = jnp.dot(hid_prev.astype(jnp.bfloat16), w_dec_ref[...],
                  preferred_element_type=jnp.float32)                   # (tT*B, Fp)
    total = (dec + emb_sc[prev]).reshape(tT, Bp, Fp) + sesinf_sc[...][None]
    # max_out over adjacent pairs == max of contiguous (lane-aligned) halves.
    mx = jnp.maximum(total[..., :halfp], total[..., halfp:])            # (tT, B, Ep)
    logits = jnp.dot(mx.reshape(tT * Bp, halfp).astype(jnp.bfloat16),
                     w_out_ref[...], preferred_element_type=jnp.float32)
    out_ref[...] = logits.reshape(tT, Bp, Vp)


# --------------------------------------------------------------------------
# Parameters (PyTorch-equivalent raw weights) and kernel-layout packing
# --------------------------------------------------------------------------
def init_params(key, *, vocab_size, emb_size, hid_size, ctx_size):
    ks = jax.random.split(key, 12)

    def u(k, shape, fan):
        b = 1.0 / jnp.sqrt(fan)
        return jax.random.uniform(k, shape, jnp.float32, -b, b)

    E, H, C, V, F = emb_size, hid_size, ctx_size, vocab_size, 2 * emb_size
    embedding = jax.random.normal(ks[0], (V, E), jnp.float32) * 0.1
    embedding = embedding.at[0].set(0.0)            # padding_idx=0
    return {
        "embedding": embedding,
        "hid_size": H,
        # GRU (gate order r|z|n; stored transposed for right-multiplication)
        "wih": u(ks[1], (E, 3 * H), H),
        "whh": u(ks[2], (H, 3 * H), H),
        "bih": u(ks[3], (3 * H,), H),
        "bhh": u(ks[4], (3 * H,), H),
        # ses_to_dec: Linear(C, H, bias=True)
        "w_s2d": u(ks[5], (C, H), C),
        "b_s2d": u(ks[6], (H,), C),
        # ses_inf: Linear(C, 2E, bias=False)
        "w_sinf": u(ks[7], (C, F), C),
        # dec_inf: Linear(H, 2E, bias=False)
        "w_dec": u(ks[8], (H, F), H),
        # emb_inf: Linear(E, 2E, bias=True)
        "w_emb": u(ks[9], (E, F), E),
        "b_emb": u(ks[10], (F,), E),
        # embed_out: Linear(E, V, bias=False)
        "w_out": u(ks[11], (E, V), E),
    }


def _pad_gate_cols(w, H, Hp):
    """(..., 3H) -> (..., 3Hp): zero-pad each (r|z|n) gate block to Hp lanes."""
    pad = [(0, 0)] * (w.ndim - 1) + [(0, Hp - H)]
    parts = [jnp.pad(w[..., g * H:(g + 1) * H], pad) for g in range(3)]
    return jnp.concatenate(parts, axis=-1)


def pack_kernel_params(p, Hp, Ep, Vp):
    H = p["hid_size"]
    F = p["w_emb"].shape[1]                    # 2E
    E = F // 2
    # maxout pair permutation: [even | odd] -> pair-max == max of halves
    perm = jnp.concatenate([jnp.arange(0, F, 2), jnp.arange(1, F, 2)])

    def pad_halves(w):
        """(..., 2E) permuted -> (..., 2Ep): each half zero-padded to Ep lanes."""
        pad = [(0, 0)] * (w.ndim - 1)
        a = jnp.pad(w[..., :E], pad + [(0, Ep - E)])
        b = jnp.pad(w[..., E:], pad + [(0, Ep - E)])
        return jnp.concatenate([a, b], axis=-1)

    wih = _pad_gate_cols(p["wih"], H, Hp)                                   # (E, 3Hp)
    whh = _pad_gate_cols(jnp.pad(p["whh"], ((0, Hp - H), (0, 0))), H, Hp)   # (Hp, 3Hp)
    bih = _pad_gate_cols(p["bih"], H, Hp)
    bhh = _pad_gate_cols(p["bhh"], H, Hp)
    bhh_n = bhh[2 * Hp:].reshape(1, Hp)
    # fold r/z components of b_hh into b_ih (they sit outside the r*(...) term)
    b_gru = bih + bhh.at[2 * Hp:].set(0.0)

    w_emb = pad_halves(p["w_emb"][:, perm])                                 # (E, Fp)
    b_emb = pad_halves(p["b_emb"][perm])                                    # (Fp,)
    w_in = jnp.concatenate([wih, w_emb], axis=1)                            # (E, 3Hp+Fp)
    b_in = jnp.concatenate([b_gru, b_emb])[None, :]

    return dict(
        w_in=w_in.astype(jnp.bfloat16),
        b_in=b_in,
        whh=whh,                                     # f32 recurrence weights
        bhh_n=bhh_n,
        w_s2d=jnp.pad(p["w_s2d"], ((0, 0), (0, Hp - H))),
        b_s2d=jnp.pad(p["b_s2d"], (0, Hp - H))[None, :],
        w_sinf=pad_halves(p["w_sinf"][:, perm]),
        w_dec=pad_halves(
            jnp.pad(p["w_dec"], ((0, Hp - H), (0, 0)))[:, perm]).astype(jnp.bfloat16),
        w_out=jnp.pad(p["w_out"],
                      ((0, Ep - p["w_out"].shape[0]),
                       (0, Vp - p["w_out"].shape[1]))).astype(jnp.bfloat16),
    )


# --------------------------------------------------------------------------
# Wrapper (Decoder.forward((ses_encoding, x), length), teacher forcing)
# --------------------------------------------------------------------------
def decoder_forward(ses_encoding, tokens, lengths, params, *, tile_t=16):
    """ses_encoding: (B, 1, C) f32, tokens: (B, T) int32 (0 = pad),
       lengths: (B,) int32 pre-sorted descending.  Returns (B, T, vocab) f32."""
    emb = params["embedding"]
    B, T = tokens.shape
    E = emb.shape[1]
    H = params["hid_size"]
    C = ses_encoding.shape[-1]
    V = params["w_out"].shape[1]

    Hp = _round_up(H, LANE)        # lane-aligned hidden: gate slices hit tile edges
    Ep = _round_up(E, LANE)        # lane-aligned maxout half width
    Fp = 2 * Ep
    Vp = _round_up(V, LANE)        # lane-dense output store
    Bp = _round_up(B, SUBLANE)     # sublane-dense batch
    Tp = _round_up(T, tile_t)
    nblk = Tp // tile_t
    grid = (nblk + 1,)             # +1 trailing step: pipeline-shifted post/output

    kp = pack_kernel_params(params, Hp, Ep, Vp)

    # glue: embedding lookup (gather) + dropout(p=0) identity, time-major bf16 layout
    x_emb = emb[tokens]                                       # (B, T, E)
    x_tbe = jnp.transpose(x_emb, (1, 0, 2))                   # (T, B, E)
    x_tbe = jnp.pad(x_tbe, ((0, Tp - T), (0, Bp - B), (0, 0))).astype(jnp.bfloat16)
    ses = jnp.pad(ses_encoding.reshape(B, C), ((0, Bp - B), (0, 0)))
    len_col = jnp.pad(lengths.astype(jnp.int32), (0, Bp - B)).reshape(Bp, 1)

    def const_spec(a):             # whole-array block, fetched once (constant index)
        nd = a.ndim
        return pl.BlockSpec(a.shape, lambda i: (0,) * nd)

    out = pl.pallas_call(
        decoder_kernel,
        out_shape=jax.ShapeDtypeStruct((Tp, Bp, Vp), jnp.float32),
        grid_spec=pltpu.PrefetchScalarGridSpec(
            num_scalar_prefetch=0,
            grid=grid,
            in_specs=[
                # clamped: the trailing step re-uses the last chunk (no extra DMA)
                pl.BlockSpec((tile_t, Bp, E),
                             lambda i: (jnp.minimum(i, nblk - 1), 0, 0)),
                const_spec(len_col),
                const_spec(ses),
                const_spec(kp["w_in"]), const_spec(kp["b_in"]),
                const_spec(kp["whh"]), const_spec(kp["bhh_n"]),
                const_spec(kp["w_s2d"]), const_spec(kp["b_s2d"]),
                const_spec(kp["w_sinf"]), const_spec(kp["w_dec"]),
                const_spec(kp["w_out"]),
            ],
            # pipeline-shifted output: step i stores the logits of chunk i-1
            out_specs=pl.BlockSpec((tile_t, Bp, Vp),
                                   lambda i: (jnp.maximum(i - 1, 0), 0, 0)),
            scratch_shapes=[
                pltpu.VMEM((Bp, Hp), jnp.float32),               # hidden-state carry
                pltpu.VMEM((tile_t, Bp, 3 * Hp), jnp.float32),   # chunk GRU input proj
                pltpu.VMEM((2, tile_t, Bp, Hp), jnp.float32),    # GRU outputs (2-deep)
                pltpu.VMEM((2, tile_t * Bp, Fp), jnp.float32),   # emb_inf chunk (2-deep)
                pltpu.VMEM((Bp, Fp), jnp.float32),               # ses_inf (grid-invariant)
            ],
        ),
        compiler_params=pltpu.CompilerParams(
            dimension_semantics=("arbitrary",),   # sequential recurrence over T chunks
            vmem_limit_bytes=32 * 1024 * 1024,    # safe on v5e/v6e/v7x at these sizes
        ),
    )(x_tbe, len_col, ses,
      kp["w_in"], kp["b_in"], kp["whh"], kp["bhh_n"],
      kp["w_s2d"], kp["b_s2d"], kp["w_sinf"], kp["w_dec"], kp["w_out"])

    return jnp.transpose(out, (1, 0, 2))[:B, :T, :V]          # (B, T, vocab)


# --------------------------------------------------------------------------
# Pure-JAX reference (same math as the PyTorch module, Python time loop)
# --------------------------------------------------------------------------
def reference_forward(ses_encoding, tokens, lengths, params):
    H = params["hid_size"]
    B, T = tokens.shape
    x_emb = params["embedding"][tokens]                       # (B, T, E)
    emb_inf = x_emb @ params["w_emb"] + params["b_emb"]       # (B, T, 2E)
    ses = ses_encoding.reshape(B, -1)
    h = jnp.tanh(ses @ params["w_s2d"] + params["b_s2d"])     # (B, H)
    ses_inf = ses @ params["w_sinf"]                          # (B, 2E)
    outs = []
    for t in range(T):
        xp = x_emb[:, t] @ params["wih"] + params["bih"]
        hp = h @ params["whh"] + params["bhh"]
        r = jax.nn.sigmoid(xp[:, :H] + hp[:, :H])
        z = jax.nn.sigmoid(xp[:, H:2 * H] + hp[:, H:2 * H])
        n = jnp.tanh(xp[:, 2 * H:] + r * hp[:, 2 * H:])
        h = (1.0 - z) * n + z * h
        valid = (lengths > t)[:, None].astype(jnp.float32)
        outs.append(h * valid)                                # pad_packed pads with 0
    hid_o = jnp.stack(outs, axis=1)                           # (B, T, H)
    total = hid_o @ params["w_dec"] + ses_inf[:, None, :] + emb_inf
    mx = total.reshape(B, T, -1, 2).max(-1)                   # max_out
    return mx @ params["w_out"]                               # (B, T, V)


if __name__ == "__main__":
    VOCAB, EMB, HID, CTX = 50, 32, 32, 64       # syllable_size / emb / dec_hid / ctx_hid
    B, T = 4, 32

    key = jax.random.PRNGKey(0)
    k_p, k_tok, k_ses = jax.random.split(key, 3)
    params = init_params(k_p, vocab_size=VOCAB, emb_size=EMB,
                         hid_size=HID, ctx_size=CTX)

    # lengths pre-sorted descending -> the module's length sort/unsort is identity
    lengths = jnp.array([32, 27, 15, 6], dtype=jnp.int32)
    tokens = jax.random.randint(k_tok, (B, T), 1, VOCAB, dtype=jnp.int32)
    pos = jnp.arange(T)[None, :]
    tokens = jnp.where(pos < lengths[:, None], tokens, 0)     # pad with idx 0
    ses_encoding = jax.random.normal(k_ses, (B, 1, CTX), jnp.float32)

    out = jax.block_until_ready(
        decoder_forward(ses_encoding, tokens, lengths, params, tile_t=16))
    with jax.default_matmul_precision("highest"):
        ref = jax.block_until_ready(
            reference_forward(ses_encoding, tokens, lengths, params))

    assert out.shape == (B, T, VOCAB)
    # tolerance loosened vs the all-f32 version: the throughput matmuls now run
    # with bf16 inputs (f32 accumulation); the GRU whh recurrence stays f32.
    err = jnp.max(jnp.abs(out - ref))
    assert jnp.allclose(out, ref, rtol=5e-2, atol=5e-2), (
        f"mismatch vs reference, max abs err = {err}")
    print("KERNEL_OK")
</pallas_src>

<mosaic_0001>
module attributes {stable_mosaic.version = 11 : i64} {
  func.func @decoder_kernel(%arg0: i32, %arg1: memref<16x8x32xbf16, #tpu.memory_space<vmem>>, %arg2: memref<8x1xi32, #tpu.memory_space<vmem>>, %arg3: memref<8x64xf32, #tpu.memory_space<vmem>>, %arg4: memref<32x640xbf16, #tpu.memory_space<vmem>>, %arg5: memref<1x640xf32, #tpu.memory_space<vmem>>, %arg6: memref<128x384xf32, #tpu.memory_space<vmem>>, %arg7: memref<1x128xf32, #tpu.memory_space<vmem>>, %arg8: memref<64x128xf32, #tpu.memory_space<vmem>>, %arg9: memref<1x128xf32, #tpu.memory_space<vmem>>, %arg10: memref<64x256xf32, #tpu.memory_space<vmem>>, %arg11: memref<128x256xbf16, #tpu.memory_space<vmem>>, %arg12: memref<128x128xbf16, #tpu.memory_space<vmem>>, %arg13: memref<16x8x128xf32, #tpu.memory_space<vmem>>, %arg14: memref<8x128xf32, #tpu.memory_space<vmem>>, %arg15: memref<16x8x384xf32, #tpu.memory_space<vmem>>, %arg16: memref<2x16x8x128xf32, #tpu.memory_space<vmem>>, %arg17: memref<2x128x256xf32, #tpu.memory_space<vmem>>, %arg18: memref<8x256xf32, #tpu.memory_space<vmem>>) attributes {dimension_semantics = [#tpu.dimension_semantics<arbitrary>], iteration_bounds = array<i64: 3>, scalar_prefetch = 0 : i64, scratch_operands = 5 : i64, tpu.core_type = #tpu.core_type<tc>, window_params = [{transform_indices = @transform_0, window_bounds = array<i64: 16, 8, 32>}, {pipeline_mode = #tpu.pipeline_mode<synchronous>, transform_indices = @transform_1, window_bounds = array<i64: 8, 1>}, {pipeline_mode = #tpu.pipeline_mode<synchronous>, transform_indices = @transform_2, window_bounds = array<i64: 8, 64>}, {pipeline_mode = #tpu.pipeline_mode<synchronous>, transform_indices = @transform_3, window_bounds = array<i64: 32, 640>}, {pipeline_mode = #tpu.pipeline_mode<synchronous>, transform_indices = @transform_4, window_bounds = array<i64: 1, 640>}, {pipeline_mode = #tpu.pipeline_mode<synchronous>, transform_indices = @transform_5, window_bounds = array<i64: 128, 384>}, {pipeline_mode = #tpu.pipeline_mode<synchronous>, transform_indices = @transform_6, window_bounds = array<i64: 1, 128>}, {pipeline_mode = #tpu.pipeline_mode<synchronous>, transform_indices = @transform_7, window_bounds = array<i64: 64, 128>}, {pipeline_mode = #tpu.pipeline_mode<synchronous>, transform_indices = @transform_8, window_bounds = array<i64: 1, 128>}, {pipeline_mode = #tpu.pipeline_mode<synchronous>, transform_indices = @transform_9, window_bounds = array<i64: 64, 256>}, {pipeline_mode = #tpu.pipeline_mode<synchronous>, transform_indices = @transform_10, window_bounds = array<i64: 128, 256>}, {pipeline_mode = #tpu.pipeline_mode<synchronous>, transform_indices = @transform_11, window_bounds = array<i64: 128, 128>}, {transform_indices = @transform_12, window_bounds = array<i64: 16, 8, 128>}]} {
    %c2_i32 = arith.constant 2 : i32
    %c0_i32 = arith.constant 0 : i32
    %0 = arith.cmpi eq, %c2_i32, %c0_i32 : i32
    %c1_i32 = arith.constant 1 : i32
    %1 = arith.select %0, %c1_i32, %c2_i32 : i32
    %2 = arith.remsi %arg0, %1 : i32
    %c0_i32_0 = arith.constant 0 : i32
    %3 = arith.cmpi ne, %2, %c0_i32_0 : i32
    %c0_i32_1 = arith.constant 0 : i32
    %4 = arith.cmpi slt, %2, %c0_i32_1 : i32
    %c0_i32_2 = arith.constant 0 : i32
    %5 = arith.cmpi slt, %1, %c0_i32_2 : i32
    %6 = arith.xori %4, %5 : i1
    %7 = arith.andi %6, %3 : i1
    %8 = arith.addi %2, %1 : i32
    %9 = arith.select %7, %8, %2 : i32
    %c1_i32_3 = arith.constant 1 : i32
    %10 = arith.subi %c1_i32_3, %9 : i32
    %c0_i32_4 = arith.constant 0 : i32
    %11 = arith.cmpi eq, %arg0, %c0_i32_4 : i32
    %12 = arith.extui %11 : i1 to i32
    %c0_i32_5 = arith.constant 0 : i32
    %13 = arith.cmpi ne, %12, %c0_i32_5 : i32
    scf.if %13 {
      %c0_147 = arith.constant 0 : index
      %c0_148 = arith.constant 0 : index
      %633 = vector.load %arg3[%c0_147, %c0_148] : memref<8x64xf32, #tpu.memory_space<vmem>>, vector<8x64xf32>
      %c0_149 = arith.constant 0 : index
      %c0_150 = arith.constant 0 : index
      %634 = vector.load %arg8[%c0_149, %c0_150] : memref<64x128xf32, #tpu.memory_space<vmem>>, vector<64x128xf32>
      %cst_151 = arith.constant dense<0.000000e+00> : vector<8x128xf32>
      %635 = tpu.matmul %633, %634, %cst_151 {dimension_numbers = #tpu.dot_dimension_numbers<[1], [0], [0], [1], [0, 0, 1, 1], [], []>} : vector<8x64xf32>, vector<64x128xf32>, vector<8x128xf32> -> vector<8x128xf32>
      %c0_152 = arith.constant 0 : index
      %c0_153 = arith.constant 0 : index
      %636 = vector.load %arg9[%c0_152, %c0_153] : memref<1x128xf32, #tpu.memory_space<vmem>>, vector<1x128xf32>
      %637 = vector.broadcast %636 : vector<1x128xf32> to vector<8x128xf32>
      %638 = arith.addf %635, %637 : vector<8x128xf32>
      %639 = math.tanh %638 : vector<8x128xf32>
      %c0_154 = arith.constant 0 : index
      %c0_155 = arith.constant 0 : index
      %640 = vector.load %arg14[%c0_154, %c0_155] : memref<8x128xf32, #tpu.memory_space<vmem>>, vector<8x128xf32>
      tpu.vector_store %arg14[%c0_154, %c0_155], %639 {strides = array<i32>} : memref<8x128xf32, #tpu.memory_space<vmem>>, vector<8x128xf32>,
      %c0_156 = arith.constant 0 : index
      %c0_157 = arith.constant 0 : index
      %641 = vector.load %arg10[%c0_156, %c0_157] : memref<64x256xf32, #tpu.memory_space<vmem>>, vector<64x256xf32>
      %cst_158 = arith.constant dense<0.000000e+00> : vector<8x256xf32>
      %642 = tpu.matmul %633, %641, %cst_158 {dimension_numbers = #tpu.dot_dimension_numbers<[1], [0], [0], [1], [0, 0, 1, 1], [], []>} : vector<8x64xf32>, vector<64x256xf32>, vector<8x256xf32> -> vector<8x256xf32>
      %c0_159 = arith.constant 0 : index
      %c0_160 = arith.constant 0 : index
      %643 = vector.load %arg18[%c0_159, %c0_160] : memref<8x256xf32, #tpu.memory_space<vmem>>, vector<8x256xf32>
      tpu.vector_store %arg18[%c0_159, %c0_160], %642 {strides = array<i32>} : memref<8x256xf32, #tpu.memory_space<vmem>>, vector<8x256xf32>,
    } else {
    }
    %c1_i32_6 = arith.constant 1 : i32
    %14 = arith.minsi %arg0, %c1_i32_6 : i32
    %c0 = arith.constant 0 : index
    %c0_7 = arith.constant 0 : index
    %c0_8 = arith.constant 0 : index
    %15 = vector.load %arg1[%c0, %c0_7, %c0_8] : memref<16x8x32xbf16, #tpu.memory_space<vmem>>, vector<16x8x32xbf16>
    %16 = vector.shape_cast %15 : vector<16x8x32xbf16> to vector<128x32xbf16>
    %c0_9 = arith.constant 0 : index
    %c0_10 = arith.constant 0 : index
    %17 = vector.load %arg4[%c0_9, %c0_10] : memref<32x640xbf16, #tpu.memory_space<vmem>>, vector<32x640xbf16>
    %cst = arith.constant dense<0.000000e+00> : vector<128x640xf32>
    %18 = tpu.matmul %16, %17, %cst {dimension_numbers = #tpu.dot_dimension_numbers<[1], [0], [0], [1], [0, 0, 1, 1], [], []>} : vector<128x32xbf16>, vector<32x640xbf16>, vector<128x640xf32> -> vector<128x640xf32>
    %c0_11 = arith.constant 0 : index
    %c0_12 = arith.constant 0 : index
    %19 = vector.load %arg5[%c0_11, %c0_12] : memref<1x640xf32, #tpu.memory_space<vmem>>, vector<1x640xf32>
    %20 = vector.broadcast %19 : vector<1x640xf32> to vector<128x640xf32>
    %21 = arith.addf %18, %20 : vector<128x640xf32>
    %22 = vector.extract_strided_slice %21 {offsets = [0, 0], sizes = [128, 384], strides = [1, 1]} : vector<128x640xf32> to vector<128x384xf32>
    %23 = vector.shape_cast %22 : vector<128x384xf32> to vector<16x8x384xf32>
    %c0_13 = arith.constant 0 : index
    %c0_14 = arith.constant 0 : index
    %c0_15 = arith.constant 0 : index
    %24 = vector.load %arg15[%c0_13, %c0_14, %c0_15] : memref<16x8x384xf32, #tpu.memory_space<vmem>>, vector<16x8x384xf32>
    tpu.vector_store %arg15[%c0_13, %c0_14, %c0_15], %23 {strides = array<i32>} : memref<16x8x384xf32, #tpu.memory_space<vmem>>, vector<16x8x384xf32>,
    %25 = vector.extract_strided_slice %21 {offsets = [0, 384], sizes = [128, 256], strides = [1, 1]} : vector<128x640xf32> to vector<128x256xf32>
    %26 = arith.index_cast %9 : i32 to index
    %c0_16 = arith.constant 0 : index
    %c0_17 = arith.constant 0 : index
    %27 = vector.load %arg17[%26, %c0_16, %c0_17] : memref<2x128x256xf32, #tpu.memory_space<vmem>>, vector<1x128x256xf32>
    %28 = vector.shape_cast %27 : vector<1x128x256xf32> to vector<128x256xf32>
    %29 = vector.shape_cast %25 : vector<128x256xf32> to vector<1x128x256xf32>
    tpu.vector_store %arg17[%26, %c0_16, %c0_17], %29 {strides = array<i32>} : memref<2x128x256xf32, #tpu.memory_space<vmem>>, vector<1x128x256xf32>,
    %c0_18 = arith.constant 0 : index
    %c0_19 = arith.constant 0 : index
    %30 = vector.load %arg6[%c0_18, %c0_19] : memref<128x384xf32, #tpu.memory_space<vmem>>, vector<128x384xf32>
    %c0_20 = arith.constant 0 : index
    %c0_21 = arith.constant 0 : index
    %31 = vector.load %arg7[%c0_20, %c0_21] : memref<1x128xf32, #tpu.memory_space<vmem>>, vector<1x128xf32>
    %32 = vector.shape_cast %31 : vector<1x128xf32> to vector<1x128xf32>
    %33 = vector.broadcast %32 : vector<1x128xf32> to vector<8x128xf32>
    %c0_22 = arith.constant 0 : index
    %c0_23 = arith.constant 0 : index
    %34 = vector.load %arg14[%c0_22, %c0_23] : memref<8x128xf32, #tpu.memory_space<vmem>>, vector<8x128xf32>
    %c0_24 = arith.constant 0 : index
    %c0_25 = arith.constant 0 : index
    %c0_26 = arith.constant 0 : index
    %35 = vector.load %arg15[%c0_24, %c0_25, %c0_26] : memref<16x8x384xf32, #tpu.memory_space<vmem>>, vector<1x8x384xf32>
    %36 = vector.shape_cast %35 : vector<1x8x384xf32> to vector<8x384xf32>
    %cst_27 = arith.constant dense<0.000000e+00> : vector<8x384xf32>
    %37 = tpu.matmul %34, %30, %cst_27 {dimension_numbers = #tpu.dot_dimension_numbers<[1], [0], [0], [1], [0, 0, 1, 1], [], []>} : vector<8x128xf32>, vector<128x384xf32>, vector<8x384xf32> -> vector<8x384xf32>
    %38 = vector.extract_strided_slice %36 {offsets = [0, 0], sizes = [8, 128], strides = [1, 1]} : vector<8x384xf32> to vector<8x128xf32>
    %39 = vector.extract_strided_slice %37 {offsets = [0, 0], sizes = [8, 128], strides = [1, 1]} : vector<8x384xf32> to vector<8x128xf32>
    %40 = arith.addf %38, %39 : vector<8x128xf32>
    %41 = arith.negf %40 : vector<8x128xf32>
    %42 = math.exp %41 : vector<8x128xf32>
    %cst_28 = arith.constant 1.000000e+00 : f32
    %43 = vector.broadcast %cst_28 : f32 to vector<8x128xf32>
    %44 = arith.addf %43, %42 : vector<8x128xf32>
    %45 = arith.divf %43, %44 : vector<8x128xf32>
    %46 = vector.extract_strided_slice %36 {offsets = [0, 128], sizes = [8, 128], strides = [1, 1]} : vector<8x384xf32> to vector<8x128xf32>
    %47 = vector.extract_strided_slice %37 {offsets = [0, 128], sizes = [8, 128], strides = [1, 1]} : vector<8x384xf32> to vector<8x128xf32>
    %48 = arith.addf %46, %47 : vector<8x128xf32>
    %49 = arith.negf %48 : vector<8x128xf32>
    %50 = math.exp %49 : vector<8x128xf32>
    %cst_29 = arith.constant 1.000000e+00 : f32
    %51 = vector.broadcast %cst_29 : f32 to vector<8x128xf32>
    %52 = arith.addf %51, %50 : vector<8x128xf32>
    %53 = arith.divf %51, %52 : vector<8x128xf32>
    %54 = vector.extract_strided_slice %36 {offsets = [0, 256], sizes = [8, 128], strides = [1, 1]} : vector<8x384xf32> to vector<8x128xf32>
    %55 = vector.extract_strided_slice %37 {offsets = [0, 256], sizes = [8, 128], strides = [1, 1]} : vector<8x384xf32> to vector<8x128xf32>
    %56 = arith.addf %55, %33 : vector<8x128xf32>
    %57 = arith.mulf %45, %56 : vector<8x128xf32>
    %58 = arith.addf %54, %57 : vector<8x128xf32>
    %59 = math.tanh %58 : vector<8x128xf32>
    %cst_30 = arith.constant 1.000000e+00 : f32
    %60 = vector.broadcast %cst_30 : f32 to vector<8x128xf32>
    %61 = arith.subf %60, %53 : vector<8x128xf32>
    %62 = arith.mulf %61, %59 : vector<8x128xf32>
    %63 = arith.mulf %53, %34 : vector<8x128xf32>
    %64 = arith.addf %62, %63 : vector<8x128xf32>
    %c1 = arith.constant 1 : index
    %c0_31 = arith.constant 0 : index
    %c0_32 = arith.constant 0 : index
    %65 = vector.load %arg15[%c1, %c0_31, %c0_32] : memref<16x8x384xf32, #tpu.memory_space<vmem>>, vector<1x8x384xf32>
    %66 = vector.shape_cast %65 : vector<1x8x384xf32> to vector<8x384xf32>
    %cst_33 = arith.constant dense<0.000000e+00> : vector<8x384xf32>
    %67 = tpu.matmul %64, %30, %cst_33 {dimension_numbers = #tpu.dot_dimension_numbers<[1], [0], [0], [1], [0, 0, 1, 1], [], []>} : vector<8x128xf32>, vector<128x384xf32>, vector<8x384xf32> -> vector<8x384xf32>
    %68 = vector.extract_strided_slice %66 {offsets = [0, 0], sizes = [8, 128], strides = [1, 1]} : vector<8x384xf32> to vector<8x128xf32>
    %69 = vector.extract_strided_slice %67 {offsets = [0, 0], sizes = [8, 128], strides = [1, 1]} : vector<8x384xf32> to vector<8x128xf32>
    %70 = arith.addf %68, %69 : vector<8x128xf32>
    %71 = arith.negf %70 : vector<8x128xf32>
    %72 = math.exp %71 : vector<8x128xf32>
    %cst_34 = arith.constant 1.000000e+00 : f32
    %73 = vector.broadcast %cst_34 : f32 to vector<8x128xf32>
    %74 = arith.addf %73, %72 : vector<8x128xf32>
    %75 = arith.divf %73, %74 : vector<8x128xf32>
    %76 = vector.extract_strided_slice %66 {offsets = [0, 128], sizes = [8, 128], strides = [1, 1]} : vector<8x384xf32> to vector<8x128xf32>
    %77 = vector.extract_strided_slice %67 {offsets = [0, 128], sizes = [8, 128], strides = [1, 1]} : vector<8x384xf32> to vector<8x128xf32>
    %78 = arith.addf %76, %77 : vector<8x128xf32>
    %79 = arith.negf %78 : vector<8x128xf32>
    %80 = math.exp %79 : vector<8x128xf32>
    %cst_35 = arith.constant 1.000000e+00 : f32
    %81 = vector.broadcast %cst_35 : f32 to vector<8x128xf32>
    %82 = arith.addf %81, %80 : vector<8x128xf32>
    %83 = arith.divf %81, %82 : vector<8x128xf32>
    %84 = vector.extract_strided_slice %66 {offsets = [0, 256], sizes = [8, 128], strides = [1, 1]} : vector<8x384xf32> to vector<8x128xf32>
    %85 = vector.extract_strided_slice %67 {offsets = [0, 256], sizes = [8, 128], strides = [1, 1]} : vector<8x384xf32> to vector<8x128xf32>
    %86 = arith.addf %85, %33 : vector<8x128xf32>
    %87 = arith.mulf %75, %86 : vector<8x128xf32>
    %88 = arith.addf %84, %87 : vector<8x128xf32>
    %89 = math.tanh %88 : vector<8x128xf32>
    %cst_36 = arith.constant 1.000000e+00 : f32
    %90 = vector.broadcast %cst_36 : f32 to vector<8x128xf32>
    %91 = arith.subf %90, %83 : vector<8x128xf32>
    %92 = arith.mulf %91, %89 : vector<8x128xf32>
    %93 = arith.mulf %83, %64 : vector<8x128xf32>
    %94 = arith.addf %92, %93 : vector<8x128xf32>
    %c2 = arith.constant 2 : index
    %c0_37 = arith.constant 0 : index
    %c0_38 = arith.constant 0 : index
    %95 = vector.load %arg15[%c2, %c0_37, %c0_38] : memref<16x8x384xf32, #tpu.memory_space<vmem>>, vector<1x8x384xf32>
    %96 = vector.shape_cast %95 : vector<1x8x384xf32> to vector<8x384xf32>
    %cst_39 = arith.constant dense<0.000000e+00> : vector<8x384xf32>
    %97 = tpu.matmul %94, %30, %cst_39 {dimension_numbers = #tpu.dot_dimension_numbers<[1], [0], [0], [1], [0, 0, 1, 1], [], []>} : vector<8x128xf32>, vector<128x384xf32>, vector<8x384xf32> -> vector<8x384xf32>
    %98 = vector.extract_strided_slice %96 {offsets = [0, 0], sizes = [8, 128], strides = [1, 1]} : vector<8x384xf32> to vector<8x128xf32>
    %99 = vector.extract_strided_slice %97 {offsets = [0, 0], sizes = [8, 128], strides = [1, 1]} : vector<8x384xf32> to vector<8x128xf32>
    %100 = arith.addf %98, %99 : vector<8x128xf32>
    %101 = arith.negf %100 : vector<8x128xf32>
    %102 = math.exp %101 : vector<8x128xf32>
    %cst_40 = arith.constant 1.000000e+00 : f32
    %103 = vector.broadcast %cst_40 : f32 to vector<8x128xf32>
    %104 = arith.addf %103, %102 : vector<8x128xf32>
    %105 = arith.divf %103, %104 : vector<8x128xf32>
    %106 = vector.extract_strided_slice %96 {offsets = [0, 128], sizes = [8, 128], strides = [1, 1]} : vector<8x384xf32> to vector<8x128xf32>
    %107 = vector.extract_strided_slice %97 {offsets = [0, 128], sizes = [8, 128], strides = [1, 1]} : vector<8x384xf32> to vector<8x128xf32>
    %108 = arith.addf %106, %107 : vector<8x128xf32>
    %109 = arith.negf %108 : vector<8x128xf32>
    %110 = math.exp %109 : vector<8x128xf32>
    %cst_41 = arith.constant 1.000000e+00 : f32
    %111 = vector.broadcast %cst_41 : f32 to vector<8x128xf32>
    %112 = arith.addf %111, %110 : vector<8x128xf32>
    %113 = arith.divf %111, %112 : vector<8x128xf32>
    %114 = vector.extract_strided_slice %96 {offsets = [0, 256], sizes = [8, 128], strides = [1, 1]} : vector<8x384xf32> to vector<8x128xf32>
    %115 = vector.extract_strided_slice %97 {offsets = [0, 256], sizes = [8, 128], strides = [1, 1]} : vector<8x384xf32> to vector<8x128xf32>
    %116 = arith.addf %115, %33 : vector<8x128xf32>
    %117 = arith.mulf %105, %116 : vector<8x128xf32>
    %118 = arith.addf %114, %117 : vector<8x128xf32>
    %119 = math.tanh %118 : vector<8x128xf32>
    %cst_42 = arith.constant 1.000000e+00 : f32
    %120 = vector.broadcast %cst_42 : f32 to vector<8x128xf32>
    %121 = arith.subf %120, %113 : vector<8x128xf32>
    %122 = arith.mulf %121, %119 : vector<8x128xf32>
    %123 = arith.mulf %113, %94 : vector<8x128xf32>
    %124 = arith.addf %122, %123 : vector<8x128xf32>
    %c3 = arith.constant 3 : index
    %c0_43 = arith.constant 0 : index
    %c0_44 = arith.constant 0 : index
    %125 = vector.load %arg15[%c3, %c0_43, %c0_44] : memref<16x8x384xf32, #tpu.memory_space<vmem>>, vector<1x8x384xf32>
    %126 = vector.shape_cast %125 : vector<1x8x384xf32> to vector<8x384xf32>
    %cst_45 = arith.constant dense<0.000000e+00> : vector<8x384xf32>
    %127 = tpu.matmul %124, %30, %cst_45 {dimension_numbers = #tpu.dot_dimension_numbers<[1], [0], [0], [1], [0, 0, 1, 1], [], []>} : vector<8x128xf32>, vector<128x384xf32>, vector<8x384xf32> -> vector<8x384xf32>
    %128 = vector.extract_strided_slice %126 {offsets = [0, 0], sizes = [8, 128], strides = [1, 1]} : vector<8x384xf32> to vector<8x128xf32>
    %129 = vector.extract_strided_slice %127 {offsets = [0, 0], sizes = [8, 128], strides = [1, 1]} : vector<8x384xf32> to vector<8x128xf32>
    %130 = arith.addf %128, %129 : vector<8x128xf32>
    %131 = arith.negf %130 : vector<8x128xf32>
    %132 = math.exp %131 : vector<8x128xf32>
    %cst_46 = arith.constant 1.000000e+00 : f32
    %133 = vector.broadcast %cst_46 : f32 to vector<8x128xf32>
    %134 = arith.addf %133, %132 : vector<8x128xf32>
    %135 = arith.divf %133, %134 : vector<8x128xf32>
    %136 = vector.extract_strided_slice %126 {offsets = [0, 128], sizes = [8, 128], strides = [1, 1]} : vector<8x384xf32> to vector<8x128xf32>
    %137 = vector.extract_strided_slice %127 {offsets = [0, 128], sizes = [8, 128], strides = [1, 1]} : vector<8x384xf32> to vector<8x128xf32>
    %138 = arith.addf %136, %137 : vector<8x128xf32>
    %139 = arith.negf %138 : vector<8x128xf32>
    %140 = math.exp %139 : vector<8x128xf32>
    %cst_47 = arith.constant 1.000000e+00 : f32
    %141 = vector.broadcast %cst_47 : f32 to vector<8x128xf32>
    %142 = arith.addf %141, %140 : vector<8x128xf32>
    %143 = arith.divf %141, %142 : vector<8x128xf32>
    %144 = vector.extract_strided_slice %126 {offsets = [0, 256], sizes = [8, 128], strides = [1, 1]} : vector<8x384xf32> to vector<8x128xf32>
    %145 = vector.extract_strided_slice %127 {offsets = [0, 256], sizes = [8, 128], strides = [1, 1]} : vector<8x384xf32> to vector<8x128xf32>
    %146 = arith.addf %145, %33 : vector<8x128xf32>
    %147 = arith.mulf %135, %146 : vector<8x128xf32>
    %148 = arith.addf %144, %147 : vector<8x128xf32>
    %149 = math.tanh %148 : vector<8x128xf32>
    %cst_48 = arith.constant 1.000000e+00 : f32
    %150 = vector.broadcast %cst_48 : f32 to vector<8x128xf32>
    %151 = arith.subf %150, %143 : vector<8x128xf32>
    %152 = arith.mulf %151, %149 : vector<8x128xf32>
    %153 = arith.mulf %143, %124 : vector<8x128xf32>
    %154 = arith.addf %152, %153 : vector<8x128xf32>
    %c4 = arith.constant 4 : index
    %c0_49 = arith.constant 0 : index
    %c0_50 = arith.constant 0 : index
    %155 = vector.load %arg15[%c4, %c0_49, %c0_50] : memref<16x8x384xf32, #tpu.memory_space<vmem>>, vector<1x8x384xf32>
    %156 = vector.shape_cast %155 : vector<1x8x384xf32> to vector<8x384xf32>
    %cst_51 = arith.constant dense<0.000000e+00> : vector<8x384xf32>
    %157 = tpu.matmul %154, %30, %cst_51 {dimension_numbers = #tpu.dot_dimension_numbers<[1], [0], [0], [1], [0, 0, 1, 1], [], []>} : vector<8x128xf32>, vector<128x384xf32>, vector<8x384xf32> -> vector<8x384xf32>
    %158 = vector.extract_strided_slice %156 {offsets = [0, 0], sizes = [8, 128], strides = [1, 1]} : vector<8x384xf32> to vector<8x128xf32>
    %159 = vector.extract_strided_slice %157 {offsets = [0, 0], sizes = [8, 128], strides = [1, 1]} : vector<8x384xf32> to vector<8x128xf32>
    %160 = arith.addf %158, %159 : vector<8x128xf32>
    %161 = arith.negf %160 : vector<8x128xf32>
    %162 = math.exp %161 : vector<8x128xf32>
    %cst_52 = arith.constant 1.000000e+00 : f32
    %163 = vector.broadcast %cst_52 : f32 to vector<8x128xf32>
    %164 = arith.addf %163, %162 : vector<8x128xf32>
    %165 = arith.divf %163, %164 : vector<8x128xf32>
    %166 = vector.extract_strided_slice %156 {offsets = [0, 128], sizes = [8, 128], strides = [1, 1]} : vector<8x384xf32> to vector<8x128xf32>
    %167 = vector.extract_strided_slice %157 {offsets = [0, 128], sizes = [8, 128], strides = [1, 1]} : vector<8x384xf32> to vector<8x128xf32>
    %168 = arith.addf %166, %167 : vector<8x128xf32>
    %169 = arith.negf %168 : vector<8x128xf32>
    %170 = math.exp %169 : vector<8x128xf32>
    %cst_53 = arith.constant 1.000000e+00 : f32
    %171 = vector.broadcast %cst_53 : f32 to vector<8x128xf32>
    %172 = arith.addf %171, %170 : vector<8x128xf32>
    %173 = arith.divf %171, %172 : vector<8x128xf32>
    %174 = vector.extract_strided_slice %156 {offsets = [0, 256], sizes = [8, 128], strides = [1, 1]} : vector<8x384xf32> to vector<8x128xf32>
    %175 = vector.extract_strided_slice %157 {offsets = [0, 256], sizes = [8, 128], strides = [1, 1]} : vector<8x384xf32> to vector<8x128xf32>
    %176 = arith.addf %175, %33 : vector<8x128xf32>
    %177 = arith.mulf %165, %176 : vector<8x128xf32>
    %178 = arith.addf %174, %177 : vector<8x128xf32>
    %179 = math.tanh %178 : vector<8x128xf32>
    %cst_54 = arith.constant 1.000000e+00 : f32
    %180 = vector.broadcast %cst_54 : f32 to vector<8x128xf32>
    %181 = arith.subf %180, %173 : vector<8x128xf32>
    %182 = arith.mulf %181, %179 : vector<8x128xf32>
    %183 = arith.mulf %173, %154 : vector<8x128xf32>
    %184 = arith.addf %182, %183 : vector<8x128xf32>
    %c5 = arith.constant 5 : index
    %c0_55 = arith.constant 0 : index
    %c0_56 = arith.constant 0 : index
    %185 = vector.load %arg15[%c5, %c0_55, %c0_56] : memref<16x8x384xf32, #tpu.memory_space<vmem>>, vector<1x8x384xf32>
    %186 = vector.shape_cast %185 : vector<1x8x384xf32> to vector<8x384xf32>
    %cst_57 = arith.constant dense<0.000000e+00> : vector<8x384xf32>
    %187 = tpu.matmul %184, %30, %cst_57 {dimension_numbers = #tpu.dot_dimension_numbers<[1], [0], [0], [1], [0, 0, 1, 1], [], []>} : vector<8x128xf32>, vector<128x384xf32>, vector<8x384xf32> -> vector<8x384xf32>
    %188 = vector.extract_strided_slice %186 {offsets = [0, 0], sizes = [8, 128], strides = [1, 1]} : vector<8x384xf32> to vector<8x128xf32>
    %189 = vector.extract_strided_slice %187 {offsets = [0, 0], sizes = [8, 128], strides = [1, 1]} : vector<8x384xf32> to vector<8x128xf32>
    %190 = arith.addf %188, %189 : vector<8x128xf32>
    %191 = arith.negf %190 : vector<8x128xf32>
    %192 = math.exp %191 : vector<8x128xf32>
    %cst_58 = arith.constant 1.000000e+00 : f32
    %193 = vector.broadcast %cst_58 : f32 to vector<8x128xf32>
    %194 = arith.addf %193, %192 : vector<8x128xf32>
    %195 = arith.divf %193, %194 : vector<8x128xf32>
    %196 = vector.extract_strided_slice %186 {offsets = [0, 128], sizes = [8, 128], strides = [1, 1]} : vector<8x384xf32> to vector<8x128xf32>
    %197 = vector.extract_strided_slice %187 {offsets = [0, 128], sizes = [8, 128], strides = [1, 1]} : vector<8x384xf32> to vector<8x128xf32>
    %198 = arith.addf %196, %197 : vector<8x128xf32>
    %199 = arith.negf %198 : vector<8x128xf32>
    %200 = math.exp %199 : vector<8x128xf32>
    %cst_59 = arith.constant 1.000000e+00 : f32
    %201 = vector.broadcast %cst_59 : f32 to vector<8x128xf32>
    %202 = arith.addf %201, %200 : vector<8x128xf32>
    %203 = arith.divf %201, %202 : vector<8x128xf32>
    %204 = vector.extract_strided_slice %186 {offsets = [0, 256], sizes = [8, 128], strides = [1, 1]} : vector<8x384xf32> to vector<8x128xf32>
    %205 = vector.extract_strided_slice %187 {offsets = [0, 256], sizes = [8, 128], strides = [1, 1]} : vector<8x384xf32> to vector<8x128xf32>
    %206 = arith.addf %205, %33 : vector<8x128xf32>
    %207 = arith.mulf %195, %206 : vector<8x128xf32>
    %208 = arith.addf %204, %207 : vector<8x128xf32>
    %209 = math.tanh %208 : vector<8x128xf32>
    %cst_60 = arith.constant 1.000000e+00 : f32
    %210 = vector.broadcast %cst_60 : f32 to vector<8x128xf32>
    %211 = arith.subf %210, %203 : vector<8x128xf32>
    %212 = arith.mulf %211, %209 : vector<8x128xf32>
    %213 = arith.mulf %203, %184 : vector<8x128xf32>
    %214 = arith.addf %212, %213 : vector<8x128xf32>
    %c6 = arith.constant 6 : index
    %c0_61 = arith.constant 0 : index
    %c0_62 = arith.constant 0 : index
    %215 = vector.load %arg15[%c6, %c0_61, %c0_62] : memref<16x8x384xf32, #tpu.memory_space<vmem>>, vector<1x8x384xf32>
    %216 = vector.shape_cast %215 : vector<1x8x384xf32> to vector<8x384xf32>
    %cst_63 = arith.constant dense<0.000000e+00> : vector<8x384xf32>
    %217 = tpu.matmul %214, %30, %cst_63 {dimension_numbers = #tpu.dot_dimension_numbers<[1], [0], [0], [1], [0, 0, 1, 1], [], []>} : vector<8x128xf32>, vector<128x384xf32>, vector<8x384xf32> -> vector<8x384xf32>
    %218 = vector.extract_strided_slice %216 {offsets = [0, 0], sizes = [8, 128], strides = [1, 1]} : vector<8x384xf32> to vector<8x128xf32>
    %219 = vector.extract_strided_slice %217 {offsets = [0, 0], sizes = [8, 128], strides = [1, 1]} : vector<8x384xf32> to vector<8x128xf32>
    %220 = arith.addf %218, %219 : vector<8x128xf32>
    %221 = arith.negf %220 : vector<8x128xf32>
    %222 = math.exp %221 : vector<8x128xf32>
    %cst_64 = arith.constant 1.000000e+00 : f32
    %223 = vector.broadcast %cst_64 : f32 to vector<8x128xf32>
    %224 = arith.addf %223, %222 : vector<8x128xf32>
    %225 = arith.divf %223, %224 : vector<8x128xf32>
    %226 = vector.extract_strided_slice %216 {offsets = [0, 128], sizes = [8, 128], strides = [1, 1]} : vector<8x384xf32> to vector<8x128xf32>
    %227 = vector.extract_strided_slice %217 {offsets = [0, 128], sizes = [8, 128], strides = [1, 1]} : vector<8x384xf32> to vector<8x128xf32>
    %228 = arith.addf %226, %227 : vector<8x128xf32>
    %229 = arith.negf %228 : vector<8x128xf32>
    %230 = math.exp %229 : vector<8x128xf32>
    %cst_65 = arith.constant 1.000000e+00 : f32
    %231 = vector.broadcast %cst_65 : f32 to vector<8x128xf32>
    %232 = arith.addf %231, %230 : vector<8x128xf32>
    %233 = arith.divf %231, %232 : vector<8x128xf32>
    %234 = vector.extract_strided_slice %216 {offsets = [0, 256], sizes = [8, 128], strides = [1, 1]} : vector<8x384xf32> to vector<8x128xf32>
    %235 = vector.extract_strided_slice %217 {offsets = [0, 256], sizes = [8, 128], strides = [1, 1]} : vector<8x384xf32> to vector<8x128xf32>
    %236 = arith.addf %235, %33 : vector<8x128xf32>
    %237 = arith.mulf %225, %236 : vector<8x128xf32>
    %238 = arith.addf %234, %237 : vector<8x128xf32>
    %239 = math.tanh %238 : vector<8x128xf32>
    %cst_66 = arith.constant 1.000000e+00 : f32
    %240 = vector.broadcast %cst_66 : f32 to vector<8x128xf32>
    %241 = arith.subf %240, %233 : vector<8x128xf32>
    %242 = arith.mulf %241, %239 : vector<8x128xf32>
    %243 = arith.mulf %233, %214 : vector<8x128xf32>
    %244 = arith.addf %242, %243 : vector<8x128xf32>
    %c7 = arith.constant 7 : index
    %c0_67 = arith.constant 0 : index
    %c0_68 = arith.constant 0 : index
    %245 = vector.load %arg15[%c7, %c0_67, %c0_68] : memref<16x8x384xf32, #tpu.memory_space<vmem>>, vector<1x8x384xf32>
    %246 = vector.shape_cast %245 : vector<1x8x384xf32> to vector<8x384xf32>
    %cst_69 = arith.constant dense<0.000000e+00> : vector<8x384xf32>
    %247 = tpu.matmul %244, %30, %cst_69 {dimension_numbers = #tpu.dot_dimension_numbers<[1], [0], [0], [1], [0, 0, 1, 1], [], []>} : vector<8x128xf32>, vector<128x384xf32>, vector<8x384xf32> -> vector<8x384xf32>
    %248 = vector.extract_strided_slice %246 {offsets = [0, 0], sizes = [8, 128], strides = [1, 1]} : vector<8x384xf32> to vector<8x128xf32>
    %249 = vector.extract_strided_slice %247 {offsets = [0, 0], sizes = [8, 128], strides = [1, 1]} : vector<8x384xf32> to vector<8x128xf32>
    %250 = arith.addf %248, %249 : vector<8x128xf32>
    %251 = arith.negf %250 : vector<8x128xf32>
    %252 = math.exp %251 : vector<8x128xf32>
    %cst_70 = arith.constant 1.000000e+00 : f32
    %253 = vector.broadcast %cst_70 : f32 to vector<8x128xf32>
    %254 = arith.addf %253, %252 : vector<8x128xf32>
    %255 = arith.divf %253, %254 : vector<8x128xf32>
    %256 = vector.extract_strided_slice %246 {offsets = [0, 128], sizes = [8, 128], strides = [1, 1]} : vector<8x384xf32> to vector<8x128xf32>
    %257 = vector.extract_strided_slice %247 {offsets = [0, 128], sizes = [8, 128], strides = [1, 1]} : vector<8x384xf32> to vector<8x128xf32>
    %258 = arith.addf %256, %257 : vector<8x128xf32>
    %259 = arith.negf %258 : vector<8x128xf32>
    %260 = math.exp %259 : vector<8x128xf32>
    %cst_71 = arith.constant 1.000000e+00 : f32
    %261 = vector.broadcast %cst_71 : f32 to vector<8x128xf32>
    %262 = arith.addf %261, %260 : vector<8x128xf32>
    %263 = arith.divf %261, %262 : vector<8x128xf32>
    %264 = vector.extract_strided_slice %246 {offsets = [0, 256], sizes = [8, 128], strides = [1, 1]} : vector<8x384xf32> to vector<8x128xf32>
    %265 = vector.extract_strided_slice %247 {offsets = [0, 256], sizes = [8, 128], strides = [1, 1]} : vector<8x384xf32> to vector<8x128xf32>
    %266 = arith.addf %265, %33 : vector<8x128xf32>
    %267 = arith.mulf %255, %266 : vector<8x128xf32>
    %268 = arith.addf %264, %267 : vector<8x128xf32>
    %269 = math.tanh %268 : vector<8x128xf32>
    %cst_72 = arith.constant 1.000000e+00 : f32
    %270 = vector.broadcast %cst_72 : f32 to vector<8x128xf32>
    %271 = arith.subf %270, %263 : vector<8x128xf32>
    %272 = arith.mulf %271, %269 : vector<8x128xf32>
    %273 = arith.mulf %263, %244 : vector<8x128xf32>
    %274 = arith.addf %272, %273 : vector<8x128xf32>
    %c8 = arith.constant 8 : index
    %c0_73 = arith.constant 0 : index
    %c0_74 = arith.constant 0 : index
    %275 = vector.load %arg15[%c8, %c0_73, %c0_74] : memref<16x8x384xf32, #tpu.memory_space<vmem>>, vector<1x8x384xf32>
    %276 = vector.shape_cast %275 : vector<1x8x384xf32> to vector<8x384xf32>
    %cst_75 = arith.constant dense<0.000000e+00> : vector<8x384xf32>
    %277 = tpu.matmul %274, %30, %cst_75 {dimension_numbers = #tpu.dot_dimension_numbers<[1], [0], [0], [1], [0, 0, 1, 1], [], []>} : vector<8x128xf32>, vector<128x384xf32>, vector<8x384xf32> -> vector<8x384xf32>
    %278 = vector.extract_strided_slice %276 {offsets = [0, 0], sizes = [8, 128], strides = [1, 1]} : vector<8x384xf32> to vector<8x128xf32>
    %279 = vector.extract_strided_slice %277 {offsets = [0, 0], sizes = [8, 128], strides = [1, 1]} : vector<8x384xf32> to vector<8x128xf32>
    %280 = arith.addf %278, %279 : vector<8x128xf32>
    %281 = arith.negf %280 : vector<8x128xf32>
    %282 = math.exp %281 : vector<8x128xf32>
    %cst_76 = arith.constant 1.000000e+00 : f32
    %283 = vector.broadcast %cst_76 : f32 to vector<8x128xf32>
    %284 = arith.addf %283, %282 : vector<8x128xf32>
    %285 = arith.divf %283, %284 : vector<8x128xf32>
    %286 = vector.extract_strided_slice %276 {offsets = [0, 128], sizes = [8, 128], strides = [1, 1]} : vector<8x384xf32> to vector<8x128xf32>
    %287 = vector.extract_strided_slice %277 {offsets = [0, 128], sizes = [8, 128], strides = [1, 1]} : vector<8x384xf32> to vector<8x128xf32>
    %288 = arith.addf %286, %287 : vector<8x128xf32>
    %289 = arith.negf %288 : vector<8x128xf32>
    %290 = math.exp %289 : vector<8x128xf32>
    %cst_77 = arith.constant 1.000000e+00 : f32
    %291 = vector.broadcast %cst_77 : f32 to vector<8x128xf32>
    %292 = arith.addf %291, %290 : vector<8x128xf32>
    %293 = arith.divf %291, %292 : vector<8x128xf32>
    %294 = vector.extract_strided_slice %276 {offsets = [0, 256], sizes = [8, 128], strides = [1, 1]} : vector<8x384xf32> to vector<8x128xf32>
    %295 = vector.extract_strided_slice %277 {offsets = [0, 256], sizes = [8, 128], strides = [1, 1]} : vector<8x384xf32> to vector<8x128xf32>
    %296 = arith.addf %295, %33 : vector<8x128xf32>
    %297 = arith.mulf %285, %296 : vector<8x128xf32>
    %298 = arith.addf %294, %297 : vector<8x128xf32>
    %299 = math.tanh %298 : vector<8x128xf32>
    %cst_78 = arith.constant 1.000000e+00 : f32
    %300 = vector.broadcast %cst_78 : f32 to vector<8x128xf32>
    %301 = arith.subf %300, %293 : vector<8x128xf32>
    %302 = arith.mulf %301, %299 : vector<8x128xf32>
    %303 = arith.mulf %293, %274 : vector<8x128xf32>
    %304 = arith.addf %302, %303 : vector<8x128xf32>
    %c9 = arith.constant 9 : index
    %c0_79 = arith.constant 0 : index
    %c0_80 = arith.constant 0 : index
    %305 = vector.load %arg15[%c9, %c0_79, %c0_80] : memref<16x8x384xf32, #tpu.memory_space<vmem>>, vector<1x8x384xf32>
    %306 = vector.shape_cast %305 : vector<1x8x384xf32> to vector<8x384xf32>
    %cst_81 = arith.constant dense<0.000000e+00> : vector<8x384xf32>
    %307 = tpu.matmul %304, %30, %cst_81 {dimension_numbers = #tpu.dot_dimension_numbers<[1], [0], [0], [1], [0, 0, 1, 1], [], []>} : vector<8x128xf32>, vector<128x384xf32>, vector<8x384xf32> -> vector<8x384xf32>
    %308 = vector.extract_strided_slice %306 {offsets = [0, 0], sizes = [8, 128], strides = [1, 1]} : vector<8x384xf32> to vector<8x128xf32>
    %309 = vector.extract_strided_slice %307 {offsets = [0, 0], sizes = [8, 128], strides = [1, 1]} : vector<8x384xf32> to vector<8x128xf32>
    %310 = arith.addf %308, %309 : vector<8x128xf32>
    %311 = arith.negf %310 : vector<8x128xf32>
    %312 = math.exp %311 : vector<8x128xf32>
    %cst_82 = arith.constant 1.000000e+00 : f32
    %313 = vector.broadcast %cst_82 : f32 to vector<8x128xf32>
    %314 = arith.addf %313, %312 : vector<8x128xf32>
    %315 = arith.divf %313, %314 : vector<8x128xf32>
    %316 = vector.extract_strided_slice %306 {offsets = [0, 128], sizes = [8, 128], strides = [1, 1]} : vector<8x384xf32> to vector<8x128xf32>
    %317 = vector.extract_strided_slice %307 {offsets = [0, 128], sizes = [8, 128], strides = [1, 1]} : vector<8x384xf32> to vector<8x128xf32>
    %318 = arith.addf %316, %317 : vector<8x128xf32>
    %319 = arith.negf %318 : vector<8x128xf32>
    %320 = math.exp %319 : vector<8x128xf32>
    %cst_83 = arith.constant 1.000000e+00 : f32
    %321 = vector.broadcast %cst_83 : f32 to vector<8x128xf32>
    %322 = arith.addf %321, %320 : vector<8x128xf32>
    %323 = arith.divf %321, %322 : vector<8x128xf32>
    %324 = vector.extract_strided_slice %306 {offsets = [0, 256], sizes = [8, 128], strides = [1, 1]} : vector<8x384xf32> to vector<8x128xf32>
    %325 = vector.extract_strided_slice %307 {offsets = [0, 256], sizes = [8, 128], strides = [1, 1]} : vector<8x384xf32> to vector<8x128xf32>
    %326 = arith.addf %325, %33 : vector<8x128xf32>
    %327 = arith.mulf %315, %326 : vector<8x128xf32>
    %328 = arith.addf %324, %327 : vector<8x128xf32>
    %329 = math.tanh %328 : vector<8x128xf32>
    %cst_84 = arith.constant 1.000000e+00 : f32
    %330 = vector.broadcast %cst_84 : f32 to vector<8x128xf32>
    %331 = arith.subf %330, %323 : vector<8x128xf32>
    %332 = arith.mulf %331, %329 : vector<8x128xf32>
    %333 = arith.mulf %323, %304 : vector<8x128xf32>
    %334 = arith.addf %332, %333 : vector<8x128xf32>
    %c10 = arith.constant 10 : index
    %c0_85 = arith.constant 0 : index
    %c0_86 = arith.constant 0 : index
    %335 = vector.load %arg15[%c10, %c0_85, %c0_86] : memref<16x8x384xf32, #tpu.memory_space<vmem>>, vector<1x8x384xf32>
    %336 = vector.shape_cast %335 : vector<1x8x384xf32> to vector<8x384xf32>
    %cst_87 = arith.constant dense<0.000000e+00> : vector<8x384xf32>
    %337 = tpu.matmul %334, %30, %cst_87 {dimension_numbers = #tpu.dot_dimension_numbers<[1], [0], [0], [1], [0, 0, 1, 1], [], []>} : vector<8x128xf32>, vector<128x384xf32>, vector<8x384xf32> -> vector<8x384xf32>
    %338 = vector.extract_strided_slice %336 {offsets = [0, 0], sizes = [8, 128], strides = [1, 1]} : vector<8x384xf32> to vector<8x128xf32>
    %339 = vector.extract_strided_slice %337 {offsets = [0, 0], sizes = [8, 128], strides = [1, 1]} : vector<8x384xf32> to vector<8x128xf32>
    %340 = arith.addf %338, %339 : vector<8x128xf32>
    %341 = arith.negf %340 : vector<8x128xf32>
    %342 = math.exp %341 : vector<8x128xf32>
    %cst_88 = arith.constant 1.000000e+00 : f32
    %343 = vector.broadcast %cst_88 : f32 to vector<8x128xf32>
    %344 = arith.addf %343, %342 : vector<8x128xf32>
    %345 = arith.divf %343, %344 : vector<8x128xf32>
    %346 = vector.extract_strided_slice %336 {offsets = [0, 128], sizes = [8, 128], strides = [1, 1]} : vector<8x384xf32> to vector<8x128xf32>
    %347 = vector.extract_strided_slice %337 {offsets = [0, 128], sizes = [8, 128], strides = [1, 1]} : vector<8x384xf32> to vector<8x128xf32>
    %348 = arith.addf %346, %347 : vector<8x128xf32>
    %349 = arith.negf %348 : vector<8x128xf32>
    %350 = math.exp %349 : vector<8x128xf32>
    %cst_89 = arith.constant 1.000000e+00 : f32
    %351 = vector.broadcast %cst_89 : f32 to vector<8x128xf32>
    %352 = arith.addf %351, %350 : vector<8x128xf32>
    %353 = arith.divf %351, %352 : vector<8x128xf32>
    %354 = vector.extract_strided_slice %336 {offsets = [0, 256], sizes = [8, 128], strides = [1, 1]} : vector<8x384xf32> to vector<8x128xf32>
    %355 = vector.extract_strided_slice %337 {offsets = [0, 256], sizes = [8, 128], strides = [1, 1]} : vector<8x384xf32> to vector<8x128xf32>
    %356 = arith.addf %355, %33 : vector<8x128xf32>
    %357 = arith.mulf %345, %356 : vector<8x128xf32>
    %358 = arith.addf %354, %357 : vector<8x128xf32>
    %359 = math.tanh %358 : vector<8x128xf32>
    %cst_90 = arith.constant 1.000000e+00 : f32
    %360 = vector.broadcast %cst_90 : f32 to vector<8x128xf32>
    %361 = arith.subf %360, %353 : vector<8x128xf32>
    %362 = arith.mulf %361, %359 : vector<8x128xf32>
    %363 = arith.mulf %353, %334 : vector<8x128xf32>
    %364 = arith.addf %362, %363 : vector<8x128xf32>
    %c11 = arith.constant 11 : index
    %c0_91 = arith.constant 0 : index
    %c0_92 = arith.constant 0 : index
    %365 = vector.load %arg15[%c11, %c0_91, %c0_92] : memref<16x8x384xf32, #tpu.memory_space<vmem>>, vector<1x8x384xf32>
    %366 = vector.shape_cast %365 : vector<1x8x384xf32> to vector<8x384xf32>
    %cst_93 = arith.constant dense<0.000000e+00> : vector<8x384xf32>
    %367 = tpu.matmul %364, %30, %cst_93 {dimension_numbers = #tpu.dot_dimension_numbers<[1], [0], [0], [1], [0, 0, 1, 1], [], []>} : vector<8x128xf32>, vector<128x384xf32>, vector<8x384xf32> -> vector<8x384xf32>
    %368 = vector.extract_strided_slice %366 {offsets = [0, 0], sizes = [8, 128], strides = [1, 1]} : vector<8x384xf32> to vector<8x128xf32>
    %369 = vector.extract_strided_slice %367 {offsets = [0, 0], sizes = [8, 128], strides = [1, 1]} : vector<8x384xf32> to vector<8x128xf32>
    %370 = arith.addf %368, %369 : vector<8x128xf32>
    %371 = arith.negf %370 : vector<8x128xf32>
    %372 = math.exp %371 : vector<8x128xf32>
    %cst_94 = arith.constant 1.000000e+00 : f32
    %373 = vector.broadcast %cst_94 : f32 to vector<8x128xf32>
    %374 = arith.addf %373, %372 : vector<8x128xf32>
    %375 = arith.divf %373, %374 : vector<8x128xf32>
    %376 = vector.extract_strided_slice %366 {offsets = [0, 128], sizes = [8, 128], strides = [1, 1]} : vector<8x384xf32> to vector<8x128xf32>
    %377 = vector.extract_strided_slice %367 {offsets = [0, 128], sizes = [8, 128], strides = [1, 1]} : vector<8x384xf32> to vector<8x128xf32>
    %378 = arith.addf %376, %377 : vector<8x128xf32>
    %379 = arith.negf %378 : vector<8x128xf32>
    %380 = math.exp %379 : vector<8x128xf32>
    %cst_95 = arith.constant 1.000000e+00 : f32
    %381 = vector.broadcast %cst_95 : f32 to vector<8x128xf32>
    %382 = arith.addf %381, %380 : vector<8x128xf32>
    %383 = arith.divf %381, %382 : vector<8x128xf32>
    %384 = vector.extract_strided_slice %366 {offsets = [0, 256], sizes = [8, 128], strides = [1, 1]} : vector<8x384xf32> to vector<8x128xf32>
    %385 = vector.extract_strided_slice %367 {offsets = [0, 256], sizes = [8, 128], strides = [1, 1]} : vector<8x384xf32> to vector<8x128xf32>
    %386 = arith.addf %385, %33 : vector<8x128xf32>
    %387 = arith.mulf %375, %386 : vector<8x128xf32>
    %388 = arith.addf %384, %387 : vector<8x128xf32>
    %389 = math.tanh %388 : vector<8x128xf32>
    %cst_96 = arith.constant 1.000000e+00 : f32
    %390 = vector.broadcast %cst_96 : f32 to vector<8x128xf32>
    %391 = arith.subf %390, %383 : vector<8x128xf32>
    %392 = arith.mulf %391, %389 : vector<8x128xf32>
    %393 = arith.mulf %383, %364 : vector<8x128xf32>
    %394 = arith.addf %392, %393 : vector<8x128xf32>
    %c12 = arith.constant 12 : index
    %c0_97 = arith.constant 0 : index
    %c0_98 = arith.constant 0 : index
    %395 = vector.load %arg15[%c12, %c0_97, %c0_98] : memref<16x8x384xf32, #tpu.memory_space<vmem>>, vector<1x8x384xf32>
    %396 = vector.shape_cast %395 : vector<1x8x384xf32> to vector<8x384xf32>
    %cst_99 = arith.constant dense<0.000000e+00> : vector<8x384xf32>
    %397 = tpu.matmul %394, %30, %cst_99 {dimension_numbers = #tpu.dot_dimension_numbers<[1], [0], [0], [1], [0, 0, 1, 1], [], []>} : vector<8x128xf32>, vector<128x384xf32>, vector<8x384xf32> -> vector<8x384xf32>
    %398 = vector.extract_strided_slice %396 {offsets = [0, 0], sizes = [8, 128], strides = [1, 1]} : vector<8x384xf32> to vector<8x128xf32>
    %399 = vector.extract_strided_slice %397 {offsets = [0, 0], sizes = [8, 128], strides = [1, 1]} : vector<8x384xf32> to vector<8x128xf32>
    %400 = arith.addf %398, %399 : vector<8x128xf32>
    %401 = arith.negf %400 : vector<8x128xf32>
    %402 = math.exp %401 : vector<8x128xf32>
    %cst_100 = arith.constant 1.000000e+00 : f32
    %403 = vector.broadcast %cst_100 : f32 to vector<8x128xf32>
    %404 = arith.addf %403, %402 : vector<8x128xf32>
    %405 = arith.divf %403, %404 : vector<8x128xf32>
    %406 = vector.extract_strided_slice %396 {offsets = [0, 128], sizes = [8, 128], strides = [1, 1]} : vector<8x384xf32> to vector<8x128xf32>
    %407 = vector.extract_strided_slice %397 {offsets = [0, 128], sizes = [8, 128], strides = [1, 1]} : vector<8x384xf32> to vector<8x128xf32>
    %408 = arith.addf %406, %407 : vector<8x128xf32>
    %409 = arith.negf %408 : vector<8x128xf32>
    %410 = math.exp %409 : vector<8x128xf32>
    %cst_101 = arith.constant 1.000000e+00 : f32
    %411 = vector.broadcast %cst_101 : f32 to vector<8x128xf32>
    %412 = arith.addf %411, %410 : vector<8x128xf32>
    %413 = arith.divf %411, %412 : vector<8x128xf32>
    %414 = vector.extract_strided_slice %396 {offsets = [0, 256], sizes = [8, 128], strides = [1, 1]} : vector<8x384xf32> to vector<8x128xf32>
    %415 = vector.extract_strided_slice %397 {offsets = [0, 256], sizes = [8, 128], strides = [1, 1]} : vector<8x384xf32> to vector<8x128xf32>
    %416 = arith.addf %415, %33 : vector<8x128xf32>
    %417 = arith.mulf %405, %416 : vector<8x128xf32>
    %418 = arith.addf %414, %417 : vector<8x128xf32>
    %419 = math.tanh %418 : vector<8x128xf32>
    %cst_102 = arith.constant 1.000000e+00 : f32
    %420 = vector.broadcast %cst_102 : f32 to vector<8x128xf32>
    %421 = arith.subf %420, %413 : vector<8x128xf32>
    %422 = arith.mulf %421, %419 : vector<8x128xf32>
    %423 = arith.mulf %413, %394 : vector<8x128xf32>
    %424 = arith.addf %422, %423 : vector<8x128xf32>
    %c13 = arith.constant 13 : index
    %c0_103 = arith.constant 0 : index
    %c0_104 = arith.constant 0 : index
    %425 = vector.load %arg15[%c13, %c0_103, %c0_104] : memref<16x8x384xf32, #tpu.memory_space<vmem>>, vector<1x8x384xf32>
    %426 = vector.shape_cast %425 : vector<1x8x384xf32> to vector<8x384xf32>
    %cst_105 = arith.constant dense<0.000000e+00> : vector<8x384xf32>
    %427 = tpu.matmul %424, %30, %cst_105 {dimension_numbers = #tpu.dot_dimension_numbers<[1], [0], [0], [1], [0, 0, 1, 1], [], []>} : vector<8x128xf32>, vector<128x384xf32>, vector<8x384xf32> -> vector<8x384xf32>
    %428 = vector.extract_strided_slice %426 {offsets = [0, 0], sizes = [8, 128], strides = [1, 1]} : vector<8x384xf32> to vector<8x128xf32>
    %429 = vector.extract_strided_slice %427 {offsets = [0, 0], sizes = [8, 128], strides = [1, 1]} : vector<8x384xf32> to vector<8x128xf32>
    %430 = arith.addf %428, %429 : vector<8x128xf32>
    %431 = arith.negf %430 : vector<8x128xf32>
    %432 = math.exp %431 : vector<8x128xf32>
    %cst_106 = arith.constant 1.000000e+00 : f32
    %433 = vector.broadcast %cst_106 : f32 to vector<8x128xf32>
    %434 = arith.addf %433, %432 : vector<8x128xf32>
    %435 = arith.divf %433, %434 : vector<8x128xf32>
    %436 = vector.extract_strided_slice %426 {offsets = [0, 128], sizes = [8, 128], strides = [1, 1]} : vector<8x384xf32> to vector<8x128xf32>
    %437 = vector.extract_strided_slice %427 {offsets = [0, 128], sizes = [8, 128], strides = [1, 1]} : vector<8x384xf32> to vector<8x128xf32>
    %438 = arith.addf %436, %437 : vector<8x128xf32>
    %439 = arith.negf %438 : vector<8x128xf32>
    %440 = math.exp %439 : vector<8x128xf32>
    %cst_107 = arith.constant 1.000000e+00 : f32
    %441 = vector.broadcast %cst_107 : f32 to vector<8x128xf32>
    %442 = arith.addf %441, %440 : vector<8x128xf32>
    %443 = arith.divf %441, %442 : vector<8x128xf32>
    %444 = vector.extract_strided_slice %426 {offsets = [0, 256], sizes = [8, 128], strides = [1, 1]} : vector<8x384xf32> to vector<8x128xf32>
    %445 = vector.extract_strided_slice %427 {offsets = [0, 256], sizes = [8, 128], strides = [1, 1]} : vector<8x384xf32> to vector<8x128xf32>
    %446 = arith.addf %445, %33 : vector<8x128xf32>
    %447 = arith.mulf %435, %446 : vector<8x128xf32>
    %448 = arith.addf %444, %447 : vector<8x128xf32>
    %449 = math.tanh %448 : vector<8x128xf32>
    %cst_108 = arith.constant 1.000000e+00 : f32
    %450 = vector.broadcast %cst_108 : f32 to vector<8x128xf32>
    %451 = arith.subf %450, %443 : vector<8x128xf32>
    %452 = arith.mulf %451, %449 : vector<8x128xf32>
    %453 = arith.mulf %443, %424 : vector<8x128xf32>
    %454 = arith.addf %452, %453 : vector<8x128xf32>
    %c14 = arith.constant 14 : index
    %c0_109 = arith.constant 0 : index
    %c0_110 = arith.constant 0 : index
    %455 = vector.load %arg15[%c14, %c0_109, %c0_110] : memref<16x8x384xf32, #tpu.memory_space<vmem>>, vector<1x8x384xf32>
    %456 = vector.shape_cast %455 : vector<1x8x384xf32> to vector<8x384xf32>
    %cst_111 = arith.constant dense<0.000000e+00> : vector<8x384xf32>
    %457 = tpu.matmul %454, %30, %cst_111 {dimension_numbers = #tpu.dot_dimension_numbers<[1], [0], [0], [1], [0, 0, 1, 1], [], []>} : vector<8x128xf32>, vector<128x384xf32>, vector<8x384xf32> -> vector<8x384xf32>
    %458 = vector.extract_strided_slice %456 {offsets = [0, 0], sizes = [8, 128], strides = [1, 1]} : vector<8x384xf32> to vector<8x128xf32>
    %459 = vector.extract_strided_slice %457 {offsets = [0, 0], sizes = [8, 128], strides = [1, 1]} : vector<8x384xf32> to vector<8x128xf32>
    %460 = arith.addf %458, %459 : vector<8x128xf32>
    %461 = arith.negf %460 : vector<8x128xf32>
    %462 = math.exp %461 : vector<8x128xf32>
    %cst_112 = arith.constant 1.000000e+00 : f32
    %463 = vector.broadcast %cst_112 : f32 to vector<8x128xf32>
    %464 = arith.addf %463, %462 : vector<8x128xf32>
    %465 = arith.divf %463, %464 : vector<8x128xf32>
    %466 = vector.extract_strided_slice %456 {offsets = [0, 128], sizes = [8, 128], strides = [1, 1]} : vector<8x384xf32> to vector<8x128xf32>
    %467 = vector.extract_strided_slice %457 {offsets = [0, 128], sizes = [8, 128], strides = [1, 1]} : vector<8x384xf32> to vector<8x128xf32>
    %468 = arith.addf %466, %467 : vector<8x128xf32>
    %469 = arith.negf %468 : vector<8x128xf32>
    %470 = math.exp %469 : vector<8x128xf32>
    %cst_113 = arith.constant 1.000000e+00 : f32
    %471 = vector.broadcast %cst_113 : f32 to vector<8x128xf32>
    %472 = arith.addf %471, %470 : vector<8x128xf32>
    %473 = arith.divf %471, %472 : vector<8x128xf32>
    %474 = vector.extract_strided_slice %456 {offsets = [0, 256], sizes = [8, 128], strides = [1, 1]} : vector<8x384xf32> to vector<8x128xf32>
    %475 = vector.extract_strided_slice %457 {offsets = [0, 256], sizes = [8, 128], strides = [1, 1]} : vector<8x384xf32> to vector<8x128xf32>
    %476 = arith.addf %475, %33 : vector<8x128xf32>
    %477 = arith.mulf %465, %476 : vector<8x128xf32>
    %478 = arith.addf %474, %477 : vector<8x128xf32>
    %479 = math.tanh %478 : vector<8x128xf32>
    %cst_114 = arith.constant 1.000000e+00 : f32
    %480 = vector.broadcast %cst_114 : f32 to vector<8x128xf32>
    %481 = arith.subf %480, %473 : vector<8x128xf32>
    %482 = arith.mulf %481, %479 : vector<8x128xf32>
    %483 = arith.mulf %473, %454 : vector<8x128xf32>
    %484 = arith.addf %482, %483 : vector<8x128xf32>
    %c15 = arith.constant 15 : index
    %c0_115 = arith.constant 0 : index
    %c0_116 = arith.constant 0 : index
    %485 = vector.load %arg15[%c15, %c0_115, %c0_116] : memref<16x8x384xf32, #tpu.memory_space<vmem>>, vector<1x8x384xf32>
    %486 = vector.shape_cast %485 : vector<1x8x384xf32> to vector<8x384xf32>
    %cst_117 = arith.constant dense<0.000000e+00> : vector<8x384xf32>
    %487 = tpu.matmul %484, %30, %cst_117 {dimension_numbers = #tpu.dot_dimension_numbers<[1], [0], [0], [1], [0, 0, 1, 1], [], []>} : vector<8x128xf32>, vector<128x384xf32>, vector<8x384xf32> -> vector<8x384xf32>
    %488 = vector.extract_strided_slice %486 {offsets = [0, 0], sizes = [8, 128], strides = [1, 1]} : vector<8x384xf32> to vector<8x128xf32>
    %489 = vector.extract_strided_slice %487 {offsets = [0, 0], sizes = [8, 128], strides = [1, 1]} : vector<8x384xf32> to vector<8x128xf32>
    %490 = arith.addf %488, %489 : vector<8x128xf32>
    %491 = arith.negf %490 : vector<8x128xf32>
    %492 = math.exp %491 : vector<8x128xf32>
    %cst_118 = arith.constant 1.000000e+00 : f32
    %493 = vector.broadcast %cst_118 : f32 to vector<8x128xf32>
    %494 = arith.addf %493, %492 : vector<8x128xf32>
    %495 = arith.divf %493, %494 : vector<8x128xf32>
    %496 = vector.extract_strided_slice %486 {offsets = [0, 128], sizes = [8, 128], strides = [1, 1]} : vector<8x384xf32> to vector<8x128xf32>
    %497 = vector.extract_strided_slice %487 {offsets = [0, 128], sizes = [8, 128], strides = [1, 1]} : vector<8x384xf32> to vector<8x128xf32>
    %498 = arith.addf %496, %497 : vector<8x128xf32>
    %499 = arith.negf %498 : vector<8x128xf32>
    %500 = math.exp %499 : vector<8x128xf32>
    %cst_119 = arith.constant 1.000000e+00 : f32
    %501 = vector.broadcast %cst_119 : f32 to vector<8x128xf32>
    %502 = arith.addf %501, %500 : vector<8x128xf32>
    %503 = arith.divf %501, %502 : vector<8x128xf32>
    %504 = vector.extract_strided_slice %486 {offsets = [0, 256], sizes = [8, 128], strides = [1, 1]} : vector<8x384xf32> to vector<8x128xf32>
    %505 = vector.extract_strided_slice %487 {offsets = [0, 256], sizes = [8, 128], strides = [1, 1]} : vector<8x384xf32> to vector<8x128xf32>
    %506 = arith.addf %505, %33 : vector<8x128xf32>
    %507 = arith.mulf %495, %506 : vector<8x128xf32>
    %508 = arith.addf %504, %507 : vector<8x128xf32>
    %509 = math.tanh %508 : vector<8x128xf32>
    %cst_120 = arith.constant 1.000000e+00 : f32
    %510 = vector.broadcast %cst_120 : f32 to vector<8x128xf32>
    %511 = arith.subf %510, %503 : vector<8x128xf32>
    %512 = arith.mulf %511, %509 : vector<8x128xf32>
    %513 = arith.mulf %503, %484 : vector<8x128xf32>
    %514 = arith.addf %512, %513 : vector<8x128xf32>
    %c0_121 = arith.constant 0 : index
    %c0_122 = arith.constant 0 : index
    %515 = vector.load %arg14[%c0_121, %c0_122] : memref<8x128xf32, #tpu.memory_space<vmem>>, vector<8x128xf32>
    tpu.vector_store %arg14[%c0_121, %c0_122], %514 {strides = array<i32>} : memref<8x128xf32, #tpu.memory_space<vmem>>, vector<8x128xf32>,
    %c16_i32 = arith.constant 16 : i32
    %516 = arith.muli %14, %c16_i32 : i32
    %c0_123 = arith.constant 0 : index
    %c0_124 = arith.constant 0 : index
    %517 = vector.load %arg2[%c0_123, %c0_124] : memref<8x1xi32, #tpu.memory_space<vmem>>, vector<8x1xi32>
    %c0_i32_125 = arith.constant 0 : i32
    %518 = arith.addi %516, %c0_i32_125 : i32
    %519 = vector.broadcast %518 : i32 to vector<8x1xi32>
    %520 = arith.cmpi slt, %519, %517 : vector<8x1xi32>
    %c1_i32_126 = arith.constant 1 : i32
    %521 = arith.addi %516, %c1_i32_126 : i32
    %522 = vector.broadcast %521 : i32 to vector<8x1xi32>
    %523 = arith.cmpi slt, %522, %517 : vector<8x1xi32>
    %c2_i32_127 = arith.constant 2 : i32
    %524 = arith.addi %516, %c2_i32_127 : i32
    %525 = vector.broadcast %524 : i32 to vector<8x1xi32>
    %526 = arith.cmpi slt, %525, %517 : vector<8x1xi32>
    %c3_i32 = arith.constant 3 : i32
    %527 = arith.addi %516, %c3_i32 : i32
    %528 = vector.broadcast %527 : i32 to vector<8x1xi32>
    %529 = arith.cmpi slt, %528, %517 : vector<8x1xi32>
    %c4_i32 = arith.constant 4 : i32
    %530 = arith.addi %516, %c4_i32 : i32
    %531 = vector.broadcast %530 : i32 to vector<8x1xi32>
    %532 = arith.cmpi slt, %531, %517 : vector<8x1xi32>
    %c5_i32 = arith.constant 5 : i32
    %533 = arith.addi %516, %c5_i32 : i32
    %534 = vector.broadcast %533 : i32 to vector<8x1xi32>
    %535 = arith.cmpi slt, %534, %517 : vector<8x1xi32>
    %c6_i32 = arith.constant 6 : i32
    %536 = arith.addi %516, %c6_i32 : i32
    %537 = vector.broadcast %536 : i32 to vector<8x1xi32>
    %538 = arith.cmpi slt, %537, %517 : vector<8x1xi32>
    %c7_i32 = arith.constant 7 : i32
    %539 = arith.addi %516, %c7_i32 : i32
    %540 = vector.broadcast %539 : i32 to vector<8x1xi32>
    %541 = arith.cmpi slt, %540, %517 : vector<8x1xi32>
    %c8_i32 = arith.constant 8 : i32
    %542 = arith.addi %516, %c8_i32 : i32
    %543 = vector.broadcast %542 : i32 to vector<8x1xi32>
    %544 = arith.cmpi slt, %543, %517 : vector<8x1xi32>
    %c9_i32 = arith.constant 9 : i32
    %545 = arith.addi %516, %c9_i32 : i32
    %546 = vector.broadcast %545 : i32 to vector<8x1xi32>
    %547 = arith.cmpi slt, %546, %517 : vector<8x1xi32>
    %c10_i32 = arith.constant 10 : i32
    %548 = arith.addi %516, %c10_i32 : i32
    %549 = vector.broadcast %548 : i32 to vector<8x1xi32>
    %550 = arith.cmpi slt, %549, %517 : vector<8x1xi32>
    %c11_i32 = arith.constant 11 : i32
    %551 = arith.addi %516, %c11_i32 : i32
    %552 = vector.broadcast %551 : i32 to vector<8x1xi32>
    %553 = arith.cmpi slt, %552, %517 : vector<8x1xi32>
    %c12_i32 = arith.constant 12 : i32
    %554 = arith.addi %516, %c12_i32 : i32
    %555 = vector.broadcast %554 : i32 to vector<8x1xi32>
    %556 = arith.cmpi slt, %555, %517 : vector<8x1xi32>
    %c13_i32 = arith.constant 13 : i32
    %557 = arith.addi %516, %c13_i32 : i32
    %558 = vector.broadcast %557 : i32 to vector<8x1xi32>
    %559 = arith.cmpi slt, %558, %517 : vector<8x1xi32>
    %c14_i32 = arith.constant 14 : i32
    %560 = arith.addi %516, %c14_i32 : i32
    %561 = vector.broadcast %560 : i32 to vector<8x1xi32>
    %562 = arith.cmpi slt, %561, %517 : vector<8x1xi32>
    %c15_i32 = arith.constant 15 : i32
    %563 = arith.addi %516, %c15_i32 : i32
    %564 = vector.broadcast %563 : i32 to vector<8x1xi32>
    %565 = arith.cmpi slt, %564, %517 : vector<8x1xi32>
    %566 = vector.shape_cast %520 : vector<8x1xi1> to vector<1x8x1xi1>
    %567 = vector.shape_cast %523 : vector<8x1xi1> to vector<1x8x1xi1>
    %568 = vector.shape_cast %526 : vector<8x1xi1> to vector<1x8x1xi1>
    %569 = vector.shape_cast %529 : vector<8x1xi1> to vector<1x8x1xi1>
    %570 = vector.shape_cast %532 : vector<8x1xi1> to vector<1x8x1xi1>
    %571 = vector.shape_cast %535 : vector<8x1xi1> to vector<1x8x1xi1>
    %572 = vector.shape_cast %538 : vector<8x1xi1> to vector<1x8x1xi1>
    %573 = vector.shape_cast %541 : vector<8x1xi1> to vector<1x8x1xi1>
    %574 = vector.shape_cast %544 : vector<8x1xi1> to vector<1x8x1xi1>
    %575 = vector.shape_cast %547 : vector<8x1xi1> to vector<1x8x1xi1>
    %576 = vector.shape_cast %550 : vector<8x1xi1> to vector<1x8x1xi1>
    %577 = vector.shape_cast %553 : vector<8x1xi1> to vector<1x8x1xi1>
    %578 = vector.shape_cast %556 : vector<8x1xi1> to vector<1x8x1xi1>
    %579 = vector.shape_cast %559 : vector<8x1xi1> to vector<1x8x1xi1>
    %580 = vector.shape_cast %562 : vector<8x1xi1> to vector<1x8x1xi1>
    %581 = vector.shape_cast %565 : vector<8x1xi1> to vector<1x8x1xi1>
    %582 = tpu.concatenate %566, %567, %568, %569, %570, %571, %572, %573, %574, %575, %576, %577, %578, %579, %580, %581 in 0 : vector<1x8x1xi1>, vector<1x8x1xi1>, vector<1x8x1xi1>, vector<1x8x1xi1>, vector<1x8x1xi1>, vector<1x8x1xi1>, vector<1x8x1xi1>, vector<1x8x1xi1>, vector<1x8x1xi1>, vector<1x8x1xi1>, vector<1x8x1xi1>, vector<1x8x1xi1>, vector<1x8x1xi1>, vector<1x8x1xi1>, vector<1x8x1xi1>, vector<1x8x1xi1> -> vector<16x8x1xi1>
    %583 = arith.extui %582 : vector<16x8x1xi1> to vector<16x8x1xi32>
    %584 = arith.sitofp %583 : vector<16x8x1xi32> to vector<16x8x1xf32>
    %585 = vector.shape_cast %64 : vector<8x128xf32> to vector<1x8x128xf32>
    %586 = vector.shape_cast %94 : vector<8x128xf32> to vector<1x8x128xf32>
    %587 = vector.shape_cast %124 : vector<8x128xf32> to vector<1x8x128xf32>
    %588 = vector.shape_cast %154 : vector<8x128xf32> to vector<1x8x128xf32>
    %589 = vector.shape_cast %184 : vector<8x128xf32> to vector<1x8x128xf32>
    %590 = vector.shape_cast %214 : vector<8x128xf32> to vector<1x8x128xf32>
    %591 = vector.shape_cast %244 : vector<8x128xf32> to vector<1x8x128xf32>
    %592 = vector.shape_cast %274 : vector<8x128xf32> to vector<1x8x128xf32>
    %593 = vector.shape_cast %304 : vector<8x128xf32> to vector<1x8x128xf32>
    %594 = vector.shape_cast %334 : vector<8x128xf32> to vector<1x8x128xf32>
    %595 = vector.shape_cast %364 : vector<8x128xf32> to vector<1x8x128xf32>
    %596 = vector.shape_cast %394 : vector<8x128xf32> to vector<1x8x128xf32>
    %597 = vector.shape_cast %424 : vector<8x128xf32> to vector<1x8x128xf32>
    %598 = vector.shape_cast %454 : vector<8x128xf32> to vector<1x8x128xf32>
    %599 = vector.shape_cast %484 : vector<8x128xf32> to vector<1x8x128xf32>
    %600 = vector.shape_cast %514 : vector<8x128xf32> to vector<1x8x128xf32>
    %601 = tpu.concatenate %585, %586, %587, %588, %589, %590, %591, %592, %593, %594, %595, %596, %597, %598, %599, %600 in 0 : vector<1x8x128xf32>, vector<1x8x128xf32>, vector<1x8x128xf32>, vector<1x8x128xf32>, vector<1x8x128xf32>, vector<1x8x128xf32>, vector<1x8x128xf32>, vector<1x8x128xf32>, vector<1x8x128xf32>, vector<1x8x128xf32>, vector<1x8x128xf32>, vector<1x8x128xf32>, vector<1x8x128xf32>, vector<1x8x128xf32>, vector<1x8x128xf32>, vector<1x8x128xf32> -> vector<16x8x128xf32>
    %602 = vector.broadcast %584 : vector<16x8x1xf32> to vector<16x8x128xf32>
    %603 = arith.mulf %601, %602 : vector<16x8x128xf32>
    %604 = arith.index_cast %9 : i32 to index
    %c0_128 = arith.constant 0 : index
    %c0_129 = arith.constant 0 : index
    %c0_130 = arith.constant 0 : index
    %605 = vector.load %arg16[%604, %c0_128, %c0_129, %c0_130] : memref<2x16x8x128xf32, #tpu.memory_space<vmem>>, vector<1x16x8x128xf32>
    %606 = vector.shape_cast %605 : vector<1x16x8x128xf32> to vector<16x8x128xf32>
    %607 = vector.shape_cast %603 : vector<16x8x128xf32> to vector<1x16x8x128xf32>
    tpu.vector_store %arg16[%604, %c0_128, %c0_129, %c0_130], %607 {strides = array<i32>} : memref<2x16x8x128xf32, #tpu.memory_space<vmem>>, vector<1x16x8x128xf32>,
    %608 = arith.index_cast %10 : i32 to index
    %c0_131 = arith.constant 0 : index
    %c0_132 = arith.constant 0 : index
    %c0_133 = arith.constant 0 : index
    %609 = vector.load %arg16[%608, %c0_131, %c0_132, %c0_133] : memref<2x16x8x128xf32, #tpu.memory_space<vmem>>, vector<1x16x8x128xf32>
    %610 = vector.shape_cast %609 : vector<1x16x8x128xf32> to vector<16x8x128xf32>
    %611 = vector.shape_cast %610 : vector<16x8x128xf32> to vector<128x128xf32>
    %612 = arith.truncf %611 : vector<128x128xf32> to vector<128x128xbf16>
    %c0_134 = arith.constant 0 : index
    %c0_135 = arith.constant 0 : index
    %613 = vector.load %arg11[%c0_134, %c0_135] : memref<128x256xbf16, #tpu.memory_space<vmem>>, vector<128x256xbf16>
    %cst_136 = arith.constant dense<0.000000e+00> : vector<128x256xf32>
    %614 = tpu.matmul %612, %613, %cst_136 {dimension_numbers = #tpu.dot_dimension_numbers<[1], [0], [0], [1], [0, 0, 1, 1], [], []>} : vector<128x128xbf16>, vector<128x256xbf16>, vector<128x256xf32> -> vector<128x256xf32>
    %615 = arith.index_cast %10 : i32 to index
    %c0_137 = arith.constant 0 : index
    %c0_138 = arith.constant 0 : index
    %616 = vector.load %arg17[%615, %c0_137, %c0_138] : memref<2x128x256xf32, #tpu.memory_space<vmem>>, vector<1x128x256xf32>
    %617 = vector.shape_cast %616 : vector<1x128x256xf32> to vector<128x256xf32>
    %618 = arith.addf %614, %617 : vector<128x256xf32>
    %619 = vector.shape_cast %618 : vector<128x256xf32> to vector<16x8x256xf32>
    %c0_139 = arith.constant 0 : index
    %c0_140 = arith.constant 0 : index
    %620 = vector.load %arg18[%c0_139, %c0_140] : memref<8x256xf32, #tpu.memory_space<vmem>>, vector<8x256xf32>
    %621 = vector.shape_cast %620 : vector<8x256xf32> to vector<1x8x256xf32>
    %622 = vector.broadcast %621 : vector<1x8x256xf32> to vector<16x8x256xf32>
    %623 = arith.addf %619, %622 : vector<16x8x256xf32>
    %624 = vector.extract_strided_slice %623 {offsets = [0, 0, 0], sizes = [16, 8, 128], strides = [1, 1, 1]} : vector<16x8x256xf32> to vector<16x8x128xf32>
    %625 = vector.extract_strided_slice %623 {offsets = [0, 0, 128], sizes = [16, 8, 128], strides = [1, 1, 1]} : vector<16x8x256xf32> to vector<16x8x128xf32>
    %626 = arith.maximumf %624, %625 : vector<16x8x128xf32>
    %627 = vector.shape_cast %626 : vector<16x8x128xf32> to vector<128x128xf32>
    %628 = arith.truncf %627 : vector<128x128xf32> to vector<128x128xbf16>
    %c0_141 = arith.constant 0 : index
    %c0_142 = arith.constant 0 : index
    %629 = vector.load %arg12[%c0_141, %c0_142] : memref<128x128xbf16, #tpu.memory_space<vmem>>, vector<128x128xbf16>
    %cst_143 = arith.constant dense<0.000000e+00> : vector<128x128xf32>
    %630 = tpu.matmul %628, %629, %cst_143 {dimension_numbers = #tpu.dot_dimension_numbers<[1], [0], [0], [1], [0, 0, 1, 1], [], []>} : vector<128x128xbf16>, vector<128x128xbf16>, vector<128x128xf32> -> vector<128x128xf32>
    %631 = vector.shape_cast %630 : vector<128x128xf32> to vector<16x8x128xf32>
    %c0_144 = arith.constant 0 : index
    %c0_145 = arith.constant 0 : index
    %c0_146 = arith.constant 0 : index
    %632 = vector.load %arg13[%c0_144, %c0_145, %c0_146] : memref<16x8x128xf32, #tpu.memory_space<vmem>>, vector<16x8x128xf32>
    tpu.vector_store %arg13[%c0_144, %c0_145, %c0_146], %631 {strides = array<i32>} : memref<16x8x128xf32, #tpu.memory_space<vmem>>, vector<16x8x128xf32>,
    return
  }
  func.func @transform_0(%arg0: i32) -> (i32, i32, i32) {
    %c1_i32 = arith.constant 1 : i32
    %0 = arith.minsi %arg0, %c1_i32 : i32
    %c0_i32 = arith.constant 0 : i32
    %c0_i32_0 = arith.constant 0 : i32
    %c0_i32_1 = arith.constant 0 : i32
    return %0, %c0_i32, %c0_i32_0 : i32, i32, i32
  }
  func.func @transform_1(%arg0: i32) -> (i32, i32) {
    %c0_i32 = arith.constant 0 : i32
    %c0_i32_0 = arith.constant 0 : i32
    %c0_i32_1 = arith.constant 0 : i32
    return %c0_i32, %c0_i32_0 : i32, i32
  }
  func.func @transform_2(%arg0: i32) -> (i32, i32) {
    %c0_i32 = arith.constant 0 : i32
    %c0_i32_0 = arith.constant 0 : i32
    %c0_i32_1 = arith.constant 0 : i32
    return %c0_i32, %c0_i32_0 : i32, i32
  }
  func.func @transform_3(%arg0: i32) -> (i32, i32) {
    %c0_i32 = arith.constant 0 : i32
    %c0_i32_0 = arith.constant 0 : i32
    %c0_i32_1 = arith.constant 0 : i32
    return %c0_i32, %c0_i32_0 : i32, i32
  }
  func.func @transform_4(%arg0: i32) -> (i32, i32) {
    %c0_i32 = arith.constant 0 : i32
    %c0_i32_0 = arith.constant 0 : i32
    %c0_i32_1 = arith.constant 0 : i32
    return %c0_i32, %c0_i32_0 : i32, i32
  }
  func.func @transform_5(%arg0: i32) -> (i32, i32) {
    %c0_i32 = arith.constant 0 : i32
    %c0_i32_0 = arith.constant 0 : i32
    %c0_i32_1 = arith.constant 0 : i32
    return %c0_i32, %c0_i32_0 : i32, i32
  }
  func.func @transform_6(%arg0: i32) -> (i32, i32) {
    %c0_i32 = arith.constant 0 : i32
    %c0_i32_0 = arith.constant 0 : i32
    %c0_i32_1 = arith.constant 0 : i32
    return %c0_i32, %c0_i32_0 : i32, i32
  }
  func.func @transform_7(%arg0: i32) -> (i32, i32) {
    %c0_i32 = arith.constant 0 : i32
    %c0_i32_0 = arith.constant 0 : i32
    %c0_i32_1 = arith.constant 0 : i32
    return %c0_i32, %c0_i32_0 : i32, i32
  }
  func.func @transform_8(%arg0: i32) -> (i32, i32) {
    %c0_i32 = arith.constant 0 : i32
    %c0_i32_0 = arith.constant 0 : i32
    %c0_i32_1 = arith.constant 0 : i32
    return %c0_i32, %c0_i32_0 : i32, i32
  }
  func.func @transform_9(%arg0: i32) -> (i32, i32) {
    %c0_i32 = arith.constant 0 : i32
    %c0_i32_0 = arith.constant 0 : i32
    %c0_i32_1 = arith.constant 0 : i32
    return %c0_i32, %c0_i32_0 : i32, i32
  }
  func.func @transform_10(%arg0: i32) -> (i32, i32) {
    %c0_i32 = arith.constant 0 : i32
    %c0_i32_0 = arith.constant 0 : i32
    %c0_i32_1 = arith.constant 0 : i32
    return %c0_i32, %c0_i32_0 : i32, i32
  }
  func.func @transform_11(%arg0: i32) -> (i32, i32) {
    %c0_i32 = arith.constant 0 : i32
    %c0_i32_0 = arith.constant 0 : i32
    %c0_i32_1 = arith.constant 0 : i32
    return %c0_i32, %c0_i32_0 : i32, i32
  }
  func.func @transform_12(%arg0: i32) -> (i32, i32, i32) {
    %c1_i32 = arith.constant 1 : i32
    %0 = arith.subi %arg0, %c1_i32 : i32
    %c0_i32 = arith.constant 0 : i32
    %1 = arith.maxsi %0, %c0_i32 : i32
    %c0_i32_0 = arith.constant 0 : i32
    %c0_i32_1 = arith.constant 0 : i32
    %c0_i32_2 = arith.constant 0 : i32
    return %1, %c0_i32_0, %c0_i32_1 : i32, i32, i32
  }
}

</mosaic_0001>

<llo_original>
// kernel: tpu_custom_call.1
$region0: #{tpu_custom_call.1}
  #allocation0 [shape = 'u32[]', space=smem, size = 0x4, offset = 0x4, fixed_abs, tag = 'smem constant byte address 0x4 - core index']
  #allocation1 [shape = 'u32[72,128]{1,0:T(1,128)}', space=vmem, size = 0x9000, scoped, tag = 'internal scratch']
  #allocation2 [shape = 'f32[8,128]{1,0:T(8,128)}', space=vmem, size = 0x1000, scoped, tag = 'scratch operand']
  #allocation3 [shape = 'f32[16,8,384]{2,1,0:T(8,128)}', space=vmem, size = 0x30000, scoped, tag = 'scratch operand']
  #allocation4 [shape = 'f32[2,16,8,128]{3,2,1,0:T(8,128)}', space=vmem, size = 0x20000, scoped, tag = 'scratch operand']
  #allocation5 [shape = 'f32[2,128,256]{2,1,0:T(8,128)}', space=vmem, size = 0x40000, scoped, tag = 'scratch operand']
  #allocation6 [shape = 'f32[8,256]{1,0:T(8,128)}', space=vmem, size = 0x2000, scoped, tag = 'scratch operand']
  %s0 = inlined_call_operand.hbm [shape: bf16[32,8,32], index: 0, kind: input, shape index: {}]
  %s1 = inlined_call_operand.vmem [shape: s32[8,1], index: 1, kind: input, shape index: {}]
  %s2 = inlined_call_operand.vmem [shape: f32[8,64], index: 2, kind: input, shape index: {}]
  %s3 = inlined_call_operand.hbm [shape: bf16[32,640], index: 3, kind: input, shape index: {}]
  %s4 = inlined_call_operand.hbm [shape: f32[1,640], index: 4, kind: input, shape index: {}]
  %s5 = inlined_call_operand.hbm [shape: f32[128,384], index: 5, kind: input, shape index: {}]
  %s6 = inlined_call_operand.vmem [shape: f32[1,128], index: 6, kind: input, shape index: {}]
  %s7 = inlined_call_operand.hbm [shape: f32[64,128], index: 7, kind: input, shape index: {}]
  %s8 = inlined_call_operand.vmem [shape: f32[1,128], index: 8, kind: input, shape index: {}]
  %s9 = inlined_call_operand.hbm [shape: f32[64,256], index: 9, kind: input, shape index: {}]
  %s10 = inlined_call_operand.hbm [shape: bf16[128,256], index: 10, kind: input, shape index: {}]
  %s11 = inlined_call_operand.hbm [shape: bf16[128,128], index: 11, kind: input, shape index: {}]
  %s12 = inlined_call_operand.hbm [shape: f32[32,8,128], index: 12, kind: output, shape index: {}]
  %s13 = sld [smem:[#allocation0]]
  $region117: #{tpu_custom_call.1} parent=0
    _
  %s15 = ssub.s32 1, %s13
  %s16 = scalar_select 0, %s15, %s13
  $region1: #{tpu_custom_call.1} parent=0
    #allocation7 [shape = 'u8[65536]{0}', space=vmem, size = 0x10000, scoped, tag = 'input window, operand 0']
    #allocation8 [shape = 's32[2]{0}', space=sflag, size = 0x8, scoped, tag = 'scoped memory for tpu_custom_call.1']
    #allocation9 [shape = 's32[2]{0}', space=sflag, size = 0x8, scoped, tag = 'scoped memory for tpu_custom_call.1']
    #allocation10 [shape = 'u8[40960]{0}', space=vmem, size = 0xa000, scoped, tag = 'input window, operand 3, single buffered']
    #allocation11 [shape = 's32[1]{0}', space=sflag, size = 0x4, scoped, tag = 'scoped memory for tpu_custom_call.1']
    #allocation12 [shape = 'u8[2560]{0}', space=vmem, size = 0xc00, scoped, tag = 'input window, operand 4, single buffered']
    #allocation13 [shape = 'u8[196608]{0}', space=vmem, size = 0x30000, scoped, tag = 'input window, operand 5, single buffered']
    #allocation14 [shape = 's32[1]{0}', space=sflag, size = 0x4, scoped, tag = 'scoped memory for tpu_custom_call.1']
    #allocation15 [shape = 'u8[32768]{0}', space=vmem, size = 0x8000, scoped, tag = 'input window, operand 7, single buffered']
    #allocation16 [shape = 'u8[65536]{0}', space=vmem, size = 0x10000, scoped, tag = 'input window, operand 9, single buffered']
    #allocation17 [shape = 's32[1]{0}', space=sflag, size = 0x4, scoped, tag = 'scoped memory for tpu_custom_call.1']
    #allocation18 [shape = 'u8[65536]{0}', space=vmem, size = 0x10000, scoped, tag = 'input window, operand 10, single buffered']
    #allocation19 [shape = 'u8[32768]{0}', space=vmem, size = 0x8000, scoped, tag = 'input window, operand 11, single buffered']
    #allocation20 [shape = 's32[1]{0}', space=sflag, size = 0x4, scoped, tag = 'scoped memory for tpu_custom_call.1']
    #allocation21 [shape = 'u8[131072]{0}', space=vmem, size = 0x20000, scoped, tag = 'output window, operand 0']
    %17 = vsyncpa [#allocation8], 0
    %s18 = scalar_lea.sflag [#allocation8], 1
    %19 = vsyncpa %s18, 0
    %20 = vsyncpa [#allocation11], 0
    %21 = vsyncpa [#allocation14], 0
    %22 = vsyncpa [#allocation17], 0
    %23 = vsyncpa [#allocation20], 0
    %24 = vsyncpa [#allocation9], 0
    %s25 = scalar_lea.sflag [#allocation9], 1
    %26 = vsyncpa %s25, 0
    loop: start=0, step=1, limit=5
    $region2: #{tpu_custom_call.1} parent=1 // loop_pre_header
      _
    $region3: #{tpu_custom_call.1} parent=1 // loop_header
      %s28 = sphi 0, %s32
      %p29 = scmp.ge.s32.totalorder %s28, 5
      %s42 = sphi 0, %s44
      %s45 = sphi 0, %s42
      %s46 = sphi 0, %s45
      %s62 = sphi 0, %s46
      %s66 = sphi 0, %s66
      %s68 = sphi 0, %s66
      %s69 = sphi 0, %s68
      %s83 = sphi 0, %s69
      %s87 = sphi 0, %s87
      %s89 = sphi 0, %s87
      %s90 = sphi 0, %s89
      %s104 = sphi 0, %s90
      %s108 = sphi 0, %s108
      %s110 = sphi 0, %s108
      %s111 = sphi 0, %s110
      %s125 = sphi 0, %s111
      %s129 = sphi 0, %s129
      %s131 = sphi 0, %s129
      %s132 = sphi 0, %s131
      %s146 = sphi 0, %s132
      %s150 = sphi 0, %s150
      %s152 = sphi 0, %s150
      %s153 = sphi 0, %s152
      %s167 = sphi 0, %s153
      %s171 = sphi 0, %s171
      %s173 = sphi 0, %s171
      %s174 = sphi 0, %s173
      %s188 = sphi 0, %s174
      %s192 = sphi 0, %s192
      %s194 = sphi 0, %s192
      %s195 = sphi 0, %s194
      %s209 = sphi 0, %s195
      %s213 = sphi 0, %s213
      %s215 = sphi 0, %s213
      %s216 = sphi 0, %s215
      %s230 = sphi 0, %s216
      %s234 = sphi 0, %s234
      %s236 = sphi 0, %s234
      %s237 = sphi 0, %s236
      %s251 = sphi 0, %s237
      %s255 = sphi 0, %s255
      %s257 = sphi 0, %s255
      %s258 = sphi 0, %s257
      %s272 = sphi 0, %s258
      %s276 = sphi 0, %s276
      %s278 = sphi 0, %s276
      %s279 = sphi 0, %s278
      %s293 = sphi 0, %s279
      %s305 = sphi 0, %s307
      %s308 = sphi 0, %s305
      %s309 = sphi 0, %s308
      %s325 = sphi 0, %s309
    $region4: #{tpu_custom_call.1} parent=1 // loop_header_branch
      %31 = sbr.rel (%p29) target = $region8
    $region5: #{tpu_custom_call.1} parent=1 // loop_body
      %s33 = ssub.s32 %s28, 1
      %s34 = ssub.s32 %s28, 2
      %s35 = sadd.s32 %s28, 1
      %p36 = scmp.lt.s32.totalorder %s28, 1
      %s37 = scalar_select %p36, %s28, 1
      %p38 = scmp.lt.s32.totalorder %s35, 1
      %s39 = scalar_select %p38, %s35, 1
      %s40 = ssub.s32 %s37, %s39
      %p41 = scmp.eq.s32.totalorder %s40, 0
      %s43 = sadd.s32 %s42, 1
      %s44 = scalar_select %p41, %s42, %s43
      %p47 = pneg %p41
      %p48 = scmp.eq.s32.totalorder %s28, 2
      %p49 = por %p47, %p48
      %p50 = scmp.ne.s32.totalorder %s42, %s45
      %p51 = scmp.eq.s32.totalorder %s28, 0
      %p52 = por %p50, %p51
      %p53 = scmp.ne.s32.totalorder %s42, %s45
      %p54 = scmp.eq.s32.totalorder %s33, 2
      %p55 = por %p53, %p54
      %p56 = scmp.ne.s32.totalorder %s45, %s46
      %p57 = scmp.eq.s32.totalorder %s33, 0
      %p58 = por %p56, %p57
      %p59 = scmp.ne.s32.totalorder %s45, %s46
      %p60 = scmp.eq.s32.totalorder %s34, 2
      %p61 = por %p59, %p60
      %p63 = scmp.ne.s32.totalorder %s46, %s62
      %p64 = scmp.eq.s32.totalorder %s34, 0
      %p65 = por %p63, %p64
      %s67 = sadd.s32 %s66, 1
      %p70 = scmp.eq.s32.totalorder %s28, 2
      %p71 = scmp.ne.s32.totalorder %s66, %s68
      %p72 = scmp.eq.s32.totalorder %s28, 0
      %p73 = por %p71, %p72
      %p74 = scmp.ne.s32.totalorder %s66, %s68
      %p75 = scmp.eq.s32.totalorder %s33, 2
      %p76 = por %p74, %p75
      %p77 = scmp.ne.s32.totalorder %s68, %s69
      %p78 = scmp.eq.s32.totalorder %s33, 0
      %p79 = por %p77, %p78
      %p80 = scmp.ne.s32.totalorder %s68, %s69
      %p81 = scmp.eq.s32.totalorder %s34, 2
      %p82 = por %p80, %p81
      %p84 = scmp.ne.s32.totalorder %s69, %s83
      %p85 = scmp.eq.s32.totalorder %s34, 0
      %p86 = por %p84, %p85
      %s88 = sadd.s32 %s87, 1
      %p91 = scmp.eq.s32.totalorder %s28, 2
      %p92 = scmp.ne.s32.totalorder %s87, %s89
      %p93 = scmp.eq.s32.totalorder %s28, 0
      %p94 = por %p92, %p93
      %p95 = scmp.ne.s32.totalorder %s87, %s89
      %p96 = scmp.eq.s32.totalorder %s33, 2
      %p97 = por %p95, %p96
      %p98 = scmp.ne.s32.totalorder %s89, %s90
      %p99 = scmp.eq.s32.totalorder %s33, 0
      %p100 = por %p98, %p99
      %p101 = scmp.ne.s32.totalorder %s89, %s90
      %p102 = scmp.eq.s32.totalorder %s34, 2
      %p103 = por %p101, %p102
      %p105 = scmp.ne.s32.totalorder %s90, %s104
      %p106 = scmp.eq.s32.totalorder %s34, 0
      %p107 = por %p105, %p106
      %s109 = sadd.s32 %s108, 1
      %p112 = scmp.eq.s32.totalorder %s28, 2
      %p113 = scmp.ne.s32.totalorder %s108, %s110
      %p114 = scmp.eq.s32.totalorder %s28, 0
      %p115 = por %p113, %p114
      %p116 = scmp.ne.s32.totalorder %s108, %s110
      %p117 = scmp.eq.s32.totalorder %s33, 2
      %p118 = por %p116, %p117
      %p119 = scmp.ne.s32.totalorder %s110, %s111
      %p120 = scmp.eq.s32.totalorder %s33, 0
      %p121 = por %p119, %p120
      %p122 = scmp.ne.s32.totalorder %s110, %s111
      %p123 = scmp.eq.s32.totalorder %s34, 2
      %p124 = por %p122, %p123
      %p126 = scmp.ne.s32.totalorder %s111, %s125
      %p127 = scmp.eq.s32.totalorder %s34, 0
      %p128 = por %p126, %p127
      %s130 = sadd.s32 %s129, 1
      %p133 = scmp.eq.s32.totalorder %s28, 2
      %p134 = scmp.ne.s32.totalorder %s129, %s131
      %p135 = scmp.eq.s32.totalorder %s28, 0
      %p136 = por %p134, %p135
      %p137 = scmp.ne.s32.totalorder %s129, %s131
      %p138 = scmp.eq.s32.totalorder %s33, 2
      %p139 = por %p137, %p138
      %p140 = scmp.ne.s32.totalorder %s131, %s132
      %p141 = scmp.eq.s32.totalorder %s33, 0
      %p142 = por %p140, %p141
      %p143 = scmp.ne.s32.totalorder %s131, %s132
      %p144 = scmp.eq.s32.totalorder %s34, 2
      %p145 = por %p143, %p144
      %p147 = scmp.ne.s32.totalorder %s132, %s146
      %p148 = scmp.eq.s32.totalorder %s34, 0
      %p149 = por %p147, %p148
      %s151 = sadd.s32 %s150, 1
      %p154 = scmp.eq.s32.totalorder %s28, 2
      %p155 = scmp.ne.s32.totalorder %s150, %s152
      %p156 = scmp.eq.s32.totalorder %s28, 0
      %p157 = por %p155, %p156
      %p158 = scmp.ne.s32.totalorder %s150, %s152
      %p159 = scmp.eq.s32.totalorder %s33, 2
      %p160 = por %p158, %p159
      %p161 = scmp.ne.s32.totalorder %s152, %s153
      %p162 = scmp.eq.s32.totalorder %s33, 0
      %p163 = por %p161, %p162
      %p164 = scmp.ne.s32.totalorder %s152, %s153
      %p165 = scmp.eq.s32.totalorder %s34, 2
      %p166 = por %p164, %p165
      %p168 = scmp.ne.s32.totalorder %s153, %s167
      %p169 = scmp.eq.s32.totalorder %s34, 0
      %p170 = por %p168, %p169
      %s172 = sadd.s32 %s171, 1
      %p175 = scmp.eq.s32.totalorder %s28, 2
      %p176 = scmp.ne.s32.totalorder %s171, %s173
      %p177 = scmp.eq.s32.totalorder %s28, 0
      %p178 = por %p176, %p177
      %p179 = scmp.ne.s32.totalorder %s171, %s173
      %p180 = scmp.eq.s32.totalorder %s33, 2
      %p181 = por %p179, %p180
      %p182 = scmp.ne.s32.totalorder %s173, %s174
      %p183 = scmp.eq.s32.totalorder %s33, 0
      %p184 = por %p182, %p183
      %p185 = scmp.ne.s32.totalorder %s173, %s174
      %p186 = scmp.eq.s32.totalorder %s34, 2
      %p187 = por %p185, %p186
      %p189 = scmp.ne.s32.totalorder %s174, %s188
      %p190 = scmp.eq.s32.totalorder %s34, 0
      %p191 = por %p189, %p190
      %s193 = sadd.s32 %s192, 1
      %p196 = scmp.eq.s32.totalorder %s28, 2
      %p197 = scmp.ne.s32.totalorder %s192, %s194
      %p198 = scmp.eq.s32.totalorder %s28, 0
      %p199 = por %p197, %p198
      %p200 = scmp.ne.s32.totalorder %s192, %s194
      %p201 = scmp.eq.s32.totalorder %s33, 2
      %p202 = por %p200, %p201
      %p203 = scmp.ne.s32.totalorder %s194, %s195
      %p204 = scmp.eq.s32.totalorder %s33, 0
      %p205 = por %p203, %p204
      %p206 = scmp.ne.s32.totalorder %s194, %s195
      %p207 = scmp.eq.s32.totalorder %s34, 2
      %p208 = por %p206, %p207
      %p210 = scmp.ne.s32.totalorder %s195, %s209
      %p211 = scmp.eq.s32.totalorder %s34, 0
      %p212 = por %p210, %p211
      %s214 = sadd.s32 %s213, 1
      %p217 = scmp.eq.s32.totalorder %s28, 2
      %p218 = scmp.ne.s32.totalorder %s213, %s215
      %p219 = scmp.eq.s32.totalorder %s28, 0
      %p220 = por %p218, %p219
      %p221 = scmp.ne.s32.totalorder %s213, %s215
      %p222 = scmp.eq.s32.totalorder %s33, 2
      %p223 = por %p221, %p222
      %p224 = scmp.ne.s32.totalorder %s215, %s216
      %p225 = scmp.eq.s32.totalorder %s33, 0
      %p226 = por %p224, %p225
      %p227 = scmp.ne.s32.totalorder %s215, %s216
      %p228 = scmp.eq.s32.totalorder %s34, 2
      %p229 = por %p227, %p228
      %p231 = scmp.ne.s32.totalorder %s216, %s230
      %p232 = scmp.eq.s32.totalorder %s34, 0
      %p233 = por %p231, %p232
      %s235 = sadd.s32 %s234, 1
      %p238 = scmp.eq.s32.totalorder %s28, 2
      %p239 = scmp.ne.s32.totalorder %s234, %s236
      %p240 = scmp.eq.s32.totalorder %s28, 0
      %p241 = por %p239, %p240
      %p242 = scmp.ne.s32.totalorder %s234, %s236
      %p243 = scmp.eq.s32.totalorder %s33, 2
      %p244 = por %p242, %p243
      %p245 = scmp.ne.s32.totalorder %s236, %s237
      %p246 = scmp.eq.s32.totalorder %s33, 0
      %p247 = por %p245, %p246
      %p248 = scmp.ne.s32.totalorder %s236, %s237
      %p249 = scmp.eq.s32.totalorder %s34, 2
      %p250 = por %p248, %p249
      %p252 = scmp.ne.s32.totalorder %s237, %s251
      %p253 = scmp.eq.s32.totalorder %s34, 0
      %p254 = por %p252, %p253
      %s256 = sadd.s32 %s255, 1
      %p259 = scmp.eq.s32.totalorder %s28, 2
      %p260 = scmp.ne.s32.totalorder %s255, %s257
      %p261 = scmp.eq.s32.totalorder %s28, 0
      %p262 = por %p260, %p261
      %p263 = scmp.ne.s32.totalorder %s255, %s257
      %p264 = scmp.eq.s32.totalorder %s33, 2
      %p265 = por %p263, %p264
      %p266 = scmp.ne.s32.totalorder %s257, %s258
      %p267 = scmp.eq.s32.totalorder %s33, 0
      %p268 = por %p266, %p267
      %p269 = scmp.ne.s32.totalorder %s257, %s258
      %p270 = scmp.eq.s32.totalorder %s34, 2
      %p271 = por %p269, %p270
      %p273 = scmp.ne.s32.totalorder %s258, %s272
      %p274 = scmp.eq.s32.totalorder %s34, 0
      %p275 = por %p273, %p274
      %s277 = sadd.s32 %s276, 1
      %p280 = scmp.eq.s32.totalorder %s28, 2
      %p281 = scmp.ne.s32.totalorder %s276, %s278
      %p282 = scmp.eq.s32.totalorder %s28, 0
      %p283 = por %p281, %p282
      %p284 = scmp.ne.s32.totalorder %s276, %s278
      %p285 = scmp.eq.s32.totalorder %s33, 2
      %p286 = por %p284, %p285
      %p287 = scmp.ne.s32.totalorder %s278, %s279
      %p288 = scmp.eq.s32.totalorder %s33, 0
      %p289 = por %p287, %p288
      %p290 = scmp.ne.s32.totalorder %s278, %s279
      %p291 = scmp.eq.s32.totalorder %s34, 2
      %p292 = por %p290, %p291
      %p294 = scmp.ne.s32.totalorder %s279, %s293
      %p295 = scmp.eq.s32.totalorder %s34, 0
      %p296 = por %p294, %p295
      %s297 = ssub.s32 %s28, 1
      %p298 = scmp.gt.s32.totalorder %s297, 0
      %s299 = scalar_select %p298, %s297, 0
      %s300 = ssub.s32 %s35, 1
      %p301 = scmp.gt.s32.totalorder %s300, 0
      %s302 = scalar_select %p301, %s300, 0
      %s303 = ssub.s32 %s299, %s302
      %p304 = scmp.eq.s32.totalorder %s303, 0
      %s306 = sadd.s32 %s305, 1
      %s307 = scalar_select %p304, %s305, %s306
      %p310 = pneg %p304
      %p311 = scmp.eq.s32.totalorder %s28, 2
      %p312 = por %p310, %p311
      %p313 = scmp.ne.s32.totalorder %s305, %s308
      %p314 = scmp.eq.s32.totalorder %s28, 0
      %p315 = por %p313, %p314
      %p316 = scmp.ne.s32.totalorder %s305, %s308
      %p317 = scmp.eq.s32.totalorder %s33, 2
      %p318 = por %p316, %p317
      %p319 = scmp.ne.s32.totalorder %s308, %s309
      %p320 = scmp.eq.s32.totalorder %s33, 0
      %p321 = por %p319, %p320
      %p322 = scmp.ne.s32.totalorder %s308, %s309
      %p323 = scmp.eq.s32.totalorder %s34, 2
      %p324 = por %p322, %p323
      %p326 = scmp.ne.s32.totalorder %s309, %s325
      %p327 = scmp.eq.s32.totalorder %s34, 0
      %p328 = por %p326, %p327
      %p329 = scmp.le.s32.totalorder 1, %s28
      %p330 = scmp.lt.s32.totalorder %s28, 4
      %p331 = pnand %p329, %p330
      %p332 = pneg %p331
      // Predicated region
      $region9: #{tpu_custom_call.1} parent=5 // pred_check
        _
      $region10: #{tpu_custom_call.1} parent=5 // pred_check_branch
        %334 = sbr.rel (%p331) target = $region12
      $region11: #{tpu_custom_call.1} parent=5 // pred_region
        %s335 = ssub.s32 %s28, 1
        // Predicated region
        $region13: #{tpu_custom_call.1} parent=11 // pred_check
          %p336 = pneg %p79
        $region14: #{tpu_custom_call.1} parent=11 // pred_check_branch
          %338 = sbr.rel (%p336) target = $region16
        $region15: #{tpu_custom_call.1} parent=11 // pred_region
          _
        $region16: #{tpu_custom_call.1} parent=11 // pred_fallthru
          _
        // Predicated region
        $region17: #{tpu_custom_call.1} parent=11 // pred_check
          %p339 = pneg %p100
        $region18: #{tpu_custom_call.1} parent=11 // pred_check_branch
          %341 = sbr.rel (%p339) target = $region20
        $region19: #{tpu_custom_call.1} parent=11 // pred_region
          _
        $region20: #{tpu_custom_call.1} parent=11 // pred_fallthru
          _
        // Predicated region
        $region21: #{tpu_custom_call.1} parent=11 // pred_check
          %p342 = pneg %p121
        $region22: #{tpu_custom_call.1} parent=11 // pred_check_branch
          %344 = sbr.rel (%p342) target = $region24
        $region23: #{tpu_custom_call.1} parent=11 // pred_region
          %346 = vsyncadd [#allocation11], 0
          %s347 = sshll.u32 %s3, 4
          %s348 = int_to_ptr.hbm [resolvable:$true] %s347
          %s349 = sshll.u32 [#allocation10], 4
          %s350 = int_to_ptr.vmem [resolvable:$true] %s349
          %355 = dma.hbm_to_vmem [thread:$0]  %s348, 1280, %s350, [#allocation11], 320, 320, 20
        $region24: #{tpu_custom_call.1} parent=11 // pred_fallthru
          _
        // Predicated region
        $region25: #{tpu_custom_call.1} parent=11 // pred_check
          %p356 = pneg %p142
        $region26: #{tpu_custom_call.1} parent=11 // pred_check_branch
          %358 = sbr.rel (%p356) target = $region28
        $region27: #{tpu_custom_call.1} parent=11 // pred_region
          %360 = vsyncadd [#allocation11], 0
          %s362 = sshll.u32 %s4, 4
          %s363 = int_to_ptr.hbm [resolvable:$true] %s362
          %s364 = sshll.u32 [#allocation12], 4
          %s365 = int_to_ptr.vmem [resolvable:$true] %s364
          %367 = dma.hbm_to_vmem [thread:$0]  %s363, 80, %s365, [#allocation11]
        $region28: #{tpu_custom_call.1} parent=11 // pred_fallthru
          _
        // Predicated region
        $region29: #{tpu_custom_call.1} parent=11 // pred_check
          %p368 = pneg %p163
        $region30: #{tpu_custom_call.1} parent=11 // pred_check_branch
          %370 = sbr.rel (%p368) target = $region32
        $region31: #{tpu_custom_call.1} parent=11 // pred_region
          %372 = vsyncadd [#allocation14], 0
          %s373 = sshll.u32 %s5, 4
          %s374 = int_to_ptr.hbm [resolvable:$true] %s373
          %s375 = sshll.u32 [#allocation13], 4
          %s376 = int_to_ptr.vmem [resolvable:$true] %s375
          %381 = dma.hbm_to_vmem [thread:$0]  %s374, 6144, %s376, [#allocation14], 384, 384, 24
        $region32: #{tpu_custom_call.1} parent=11 // pred_fallthru
          _
        // Predicated region
        $region33: #{tpu_custom_call.1} parent=11 // pred_check
          %p382 = pneg %p184
        $region34: #{tpu_custom_call.1} parent=11 // pred_check_branch
          %384 = sbr.rel (%p382) target = $region36
        $region35: #{tpu_custom_call.1} parent=11 // pred_region
          _
        $region36: #{tpu_custom_call.1} parent=11 // pred_fallthru
          _
        // Predicated region
        $region37: #{tpu_custom_call.1} parent=11 // pred_check
          %p385 = pneg %p205
        $region38: #{tpu_custom_call.1} parent=11 // pred_check_branch
          %387 = sbr.rel (%p385) target = $region40
        $region39: #{tpu_custom_call.1} parent=11 // pred_region
          %389 = vsyncadd [#allocation14], 0
          %s390 = sshll.u32 %s7, 4
          %s391 = int_to_ptr.hbm [resolvable:$true] %s390
          %s392 = sshll.u32 [#allocation15], 4
          %s393 = int_to_ptr.vmem [resolvable:$true] %s392
          %398 = dma.hbm_to_vmem [thread:$0]  %s391, 1024, %s393, [#allocation14], 128, 128, 8
        $region40: #{tpu_custom_call.1} parent=11 // pred_fallthru
          _
        // Predicated region
        $region41: #{tpu_custom_call.1} parent=11 // pred_check
          %p399 = pneg %p226
        $region42: #{tpu_custom_call.1} parent=11 // pred_check_branch
          %401 = sbr.rel (%p399) target = $region44
        $region43: #{tpu_custom_call.1} parent=11 // pred_region
          _
        $region44: #{tpu_custom_call.1} parent=11 // pred_fallthru
          _
        // Predicated region
        $region45: #{tpu_custom_call.1} parent=11 // pred_check
          %p402 = pneg %p247
        $region46: #{tpu_custom_call.1} parent=11 // pred_check_branch
          %404 = sbr.rel (%p402) target = $region48
        $region47: #{tpu_custom_call.1} parent=11 // pred_region
          %406 = vsyncadd [#allocation17], 0
          %s407 = sshll.u32 %s9, 4
          %s408 = int_to_ptr.hbm [resolvable:$true] %s407
          %s409 = sshll.u32 [#allocation16], 4
          %s410 = int_to_ptr.vmem [resolvable:$true] %s409
          %415 = dma.hbm_to_vmem [thread:$0]  %s408, 2048, %s410, [#allocation17], 256, 256, 16
        $region48: #{tpu_custom_call.1} parent=11 // pred_fallthru
          _
        // Predicated region
        $region49: #{tpu_custom_call.1} parent=11 // pred_check
          %p416 = pneg %p268
        $region50: #{tpu_custom_call.1} parent=11 // pred_check_branch
          %418 = sbr.rel (%p416) target = $region52
        $region51: #{tpu_custom_call.1} parent=11 // pred_region
          %420 = vsyncadd [#allocation17], 0
          %s421 = sshll.u32 %s10, 4
          %s422 = int_to_ptr.hbm [resolvable:$true] %s421
          %s423 = sshll.u32 [#allocation18], 4
          %s424 = int_to_ptr.vmem [resolvable:$true] %s423
          %429 = dma.hbm_to_vmem [thread:$0]  %s422, 2048, %s424, [#allocation17], 128, 128, 8
        $region52: #{tpu_custom_call.1} parent=11 // pred_fallthru
          _
        // Predicated region
        $region53: #{tpu_custom_call.1} parent=11 // pred_check
          %p430 = pneg %p289
        $region54: #{tpu_custom_call.1} parent=11 // pred_check_branch
          %432 = sbr.rel (%p430) target = $region56
        $region55: #{tpu_custom_call.1} parent=11 // pred_region
          %434 = vsyncadd [#allocation20], 0
          %s435 = sshll.u32 %s11, 4
          %s436 = int_to_ptr.hbm [resolvable:$true] %s435
          %s437 = sshll.u32 [#allocation19], 4
          %s438 = int_to_ptr.vmem [resolvable:$true] %s437
          %443 = dma.hbm_to_vmem [thread:$0]  %s436, 1024, %s438, [#allocation20], 64, 64, 4
        $region56: #{tpu_custom_call.1} parent=11 // pred_fallthru
          _
      $region12: #{tpu_custom_call.1} parent=5 // pred_fallthru
        _
      %p444 = scmp.lt.s32.totalorder %s28, 3
      // Predicated region
      $region57: #{tpu_custom_call.1} parent=5 // pred_check
        %p445 = pneg %p444
      $region58: #{tpu_custom_call.1} parent=5 // pred_check_branch
        %447 = sbr.rel (%p445) target = $region60
      $region59: #{tpu_custom_call.1} parent=5 // pred_region
        // Predicated region
        $region61: #{tpu_custom_call.1} parent=59 // pred_check
          %p448 = pneg %p52
        $region62: #{tpu_custom_call.1} parent=59 // pred_check_branch
          %450 = sbr.rel (%p448) target = $region64
        $region63: #{tpu_custom_call.1} parent=59 // pred_region
          %s451 = sand.u32 %s42, 1
          %s452 = scalar_lea.sflag [#allocation8], %s451
          %s453 = sand.u32 %s42, 1
          %s454 = smul.addr %s453, 64
          %s455 = scalar_lea.vmem [#allocation7], %s454
          %p456 = scmp.lt.s32.totalorder %s28, 1
          %s457 = scalar_select %p456, %s28, 1
          %s458 = smul.u32 16, %s457
          %460 = vsyncadd %s452, 0
          %s461 = smul.addr %s458, 4
          %s462 = scalar_lea.hbm %s0, %s461
          %s463 = sshll.u32 %s462, 4
          %s464 = int_to_ptr.hbm [resolvable:$true] %s463
          %s465 = sshll.u32 %s455, 4
          %s466 = int_to_ptr.vmem [resolvable:$true] %s465
          %471 = dma.hbm_to_vmem [thread:$0]  %s464, 1024, %s466, %s452, 64, 64, 4
        $region64: #{tpu_custom_call.1} parent=59 // pred_fallthru
          _
      $region60: #{tpu_custom_call.1} parent=5 // pred_fallthru
        _
      %p472 = scmp.le.s32.totalorder 1, %s28
      %p473 = scmp.lt.s32.totalorder %s28, 4
      %p474 = pnand %p472, %p473
      %p475 = pneg %p474
      // Predicated region
      $region65: #{tpu_custom_call.1} parent=5 // pred_check
        _
      $region66: #{tpu_custom_call.1} parent=5 // pred_check_branch
        %477 = sbr.rel (%p474) target = $region68
      $region67: #{tpu_custom_call.1} parent=5 // pred_region
        %s478 = ssub.s32 %s28, 1
        %s479 = sand.u32 %s45, 1
        %s480 = scalar_lea.sflag [#allocation8], %s479
        %s481 = sand.u32 %s45, 1
        %s482 = smul.addr %s481, 64
        %s483 = scalar_lea.vmem [#allocation7], %s482
        // Predicated region
        $region69: #{tpu_custom_call.1} parent=67 // pred_check
          %p484 = pneg %p58
        $region70: #{tpu_custom_call.1} parent=67 // pred_check_branch
          %486 = sbr.rel (%p484) target = $region72
        $region71: #{tpu_custom_call.1} parent=67 // pred_region
          %488 = dma.done %s480, 1024
        $region72: #{tpu_custom_call.1} parent=67 // pred_fallthru
          _
        // Predicated region
        $region73: #{tpu_custom_call.1} parent=67 // pred_check
          %p489 = pneg %p121
        $region74: #{tpu_custom_call.1} parent=67 // pred_check_branch
          %491 = sbr.rel (%p489) target = $region76
        $region75: #{tpu_custom_call.1} parent=67 // pred_region
          %493 = dma.done [#allocation11], 1280
        $region76: #{tpu_custom_call.1} parent=67 // pred_fallthru
          _
        // Predicated region
        $region77: #{tpu_custom_call.1} parent=67 // pred_check
          %p494 = pneg %p142
        $region78: #{tpu_custom_call.1} parent=67 // pred_check_branch
          %496 = sbr.rel (%p494) target = $region80
        $region79: #{tpu_custom_call.1} parent=67 // pred_region
          %498 = dma.done [#allocation11], 80
        $region80: #{tpu_custom_call.1} parent=67 // pred_fallthru
          _
        // Predicated region
        $region81: #{tpu_custom_call.1} parent=67 // pred_check
          %p499 = pneg %p163
        $region82: #{tpu_custom_call.1} parent=67 // pred_check_branch
          %501 = sbr.rel (%p499) target = $region84
        $region83: #{tpu_custom_call.1} parent=67 // pred_region
          %503 = dma.done [#allocation14], 6144
        $region84: #{tpu_custom_call.1} parent=67 // pred_fallthru
          _
        // Predicated region
        $region85: #{tpu_custom_call.1} parent=67 // pred_check
          %p504 = pneg %p205
        $region86: #{tpu_custom_call.1} parent=67 // pred_check_branch
          %506 = sbr.rel (%p504) target = $region88
        $region87: #{tpu_custom_call.1} parent=67 // pred_region
          %508 = dma.done [#allocation14], 1024
        $region88: #{tpu_custom_call.1} parent=67 // pred_fallthru
          _
        // Predicated region
        $region89: #{tpu_custom_call.1} parent=67 // pred_check
          %p509 = pneg %p247
        $region90: #{tpu_custom_call.1} parent=67 // pred_check_branch
          %511 = sbr.rel (%p509) target = $region92
        $region91: #{tpu_custom_call.1} parent=67 // pred_region
          %513 = dma.done [#allocation17], 2048
        $region92: #{tpu_custom_call.1} parent=67 // pred_fallthru
          _
        // Predicated region
        $region93: #{tpu_custom_call.1} parent=67 // pred_check
          %p514 = pneg %p268
        $region94: #{tpu_custom_call.1} parent=67 // pred_check_branch
          %516 = sbr.rel (%p514) target = $region96
        $region95: #{tpu_custom_call.1} parent=67 // pred_region
          %518 = dma.done [#allocation17], 2048
        $region96: #{tpu_custom_call.1} parent=67 // pred_fallthru
          _
        // Predicated region
        $region97: #{tpu_custom_call.1} parent=67 // pred_check
          %p519 = pneg %p289
        $region98: #{tpu_custom_call.1} parent=67 // pred_check_branch
          %521 = sbr.rel (%p519) target = $region100
        $region99: #{tpu_custom_call.1} parent=67 // pred_region
          %523 = dma.done [#allocation20], 1024
        $region100: #{tpu_custom_call.1} parent=67 // pred_fallthru
          _
        %s524 = sand.u32 %s45, 1
        %s525 = scalar_lea.sflag [#allocation8], %s524
        %s526 = sand.u32 %s45, 1
        %s527 = smul.addr %s526, 64
        %s528 = scalar_lea.vmem [#allocation7], %s527
        %p529 = pneg %p58
        %p530 = pneg %p55
        %p531 = pneg %p79
        %p532 = pneg %p76
        %p533 = pneg %p100
        %p534 = pneg %p97
        %p535 = pneg %p121
        %p536 = pneg %p118
        %p537 = pneg %p142
        %p538 = pneg %p139
        %p539 = pneg %p163
        %p540 = pneg %p160
        %p541 = pneg %p184
        %p542 = pneg %p181
        %p543 = pneg %p205
        %p544 = pneg %p202
        %p545 = pneg %p226
        %p546 = pneg %p223
        %p547 = pneg %p247
        %p548 = pneg %p244
        %p549 = pneg %p268
        %p550 = pneg %p265
        %p551 = pneg %p289
        %p552 = pneg %p286
        %p553 = pneg %p321
        %p554 = pneg %p318
        %s555 = sand.u32 %s308, 1
        %s556 = scalar_lea.sflag [#allocation9], %s555
        %s557 = sand.u32 %s308, 1
        %s558 = smul.addr %s557, 128
        %s559 = scalar_lea.vmem [#allocation21], %s558
        %p560 = scmp.lt.s32.totalorder %s33, 1
        %s561 = scalar_select %p560, %s33, 1
        %s562 = smul.u32 16, %s561
        %s563 = ssub.s32 %s33, 1
        %p564 = scmp.gt.s32.totalorder %s563, 0
        %s565 = scalar_select %p564, %s563, 0
        %s566 = smul.u32 16, %s565
        %p568 = scmp.lt.s32.totalorder %s33, 0
        %s569 = ssub.s32 0, %s33
        %s570 = scalar_select %p568, %s569, %s33
        %s571 = sand.u32 %s570, 1
        %s572 = ssub.s32 0, %s571
        %s573 = scalar_select %p568, %s572, %s571
        %p574 = scmp.ne.s32.totalorder %s573, 0
        %p575 = scmp.lt.s32.totalorder %s573, 0
        %p576 = pnand %p575, %p574
        %p577 = pneg %p576
        %s578 = sadd.s32 %s573, 2
        %s579 = scalar_select %p577, %s578, %s573
        %s580 = ssub.s32 1, %s579
        %p581 = scmp.eq.s32.totalorder %s33, 0
        // Predicated region
        $region101: #{tpu_custom_call.1} parent=67 // pred_check
          %p582 = pneg %p581
        $region102: #{tpu_custom_call.1} parent=67 // pred_check_branch
          %584 = sbr.rel (%p582) target = $region104
        $region103: #{tpu_custom_call.1} parent=67 // pred_region
          %v585 = vld [vmem:[%s2] sm:$0xff]
          %v586 = vld [vmem:[#allocation15] sm:$0xff]
          %v587 = vld [vmem:[#allocation15 + $0x8] sm:$0xff]
          %v588 = vld [vmem:[#allocation15 + $0x10] sm:$0xff]
          %v589 = vld [vmem:[#allocation15 + $0x18] sm:$0xff]
          %v590 = vld [vmem:[#allocation15 + $0x20] sm:$0xff]
          %v591 = vld [vmem:[#allocation15 + $0x28] sm:$0xff]
          %v592 = vld [vmem:[#allocation15 + $0x30] sm:$0xff]
          %v593 = vld [vmem:[#allocation15 + $0x38] sm:$0xff]
          %v594 = vld [vmem:[%s8] sm:$0x1]
          %v596 = vperm.slane %v594, 0
          %vm598 = vcmask 523264
          %v600 = vsel %vm598, %v585, 0
          %602 = vmatpush.msra.mxu0 0.0
          %603 = vmatpush.msra.mxu0 0.0
          %604 = vmatpush.msra.mxu0 0.0
          %605 = vmatpush.msra.mxu0 0.0
          %606 = vmatpush.msra.mxu0 0.0
          %607 = vmatpush.msra.mxu0 0.0
          %608 = vmatpush.msra.mxu0 0.0
          %609 = vmatpush.msra.mxu0 0.0
          %610 = vmatpush.msra.mxu0 %v593
          %611 = vmatpush.msra.mxu0 %v592
          %612 = vmatpush.msra.mxu0 %v591
          %613 = vmatpush.msra.mxu0 %v590
          %614 = vmatpush.msra.mxu0 %v589
          %615 = vmatpush.msra.mxu0 %v588
          %616 = vmatpush.msra.mxu0 %v587
          %617 = vmatpush.msra.mxu0 %v586
          %618 = vmatmul.f32.gmra.mxu0 %v600
          %v619 = vpop.f32.mrf.mxu0
          %v620 = vadd.f32 %v596, %v619
          %621 = vdwg.mxu0
          %v622 = vtanh.pop %v620
          %623 = vst [vmem:[#allocation2] sm:$0xff] %v622
          %v624 = vld [vmem:[#allocation16] sm:$0xff]
          %v625 = vld [vmem:[#allocation16 + $0x8] sm:$0xff]
          %v626 = vld [vmem:[#allocation16 + $0x10] sm:$0xff]
          %v627 = vld [vmem:[#allocation16 + $0x18] sm:$0xff]
          %v628 = vld [vmem:[#allocation16 + $0x20] sm:$0xff]
          %v629 = vld [vmem:[#allocation16 + $0x28] sm:$0xff]
          %v630 = vld [vmem:[#allocation16 + $0x30] sm:$0xff]
          %v631 = vld [vmem:[#allocation16 + $0x38] sm:$0xff]
          %v632 = vld [vmem:[#allocation16 + $0x40] sm:$0xff]
          %v633 = vld [vmem:[#allocation16 + $0x48] sm:$0xff]
          %v634 = vld [vmem:[#allocation16 + $0x50] sm:$0xff]
          %v635 = vld [vmem:[#allocation16 + $0x58] sm:$0xff]
          %v636 = vld [vmem:[#allocation16 + $0x60] sm:$0xff]
          %v637 = vld [vmem:[#allocation16 + $0x68] sm:$0xff]
          %v638 = vld [vmem:[#allocation16 + $0x70] sm:$0xff]
          %v639 = vld [vmem:[#allocation16 + $0x78] sm:$0xff]
          %640 = vmatpush.msra.mxu0 0.0
          %641 = vmatpush.msra.mxu0 0.0
          %642 = vmatpush.msra.mxu0 0.0
          %643 = vmatpush.msra.mxu0 0.0
          %644 = vmatpush.msra.mxu0 0.0
          %645 = vmatpush.msra.mxu0 0.0
          %646 = vmatpush.msra.mxu0 0.0
          %647 = vmatpush.msra.mxu0 0.0
          %648 = vmatpush.msra.mxu0 %v638
          %649 = vmatpush.msra.mxu0 %v636
          %650 = vmatpush.msra.mxu0 %v634
          %651 = vmatpush.msra.mxu0 %v632
          %652 = vmatpush.msra.mxu0 %v630
          %653 = vmatpush.msra.mxu0 %v628
          %654 = vmatpush.msra.mxu0 %v626
          %655 = vmatpush.msra.mxu0 %v624
          %656 = vmatmul.f32.gmra.mxu0 %v600
          %v657 = vpop.f32.mrf.mxu0
          %v658 = vadd.f32 0.0, %v657
          %659 = vdwg.mxu0
          %660 = vmatpush.msra.mxu0 0.0
          %661 = vmatpush.msra.mxu0 0.0
          %662 = vmatpush.msra.mxu0 0.0
          %663 = vmatpush.msra.mxu0 0.0
          %664 = vmatpush.msra.mxu0 0.0
          %665 = vmatpush.msra.mxu0 0.0
          %666 = vmatpush.msra.mxu0 0.0
          %667 = vmatpush.msra.mxu0 0.0
          %668 = vmatpush.msra.mxu0 %v639
          %669 = vmatpush.msra.mxu0 %v637
          %670 = vmatpush.msra.mxu0 %v635
          %671 = vmatpush.msra.mxu0 %v633
          %672 = vmatpush.msra.mxu0 %v631
          %673 = vmatpush.msra.mxu0 %v629
          %674 = vmatpush.msra.mxu0 %v627
          %675 = vmatpush.msra.mxu0 %v625
          %676 = vmatmul.f32.gmra.mxu0 %v600
          %v677 = vpop.f32.mrf.mxu0
          %v678 = vadd.f32 0.0, %v677
          %679 = vdwg.mxu0
          %680 = vst [vmem:[#allocation6] sm:$0xff] %v658
          %681 = vst [vmem:[#allocation6 + $0x8] sm:$0xff] %v678
        $region104: #{tpu_custom_call.1} parent=67 // pred_fallthru
          _
        %p682 = scmp.lt.s32.totalorder %s33, 1
        %s683 = scalar_select %p682, %s33, 1
        %v684 = vld [vmem:[%s483] sm:$0xf]
        %v685 = vld [vmem:[%s483 + $0x4] sm:$0xf]
        %v686 = vld [vmem:[%s483 + $0x8] sm:$0xf]
        %v687 = vld [vmem:[%s483 + $0xc] sm:$0xf]
        %v688 = vld [vmem:[%s483 + $0x10] sm:$0xf]
        %v689 = vld [vmem:[%s483 + $0x14] sm:$0xf]
        %v690 = vld [vmem:[%s483 + $0x18] sm:$0xf]
        %v691 = vld [vmem:[%s483 + $0x1c] sm:$0xf]
        %v692 = vld [vmem:[%s483 + $0x20] sm:$0xf]
        %v693 = vld [vmem:[%s483 + $0x24] sm:$0xf]
        %v694 = vld [vmem:[%s483 + $0x28] sm:$0xf]
        %v695 = vld [vmem:[%s483 + $0x2c] sm:$0xf]
        %v696 = vld [vmem:[%s483 + $0x30] sm:$0xf]
        %v697 = vld [vmem:[%s483 + $0x34] sm:$0xf]
        %v698 = vld [vmem:[%s483 + $0x38] sm:$0xf]
        %v699 = vld [vmem:[%s483 + $0x3c] sm:$0xf]
        %v700 = vld [vmem:[#allocation10] sm:$0xff]
        %v701 = vld [vmem:[#allocation10 + $0x8] sm:$0xff]
        %v702 = vld [vmem:[#allocation10 + $0x10] sm:$0xf]
        %v703 = vld [vmem:[#allocation10 + $0x14] sm:$0xff]
        %v704 = vld [vmem:[#allocation10 + $0x1c] sm:$0xff]
        %v705 = vld [vmem:[#allocation10 + $0x24] sm:$0xf]
        %v706 = vld [vmem:[#allocation10 + $0x28] sm:$0xff]
        %v707 = vld [vmem:[#allocation10 + $0x30] sm:$0xff]
        %v708 = vld [vmem:[#allocation10 + $0x38] sm:$0xf]
        %v709 = vld [vmem:[#allocation10 + $0x3c] sm:$0xff]
        %v710 = vld [vmem:[#allocation10 + $0x44] sm:$0xff]
        %v711 = vld [vmem:[#allocation10 + $0x4c] sm:$0xf]
        %v712 = vld [vmem:[#allocation12] sm:$0x1f]
        %v714 = vperm.slane %v712, 0
        %v715 = vperm.slane %v712, 1
        %v716 = vperm.slane %v712, 2
        %v717 = vperm.slane %v712, 3
        %v718 = vperm.slane %v712, 4
        %v740 = vunpack.c.l.b16 %v684
        %v741 = vunpack.c.l.b16 %v685
        %v742 = vunpack.c.l.b16 %v686
        %v743 = vunpack.c.l.b16 %v687
        %v744 = vunpack.c.l.b16 %v688
        %v745 = vunpack.c.l.b16 %v689
        %v746 = vunpack.c.l.b16 %v690
        %v747 = vunpack.c.l.b16 %v691
        %v748 = vunpack.c.l.b16 %v692
        %v749 = vunpack.c.l.b16 %v693
        %v750 = vunpack.c.l.b16 %v694
        %v751 = vunpack.c.l.b16 %v695
        %v752 = vunpack.c.l.b16 %v696
        %v753 = vunpack.c.l.b16 %v697
        %v754 = vunpack.c.l.b16 %v698
        %v755 = vunpack.c.l.b16 %v699
        %v756 = vpack.c.b16 %v741, %v740
        %v757 = vpack.c.b16 %v743, %v742
        %v758 = vpack.c.b16 %v745, %v744
        %v759 = vpack.c.b16 %v747, %v746
        %v760 = vpack.c.b16 %v749, %v748
        %v761 = vpack.c.b16 %v751, %v750
        %v762 = vpack.c.b16 %v753, %v752
        %v763 = vpack.c.b16 %v755, %v754
        %v776 = vunpack.c.l.b16 %v700
        %v777 = vunpack.c.h.b16 %v700
        %v778 = vunpack.c.l.b16 %v701
        %v779 = vunpack.c.h.b16 %v701
        %v780 = vunpack.c.l.b16 %v702
        %v781 = vunpack.c.l.b16 %v703
        %v782 = vunpack.c.h.b16 %v703
        %v783 = vunpack.c.l.b16 %v704
        %v784 = vunpack.c.h.b16 %v704
        %v785 = vunpack.c.l.b16 %v705
        %v786 = vunpack.c.l.b16 %v706
        %v787 = vunpack.c.h.b16 %v706
        %v788 = vunpack.c.l.b16 %v707
        %v789 = vunpack.c.h.b16 %v707
        %v790 = vunpack.c.l.b16 %v708
        %v791 = vunpack.c.l.b16 %v709
        %v792 = vunpack.c.h.b16 %v709
        %v793 = vunpack.c.l.b16 %v710
        %v794 = vunpack.c.h.b16 %v710
        %v795 = vunpack.c.l.b16 %v711
        %v796 = vpack.c.b16 %v781, %v776
        %v797 = vpack.c.b16 %v782, %v777
        %v798 = vpack.c.b16 %v783, %v778
        %v799 = vpack.c.b16 %v784, %v779
        %v800 = vpack.c.b16 %v785, %v780
        %v801 = vpack.c.b16 %v791, %v786
        %v802 = vpack.c.b16 %v792, %v787
        %v803 = vpack.c.b16 %v793, %v788
        %v804 = vpack.c.b16 %v794, %v789
        %v805 = vpack.c.b16 %v795, %v790
        %vm816 = vcmask 261120
        %v818 = vsel %vm816, %v756, 0
        %v821 = vsel %vm816, %v757, 0
        %v824 = vsel %vm816, %v758, 0
        %v827 = vsel %vm816, %v759, 0
        %v830 = vsel %vm816, %v760, 0
        %v833 = vsel %vm816, %v761, 0
        %v836 = vsel %vm816, %v762, 0
        %v839 = vsel %vm816, %v763, 0
        %841 = vmatpush.bf16.msra.mxu0 0
        %842 = vmatpush.bf16.msra.mxu0 0
        %843 = vmatpush.bf16.msra.mxu0 0
        %844 = vmatpush.bf16.msra.mxu0 0
        %845 = vmatpush.bf16.msra.mxu0 0
        %846 = vmatpush.bf16.msra.mxu0 0
        %847 = vmatpush.bf16.msra.mxu0 %v801
        %848 = vmatpush.bf16.msra.mxu0 %v796
        %849 = vmatmul.bf16.gmra.mxu0 %v818
        %v850 = vpop.f32.mrf.mxu0
        %v851 = vadd.f32 %v714, %v850
        %v852 = vpop.f32.mrf.mxu0
        %v853 = vadd.f32 %v714, %v852
        %854 = vmatmul.bf16.gmra.mxu0 %v821
        %v855 = vpop.f32.mrf.mxu0
        %v856 = vadd.f32 %v714, %v855
        %v857 = vpop.f32.mrf.mxu0
        %v858 = vadd.f32 %v714, %v857
        %859 = vmatmul.bf16.gmra.mxu0 %v824
        %v860 = vpop.f32.mrf.mxu0
        %v861 = vadd.f32 %v714, %v860
        %v862 = vpop.f32.mrf.mxu0
        %v863 = vadd.f32 %v714, %v862
        %864 = vmatmul.bf16.gmra.mxu0 %v827
        %v865 = vpop.f32.mrf.mxu0
        %v866 = vadd.f32 %v714, %v865
        %v867 = vpop.f32.mrf.mxu0
        %v868 = vadd.f32 %v714, %v867
        %869 = vmatmul.bf16.gmra.mxu0 %v830
        %v870 = vpop.f32.mrf.mxu0
        %v871 = vadd.f32 %v714, %v870
        %v872 = vpop.f32.mrf.mxu0
        %v873 = vadd.f32 %v714, %v872
        %874 = vmatmul.bf16.gmra.mxu0 %v833
        %v875 = vpop.f32.mrf.mxu0
        %v876 = vadd.f32 %v714, %v875
        %v877 = vpop.f32.mrf.mxu0
        %v878 = vadd.f32 %v714, %v877
        %879 = vmatmul.bf16.gmra.mxu0 %v836
        %v880 = vpop.f32.mrf.mxu0
        %v881 = vadd.f32 %v714, %v880
        %v882 = vpop.f32.mrf.mxu0
        %v883 = vadd.f32 %v714, %v882
        %884 = vmatmul.bf16.gmra.mxu0 %v839
        %v885 = vpop.f32.mrf.mxu0
        %v886 = vadd.f32 %v714, %v885
        %v887 = vpop.f32.mrf.mxu0
        %v888 = vadd.f32 %v714, %v887
        %889 = vdwg.mxu0
        %890 = vmatpush.bf16.msra.mxu0 0
        %891 = vmatpush.bf16.msra.mxu0 0
        %892 = vmatpush.bf16.msra.mxu0 0
        %893 = vmatpush.bf16.msra.mxu0 0
        %894 = vmatpush.bf16.msra.mxu0 0
        %895 = vmatpush.bf16.msra.mxu0 0
        %896 = vmatpush.bf16.msra.mxu0 %v802
        %897 = vmatpush.bf16.msra.mxu0 %v797
        %898 = vmatmul.bf16.gmra.mxu0 %v818
        %v899 = vpop.f32.mrf.mxu0
        %v900 = vadd.f32 %v715, %v899
        %v901 = vpop.f32.mrf.mxu0
        %v902 = vadd.f32 %v715, %v901
        %903 = vmatmul.bf16.gmra.mxu0 %v821
        %v904 = vpop.f32.mrf.mxu0
        %v905 = vadd.f32 %v715, %v904
        %v906 = vpop.f32.mrf.mxu0
        %v907 = vadd.f32 %v715, %v906
        %908 = vmatmul.bf16.gmra.mxu0 %v824
        %v909 = vpop.f32.mrf.mxu0
        %v910 = vadd.f32 %v715, %v909
        %v911 = vpop.f32.mrf.mxu0
        %v912 = vadd.f32 %v715, %v911
        %913 = vmatmul.bf16.gmra.mxu0 %v827
        %v914 = vpop.f32.mrf.mxu0
        %v915 = vadd.f32 %v715, %v914
        %v916 = vpop.f32.mrf.mxu0
        %v917 = vadd.f32 %v715, %v916
        %918 = vmatmul.bf16.gmra.mxu0 %v830
        %v919 = vpop.f32.mrf.mxu0
        %v920 = vadd.f32 %v715, %v919
        %v921 = vpop.f32.mrf.mxu0
        %v922 = vadd.f32 %v715, %v921
        %923 = vmatmul.bf16.gmra.mxu0 %v833
        %v924 = vpop.f32.mrf.mxu0
        %v925 = vadd.f32 %v715, %v924
        %v926 = vpop.f32.mrf.mxu0
        %v927 = vadd.f32 %v715, %v926
        %928 = vmatmul.bf16.gmra.mxu0 %v836
        %v929 = vpop.f32.mrf.mxu0
        %v930 = vadd.f32 %v715, %v929
        %v931 = vpop.f32.mrf.mxu0
        %v932 = vadd.f32 %v715, %v931
        %933 = vmatmul.bf16.gmra.mxu0 %v839
        %v934 = vpop.f32.mrf.mxu0
        %v935 = vadd.f32 %v715, %v934
        %v936 = vpop.f32.mrf.mxu0
        %v937 = vadd.f32 %v715, %v936
        %938 = vdwg.mxu0
        %939 = vmatpush.bf16.msra.mxu0 0
        %940 = vmatpush.bf16.msra.mxu0 0
        %941 = vmatpush.bf16.msra.mxu0 0
        %942 = vmatpush.bf16.msra.mxu0 0
        %943 = vmatpush.bf16.msra.mxu0 0
        %944 = vmatpush.bf16.msra.mxu0 0
        %945 = vmatpush.bf16.msra.mxu0 %v803
        %946 = vmatpush.bf16.msra.mxu0 %v798
        %947 = vmatmul.bf16.gmra.mxu0 %v818
        %v948 = vpop.f32.mrf.mxu0
        %v949 = vadd.f32 %v716, %v948
        %v950 = vpop.f32.mrf.mxu0
        %v951 = vadd.f32 %v716, %v950
        %952 = vmatmul.bf16.gmra.mxu0 %v821
        %v953 = vpop.f32.mrf.mxu0
        %v954 = vadd.f32 %v716, %v953
        %v955 = vpop.f32.mrf.mxu0
        %v956 = vadd.f32 %v716, %v955
        %957 = vmatmul.bf16.gmra.mxu0 %v824
        %v958 = vpop.f32.mrf.mxu0
        %v959 = vadd.f32 %v716, %v958
        %v960 = vpop.f32.mrf.mxu0
        %v961 = vadd.f32 %v716, %v960
        %962 = vmatmul.bf16.gmra.mxu0 %v827
        %v963 = vpop.f32.mrf.mxu0
        %v964 = vadd.f32 %v716, %v963
        %v965 = vpop.f32.mrf.mxu0
        %v966 = vadd.f32 %v716, %v965
        %967 = vmatmul.bf16.gmra.mxu0 %v830
        %v968 = vpop.f32.mrf.mxu0
        %v969 = vadd.f32 %v716, %v968
        %v970 = vpop.f32.mrf.mxu0
        %v971 = vadd.f32 %v716, %v970
        %972 = vmatmul.bf16.gmra.mxu0 %v833
        %v973 = vpop.f32.mrf.mxu0
        %v974 = vadd.f32 %v716, %v973
        %v975 = vpop.f32.mrf.mxu0
        %v976 = vadd.f32 %v716, %v975
        %977 = vmatmul.bf16.gmra.mxu0 %v836
        %v978 = vpop.f32.mrf.mxu0
        %v979 = vadd.f32 %v716, %v978
        %v980 = vpop.f32.mrf.mxu0
        %v981 = vadd.f32 %v716, %v980
        %982 = vmatmul.bf16.gmra.mxu0 %v839
        %v983 = vpop.f32.mrf.mxu0
        %v984 = vadd.f32 %v716, %v983
        %v985 = vpop.f32.mrf.mxu0
        %v986 = vadd.f32 %v716, %v985
        %987 = vdwg.mxu0
        %988 = vmatpush.bf16.msra.mxu0 0
        %989 = vmatpush.bf16.msra.mxu0 0
        %990 = vmatpush.bf16.msra.mxu0 0
        %991 = vmatpush.bf16.msra.mxu0 0
        %992 = vmatpush.bf16.msra.mxu0 0
        %993 = vmatpush.bf16.msra.mxu0 0
        %994 = vmatpush.bf16.msra.mxu0 %v804
        %995 = vmatpush.bf16.msra.mxu0 %v799
        %996 = vmatmul.bf16.gmra.mxu0 %v818
        %v997 = vpop.f32.mrf.mxu0
        %v998 = vadd.f32 %v717, %v997
        %v999 = vpop.f32.mrf.mxu0
        %v1000 = vadd.f32 %v717, %v999
        %1001 = vmatmul.bf16.gmra.mxu0 %v821
        %v1002 = vpop.f32.mrf.mxu0
        %v1003 = vadd.f32 %v717, %v1002
        %v1004 = vpop.f32.mrf.mxu0
        %v1005 = vadd.f32 %v717, %v1004
        %1006 = vmatmul.bf16.gmra.mxu0 %v824
        %v1007 = vpop.f32.mrf.mxu0
        %v1008 = vadd.f32 %v717, %v1007
        %v1009 = vpop.f32.mrf.mxu0
        %v1010 = vadd.f32 %v717, %v1009
        %1011 = vmatmul.bf16.gmra.mxu0 %v827
        %v1012 = vpop.f32.mrf.mxu0
        %v1013 = vadd.f32 %v717, %v1012
        %v1014 = vpop.f32.mrf.mxu0
        %v1015 = vadd.f32 %v717, %v1014
        %1016 = vmatmul.bf16.gmra.mxu0 %v830
        %v1017 = vpop.f32.mrf.mxu0
        %v1018 = vadd.f32 %v717, %v1017
        %v1019 = vpop.f32.mrf.mxu0
        %v1020 = vadd.f32 %v717, %v1019
        %1021 = vmatmul.bf16.gmra.mxu0 %v833
        %v1022 = vpop.f32.mrf.mxu0
        %v1023 = vadd.f32 %v717, %v1022
        %v1024 = vpop.f32.mrf.mxu0
        %v1025 = vadd.f32 %v717, %v1024
        %1026 = vmatmul.bf16.gmra.mxu0 %v836
        %v1027 = vpop.f32.mrf.mxu0
        %v1028 = vadd.f32 %v717, %v1027
        %v1029 = vpop.f32.mrf.mxu0
        %v1030 = vadd.f32 %v717, %v1029
        %1031 = vmatmul.bf16.gmra.mxu0 %v839
        %v1032 = vpop.f32.mrf.mxu0
        %v1033 = vadd.f32 %v717, %v1032
        %v1034 = vpop.f32.mrf.mxu0
        %v1035 = vadd.f32 %v717, %v1034
        %1036 = vdwg.mxu0
        %1037 = vmatpush.bf16.msra.mxu0 0
        %1038 = vmatpush.bf16.msra.mxu0 0
        %1039 = vmatpush.bf16.msra.mxu0 0
        %1040 = vmatpush.bf16.msra.mxu0 0
        %1041 = vmatpush.bf16.msra.mxu0 0
        %1042 = vmatpush.bf16.msra.mxu0 0
        %1043 = vmatpush.bf16.msra.mxu0 %v805
        %1044 = vmatpush.bf16.msra.mxu0 %v800
        %1045 = vmatmul.bf16.gmra.mxu0 %v818
        %v1046 = vpop.f32.mrf.mxu0
        %v1047 = vadd.f32 %v718, %v1046
        %v1048 = vpop.f32.mrf.mxu0
        %v1049 = vadd.f32 %v718, %v1048
        %1050 = vmatmul.bf16.gmra.mxu0 %v821
        %v1051 = vpop.f32.mrf.mxu0
        %v1052 = vadd.f32 %v718, %v1051
        %v1053 = vpop.f32.mrf.mxu0
        %v1054 = vadd.f32 %v718, %v1053
        %1055 = vmatmul.bf16.gmra.mxu0 %v824
        %v1056 = vpop.f32.mrf.mxu0
        %v1057 = vadd.f32 %v718, %v1056
        %v1058 = vpop.f32.mrf.mxu0
        %v1059 = vadd.f32 %v718, %v1058
        %1060 = vmatmul.bf16.gmra.mxu0 %v827
        %v1061 = vpop.f32.mrf.mxu0
        %v1062 = vadd.f32 %v718, %v1061
        %v1063 = vpop.f32.mrf.mxu0
        %v1064 = vadd.f32 %v718, %v1063
        %1065 = vmatmul.bf16.gmra.mxu0 %v830
        %v1066 = vpop.f32.mrf.mxu0
        %v1067 = vadd.f32 %v718, %v1066
        %v1068 = vpop.f32.mrf.mxu0
        %v1069 = vadd.f32 %v718, %v1068
        %1070 = vmatmul.bf16.gmra.mxu0 %v833
        %v1071 = vpop.f32.mrf.mxu0
        %v1072 = vadd.f32 %v718, %v1071
        %v1073 = vpop.f32.mrf.mxu0
        %v1074 = vadd.f32 %v718, %v1073
        %1075 = vmatmul.bf16.gmra.mxu0 %v836
        %v1076 = vpop.f32.mrf.mxu0
        %v1077 = vadd.f32 %v718, %v1076
        %v1078 = vpop.f32.mrf.mxu0
        %v1079 = vadd.f32 %v718, %v1078
        %1080 = vmatmul.bf16.gmra.mxu0 %v839
        %v1081 = vpop.f32.mrf.mxu0
        %v1082 = vadd.f32 %v718, %v1081
        %v1083 = vpop.f32.mrf.mxu0
        %v1084 = vadd.f32 %v718, %v1083
        %1085 = vdwg.mxu0
        %1086 = vst [vmem:[#allocation3] sm:$0xff] %v851
        %1087 = vst [vmem:[#allocation3 + $0x8] sm:$0xff] %v900
        %1088 = vst [vmem:[#allocation3 + $0x10] sm:$0xff] %v949
        %1089 = vst [vmem:[#allocation3 + $0x18] sm:$0xff] %v853
        %1090 = vst [vmem:[#allocation3 + $0x20] sm:$0xff] %v902
        %1091 = vst [vmem:[#allocation3 + $0x28] sm:$0xff] %v951
        %1092 = vst [vmem:[#allocation3 + $0x30] sm:$0xff] %v856
        %1093 = vst [vmem:[#allocation3 + $0x38] sm:$0xff] %v905
        %1094 = vst [vmem:[#allocation3 + $0x40] sm:$0xff] %v954
        %1095 = vst [vmem:[#allocation3 + $0x48] sm:$0xff] %v858
        %1096 = vst [vmem:[#allocation3 + $0x50] sm:$0xff] %v907
        %1097 = vst [vmem:[#allocation3 + $0x58] sm:$0xff] %v956
        %1098 = vst [vmem:[#allocation3 + $0x60] sm:$0xff] %v861
        %1099 = vst [vmem:[#allocation3 + $0x68] sm:$0xff] %v910
        %1100 = vst [vmem:[#allocation3 + $0x70] sm:$0xff] %v959
        %1101 = vst [vmem:[#allocation3 + $0x78] sm:$0xff] %v863
        %1102 = vst [vmem:[#allocation3 + $0x80] sm:$0xff] %v912
        %1103 = vst [vmem:[#allocation3 + $0x88] sm:$0xff] %v961
        %1104 = vst [vmem:[#allocation3 + $0x90] sm:$0xff] %v866
        %1105 = vst [vmem:[#allocation3 + $0x98] sm:$0xff] %v915
        %1106 = vst [vmem:[#allocation3 + $0xa0] sm:$0xff] %v964
        %1107 = vst [vmem:[#allocation3 + $0xa8] sm:$0xff] %v868
        %1108 = vst [vmem:[#allocation3 + $0xb0] sm:$0xff] %v917
        %1109 = vst [vmem:[#allocation3 + $0xb8] sm:$0xff] %v966
        %1110 = vst [vmem:[#allocation3 + $0xc0] sm:$0xff] %v871
        %1111 = vst [vmem:[#allocation3 + $0xc8] sm:$0xff] %v920
        %1112 = vst [vmem:[#allocation3 + $0xd0] sm:$0xff] %v969
        %1113 = vst [vmem:[#allocation3 + $0xd8] sm:$0xff] %v873
        %1114 = vst [vmem:[#allocation3 + $0xe0] sm:$0xff] %v922
        %1115 = vst [vmem:[#allocation3 + $0xe8] sm:$0xff] %v971
        %1116 = vst [vmem:[#allocation3 + $0xf0] sm:$0xff] %v876
        %1117 = vst [vmem:[#allocation3 + $0xf8] sm:$0xff] %v925
        %1118 = vst [vmem:[#allocation3 + $0x100] sm:$0xff] %v974
        %1119 = vst [vmem:[#allocation3 + $0x108] sm:$0xff] %v878
        %1120 = vst [vmem:[#allocation3 + $0x110] sm:$0xff] %v927
        %1121 = vst [vmem:[#allocation3 + $0x118] sm:$0xff] %v976
        %1122 = vst [vmem:[#allocation3 + $0x120] sm:$0xff] %v881
        %1123 = vst [vmem:[#allocation3 + $0x128] sm:$0xff] %v930
        %1124 = vst [vmem:[#allocation3 + $0x130] sm:$0xff] %v979
        %1125 = vst [vmem:[#allocation3 + $0x138] sm:$0xff] %v883
        %1126 = vst [vmem:[#allocation3 + $0x140] sm:$0xff] %v932
        %1127 = vst [vmem:[#allocation3 + $0x148] sm:$0xff] %v981
        %1128 = vst [vmem:[#allocation3 + $0x150] sm:$0xff] %v886
        %1129 = vst [vmem:[#allocation3 + $0x158] sm:$0xff] %v935
        %1130 = vst [vmem:[#allocation3 + $0x160] sm:$0xff] %v984
        %1131 = vst [vmem:[#allocation3 + $0x168] sm:$0xff] %v888
        %1132 = vst [vmem:[#allocation3 + $0x170] sm:$0xff] %v937
        %1133 = vst [vmem:[#allocation3 + $0x178] sm:$0xff] %v986
        %s1134 = smul.u32 %s579, 32
        %s1135 = smul.addr %s1134, 8
        %s1136 = scalar_lea.vmem [#allocation5], %s1135
        %1137 = vst [vmem:[%s1136] sm:$0xff] %v998
        %1138 = vst [vmem:[%s1136 + $0x8] sm:$0xff] %v1047
        %1139 = vst [vmem:[%s1136 + $0x10] sm:$0xff] %v1000
        %1140 = vst [vmem:[%s1136 + $0x18] sm:$0xff] %v1049
        %1141 = vst [vmem:[%s1136 + $0x20] sm:$0xff] %v1003
        %1142 = vst [vmem:[%s1136 + $0x28] sm:$0xff] %v1052
        %1143 = vst [vmem:[%s1136 + $0x30] sm:$0xff] %v1005
        %1144 = vst [vmem:[%s1136 + $0x38] sm:$0xff] %v1054
        %1145 = vst [vmem:[%s1136 + $0x40] sm:$0xff] %v1008
        %1146 = vst [vmem:[%s1136 + $0x48] sm:$0xff] %v1057
        %1147 = vst [vmem:[%s1136 + $0x50] sm:$0xff] %v1010
        %1148 = vst [vmem:[%s1136 + $0x58] sm:$0xff] %v1059
        %1149 = vst [vmem:[%s1136 + $0x60] sm:$0xff] %v1013
        %1150 = vst [vmem:[%s1136 + $0x68] sm:$0xff] %v1062
        %1151 = vst [vmem:[%s1136 + $0x70] sm:$0xff] %v1015
        %1152 = vst [vmem:[%s1136 + $0x78] sm:$0xff] %v1064
        %1153 = vst [vmem:[%s1136 + $0x80] sm:$0xff] %v1018
        %1154 = vst [vmem:[%s1136 + $0x88] sm:$0xff] %v1067
        %1155 = vst [vmem:[%s1136 + $0x90] sm:$0xff] %v1020
        %1156 = vst [vmem:[%s1136 + $0x98] sm:$0xff] %v1069
        %1157 = vst [vmem:[%s1136 + $0xa0] sm:$0xff] %v1023
        %1158 = vst [vmem:[%s1136 + $0xa8] sm:$0xff] %v1072
        %1159 = vst [vmem:[%s1136 + $0xb0] sm:$0xff] %v1025
        %1160 = vst [vmem:[%s1136 + $0xb8] sm:$0xff] %v1074
        %1161 = vst [vmem:[%s1136 + $0xc0] sm:$0xff] %v1028
        %1162 = vst [vmem:[%s1136 + $0xc8] sm:$0xff] %v1077
        %1163 = vst [vmem:[%s1136 + $0xd0] sm:$0xff] %v1030
        %1164 = vst [vmem:[%s1136 + $0xd8] sm:$0xff] %v1079
        %1165 = vst [vmem:[%s1136 + $0xe0] sm:$0xff] %v1033
        %1166 = vst [vmem:[%s1136 + $0xe8] sm:$0xff] %v1082
        %1167 = vst [vmem:[%s1136 + $0xf0] sm:$0xff] %v1035
        %1168 = vst [vmem:[%s1136 + $0xf8] sm:$0xff] %v1084
        %v1169 = vld [vmem:[#allocation13] sm:$0xff]
        %v1170 = vld [vmem:[#allocation13 + $0x8] sm:$0xff]
        %v1171 = vld [vmem:[#allocation13 + $0x10] sm:$0xff]
        %v1172 = vld [vmem:[#allocation13 + $0x18] sm:$0xff]
        %v1173 = vld [vmem:[#allocation13 + $0x20] sm:$0xff]
        %v1174 = vld [vmem:[#allocation13 + $0x28] sm:$0xff]
        %v1175 = vld [vmem:[#allocation13 + $0x30] sm:$0xff]
        %v1176 = vld [vmem:[#allocation13 + $0x38] sm:$0xff]
        %v1177 = vld [vmem:[#allocation13 + $0x40] sm:$0xff]
        %v1178 = vld [vmem:[#allocation13 + $0x48] sm:$0xff]
        %v1179 = vld [vmem:[#allocation13 + $0x50] sm:$0xff]
        %v1180 = vld [vmem:[#allocation13 + $0x58] sm:$0xff]
        %v1181 = vld [vmem:[#allocation13 + $0x60] sm:$0xff]
        %v1182 = vld [vmem:[#allocation13 + $0x68] sm:$0xff]
        %v1183 = vld [vmem:[#allocation13 + $0x70] sm:$0xff]
        %v1184 = vld [vmem:[#allocation13 + $0x78] sm:$0xff]
        %v1185 = vld [vmem:[#allocation13 + $0x80] sm:$0xff]
        %v1186 = vld [vmem:[#allocation13 + $0x88] sm:$0xff]
        %v1187 = vld [vmem:[#allocation13 + $0x90] sm:$0xff]
        %v1188 = vld [vmem:[#allocation13 + $0x98] sm:$0xff]
        %v1189 = vld [vmem:[#allocation13 + $0xa0] sm:$0xff]
        %v1190 = vld [vmem:[#allocation13 + $0xa8] sm:$0xff]
        %v1191 = vld [vmem:[#allocation13 + $0xb0] sm:$0xff]
        %v1192 = vld [vmem:[#allocation13 + $0xb8] sm:$0xff]
        %v1193 = vld [vmem:[#allocation13 + $0xc0] sm:$0xff]
        %v1194 = vld [vmem:[#allocation13 + $0xc8] sm:$0xff]
        %v1195 = vld [vmem:[#allocation13 + $0xd0] sm:$0xff]
        %v1196 = vld [vmem:[#allocation13 + $0xd8] sm:$0xff]
        %v1197 = vld [vmem:[#allocation13 + $0xe0] sm:$0xff]
        %v1198 = vld [vmem:[#allocation13 + $0xe8] sm:$0xff]
        %v1199 = vld [vmem:[#allocation13 + $0xf0] sm:$0xff]
        %v1200 = vld [vmem:[#allocation13 + $0xf8] sm:$0xff]
        %v1201 = vld [vmem:[#allocation13 + $0x100] sm:$0xff]
        %v1202 = vld [vmem:[#allocation13 + $0x108] sm:$0xff]
        %v1203 = vld [vmem:[#allocation13 + $0x110] sm:$0xff]
        %v1204 = vld [vmem:[#allocation13 + $0x118] sm:$0xff]
        %v1205 = vld [vmem:[#allocation13 + $0x120] sm:$0xff]
        %v1206 = vld [vmem:[#allocation13 + $0x128] sm:$0xff]
        %v1207 = vld [vmem:[#allocation13 + $0x130] sm:$0xff]
        %v1208 = vld [vmem:[#allocation13 + $0x138] sm:$0xff]
        %v1209 = vld [vmem:[#allocation13 + $0x140] sm:$0xff]
        %v1210 = vld [vmem:[#allocation13 + $0x148] sm:$0xff]
        %v1211 = vld [vmem:[#allocation13 + $0x150] sm:$0xff]
        %v1212 = vld [vmem:[#allocation13 + $0x158] sm:$0xff]
        %v1213 = vld [vmem:[#allocation13 + $0x160] sm:$0xff]
        %v1214 = vld [vmem:[#allocation13 + $0x168] sm:$0xff]
        %v1215 = vld [vmem:[#allocation13 + $0x170] sm:$0xff]
        %v1216 = vld [vmem:[#allocation13 + $0x178] sm:$0xff]
        %v1217 = vld [vmem:[%s6] sm:$0x1]
        %v1219 = vperm.slane %v1217, 0
        %v1221 = vld [vmem:[#allocation2] sm:$0xff]
        %v1222 = vld [vmem:[#allocation3] sm:$0xff]
        %v1223 = vld [vmem:[#allocation3 + $0x8] sm:$0xff]
        %v1224 = vld [vmem:[#allocation3 + $0x10] sm:$0xff]
        %1225 = vmatpush.msra.mxu0 %v1214
        %1226 = vmatpush.msra.mxu0 %v1211
        %1227 = vmatpush.msra.mxu0 %v1208
        %1228 = vmatpush.msra.mxu0 %v1205
        %1229 = vmatpush.msra.mxu0 %v1202
        %1230 = vmatpush.msra.mxu0 %v1199
        %1231 = vmatpush.msra.mxu0 %v1196
        %1232 = vmatpush.msra.mxu0 %v1193
        %1233 = vmatpush.msra.mxu0 %v1190
        %1234 = vmatpush.msra.mxu0 %v1187
        %1235 = vmatpush.msra.mxu0 %v1184
        %1236 = vmatpush.msra.mxu0 %v1181
        %1237 = vmatpush.msra.mxu0 %v1178
        %1238 = vmatpush.msra.mxu0 %v1175
        %1239 = vmatpush.msra.mxu0 %v1172
        %1240 = vmatpush.msra.mxu0 %v1169
        %1241 = vmatmul.f32.gmra.mxu0 %v1221
        %v1242 = vpop.f32.mrf.mxu0
        %v1243 = vadd.f32 0.0, %v1242
        %1244 = vdwg.mxu0
        %1245 = vmatpush.msra.mxu0 %v1215
        %1246 = vmatpush.msra.mxu0 %v1212
        %1247 = vmatpush.msra.mxu0 %v1209
        %1248 = vmatpush.msra.mxu0 %v1206
        %1249 = vmatpush.msra.mxu0 %v1203
        %1250 = vmatpush.msra.mxu0 %v1200
        %1251 = vmatpush.msra.mxu0 %v1197
        %1252 = vmatpush.msra.mxu0 %v1194
        %1253 = vmatpush.msra.mxu0 %v1191
        %1254 = vmatpush.msra.mxu0 %v1188
        %1255 = vmatpush.msra.mxu0 %v1185
        %1256 = vmatpush.msra.mxu0 %v1182
        %1257 = vmatpush.msra.mxu0 %v1179
        %1258 = vmatpush.msra.mxu0 %v1176
        %1259 = vmatpush.msra.mxu0 %v1173
        %1260 = vmatpush.msra.mxu0 %v1170
        %1261 = vmatmul.f32.gmra.mxu0 %v1221
        %v1262 = vpop.f32.mrf.mxu0
        %v1263 = vadd.f32 0.0, %v1262
        %1264 = vdwg.mxu0
        %1265 = vmatpush.msra.mxu0 %v1216
        %1266 = vmatpush.msra.mxu0 %v1213
        %1267 = vmatpush.msra.mxu0 %v1210
        %1268 = vmatpush.msra.mxu0 %v1207
        %1269 = vmatpush.msra.mxu0 %v1204
        %1270 = vmatpush.msra.mxu0 %v1201
        %1271 = vmatpush.msra.mxu0 %v1198
        %1272 = vmatpush.msra.mxu0 %v1195
        %1273 = vmatpush.msra.mxu0 %v1192
        %1274 = vmatpush.msra.mxu0 %v1189
        %1275 = vmatpush.msra.mxu0 %v1186
        %1276 = vmatpush.msra.mxu0 %v1183
        %1277 = vmatpush.msra.mxu0 %v1180
        %1278 = vmatpush.msra.mxu0 %v1177
        %1279 = vmatpush.msra.mxu0 %v1174
        %1280 = vmatpush.msra.mxu0 %v1171
        %1281 = vmatmul.f32.gmra.mxu0 %v1221
        %v1282 = vpop.f32.mrf.mxu0
        %v1283 = vadd.f32 0.0, %v1282
        %1284 = vdwg.mxu0
        %v1285 = vadd.f32 %v1222, %v1243
        %v1286 = vxor.u32 %v1285, 2147483648
        %v1287 = vmul.f32 %v1286, 1.442695
        %v1288 = vpow.pop %v1287
        %v1289 = vadd.f32 %v1288, 1.0
        %v1290 = vrcp.pop %v1289
        %v1291 = vmul.f32 %v1289, %v1290
        %v1292 = vsub.f32 1.0, %v1291
        %v1293 = vmul.f32 %v1290, %v1292
        %v1294 = vadd.f32 %v1290, %v1293
        %vm1295 = vweird.f32 %v1289
        %vm1296 = vweird.f32 %v1290
        %vm1297 = vmor %vm1295, %vm1296
        %v1298 = vsel %vm1297, %v1290, %v1294
        %v1299 = vand.u32 2147483647, %v1289
        %vm1300 = vcmp.eq.f32.partialorder %v1299, 8.507059e+37
        %v1301 = vand.u32 %v1289, 2147483648
        %v1302 = vor.u32 1.1754944e-38, %v1301
        %v1303 = vsel %vm1300, %v1302, %v1298
        %v1304 = vmul.f32 1.0, %v1303
        %v1305 = vadd.f32 %v1223, %v1263
        %v1306 = vxor.u32 %v1305, 2147483648
        %v1307 = vmul.f32 %v1306, 1.442695
        %v1308 = vpow.pop %v1307
        %v1309 = vadd.f32 %v1308, 1.0
        %v1310 = vrcp.pop %v1309
        %v1311 = vmul.f32 %v1309, %v1310
        %v1312 = vsub.f32 1.0, %v1311
        %v1313 = vmul.f32 %v1310, %v1312
        %v1314 = vadd.f32 %v1310, %v1313
        %vm1315 = vweird.f32 %v1309
        %vm1316 = vweird.f32 %v1310
        %vm1317 = vmor %vm1315, %vm1316
        %v1318 = vsel %vm1317, %v1310, %v1314
        %v1319 = vand.u32 2147483647, %v1309
        %vm1320 = vcmp.eq.f32.partialorder %v1319, 8.507059e+37
        %v1321 = vand.u32 %v1309, 2147483648
        %v1322 = vor.u32 1.1754944e-38, %v1321
        %v1323 = vsel %vm1320, %v1322, %v1318
        %v1324 = vmul.f32 1.0, %v1323
        %v1325 = vadd.f32 %v1283, %v1219
        %v1326 = vmul.f32 %v1304, %v1325
        %v1327 = vadd.f32 %v1224, %v1326
        %v1328 = vtanh.pop %v1327
        %v1329 = vsub.f32 1.0, %v1324
        %v1330 = vmul.f32 %v1329, %v1328
        %v1331 = vmul.f32 %v1324, %v1221
        %v1332 = vadd.f32 %v1330, %v1331
        %s1333 = scalar_lea.vmem [#allocation3], 24
        %v1334 = vld [vmem:[%s1333] sm:$0xff]
        %v1335 = vld [vmem:[%s1333 + $0x8] sm:$0xff]
        %v1336 = vld [vmem:[%s1333 + $0x10] sm:$0xff]
        %1337 = vmatpush.msra.mxu0 %v1214
        %1338 = vmatpush.msra.mxu0 %v1211
        %1339 = vmatpush.msra.mxu0 %v1208
        %1340 = vmatpush.msra.mxu0 %v1205
        %1341 = vmatpush.msra.mxu0 %v1202
        %1342 = vmatpush.msra.mxu0 %v1199
        %1343 = vmatpush.msra.mxu0 %v1196
        %1344 = vmatpush.msra.mxu0 %v1193
        %1345 = vmatpush.msra.mxu0 %v1190
        %1346 = vmatpush.msra.mxu0 %v1187
        %1347 = vmatpush.msra.mxu0 %v1184
        %1348 = vmatpush.msra.mxu0 %v1181
        %1349 = vmatpush.msra.mxu0 %v1178
        %1350 = vmatpush.msra.mxu0 %v1175
        %1351 = vmatpush.msra.mxu0 %v1172
        %1352 = vmatpush.msra.mxu0 %v1169
        %1353 = vmatmul.f32.gmra.mxu0 %v1332
        %v1354 = vpop.f32.mrf.mxu0
        %v1355 = vadd.f32 0.0, %v1354
        %1356 = vdwg.mxu0
        %1357 = vmatpush.msra.mxu0 %v1215
        %1358 = vmatpush.msra.mxu0 %v1212
        %1359 = vmatpush.msra.mxu0 %v1209
        %1360 = vmatpush.msra.mxu0 %v1206
        %1361 = vmatpush.msra.mxu0 %v1203
        %1362 = vmatpush.msra.mxu0 %v1200
        %1363 = vmatpush.msra.mxu0 %v1197
        %1364 = vmatpush.msra.mxu0 %v1194
        %1365 = vmatpush.msra.mxu0 %v1191
        %1366 = vmatpush.msra.mxu0 %v1188
        %1367 = vmatpush.msra.mxu0 %v1185
        %1368 = vmatpush.msra.mxu0 %v1182
        %1369 = vmatpush.msra.mxu0 %v1179
        %1370 = vmatpush.msra.mxu0 %v1176
        %1371 = vmatpush.msra.mxu0 %v1173
        %1372 = vmatpush.msra.mxu0 %v1170
        %1373 = vmatmul.f32.gmra.mxu0 %v1332
        %v1374 = vpop.f32.mrf.mxu0
        %v1375 = vadd.f32 0.0, %v1374
        %1376 = vdwg.mxu0
        %1377 = vmatpush.msra.mxu0 %v1216
        %1378 = vmatpush.msra.mxu0 %v1213
        %1379 = vmatpush.msra.mxu0 %v1210
        %1380 = vmatpush.msra.mxu0 %v1207
        %1381 = vmatpush.msra.mxu0 %v1204
        %1382 = vmatpush.msra.mxu0 %v1201
        %1383 = vmatpush.msra.mxu0 %v1198
        %1384 = vmatpush.msra.mxu0 %v1195
        %1385 = vmatpush.msra.mxu0 %v1192
        %1386 = vmatpush.msra.mxu0 %v1189
        %1387 = vmatpush.msra.mxu0 %v1186
        %1388 = vmatpush.msra.mxu0 %v1183
        %1389 = vmatpush.msra.mxu0 %v1180
        %1390 = vmatpush.msra.mxu0 %v1177
        %1391 = vmatpush.msra.mxu0 %v1174
        %1392 = vmatpush.msra.mxu0 %v1171
        %1393 = vmatmul.f32.gmra.mxu0 %v1332
        %v1394 = vpop.f32.mrf.mxu0
        %v1395 = vadd.f32 0.0, %v1394
        %1396 = vdwg.mxu0
        %v1397 = vadd.f32 %v1334, %v1355
        %v1398 = vxor.u32 %v1397, 2147483648
        %v1399 = vmul.f32 %v1398, 1.442695
        %v1400 = vpow.pop %v1399
        %v1401 = vadd.f32 %v1400, 1.0
        %v1402 = vrcp.pop %v1401
        %v1403 = vmul.f32 %v1401, %v1402
        %v1404 = vsub.f32 1.0, %v1403
        %v1405 = vmul.f32 %v1402, %v1404
        %v1406 = vadd.f32 %v1402, %v1405
        %vm1407 = vweird.f32 %v1401
        %vm1408 = vweird.f32 %v1402
        %vm1409 = vmor %vm1407, %vm1408
        %v1410 = vsel %vm1409, %v1402, %v1406
        %v1411 = vand.u32 2147483647, %v1401
        %vm1412 = vcmp.eq.f32.partialorder %v1411, 8.507059e+37
        %v1413 = vand.u32 %v1401, 2147483648
        %v1414 = vor.u32 1.1754944e-38, %v1413
        %v1415 = vsel %vm1412, %v1414, %v1410
        %v1416 = vmul.f32 1.0, %v1415
        %v1417 = vadd.f32 %v1335, %v1375
        %v1418 = vxor.u32 %v1417, 2147483648
        %v1419 = vmul.f32 %v1418, 1.442695
        %v1420 = vpow.pop %v1419
        %v1421 = vadd.f32 %v1420, 1.0
        %v1422 = vrcp.pop %v1421
        %v1423 = vmul.f32 %v1421, %v1422
        %v1424 = vsub.f32 1.0, %v1423
        %v1425 = vmul.f32 %v1422, %v1424
        %v1426 = vadd.f32 %v1422, %v1425
        %vm1427 = vweird.f32 %v1421
        %vm1428 = vweird.f32 %v1422
        %vm1429 = vmor %vm1427, %vm1428
        %v1430 = vsel %vm1429, %v1422, %v1426
        %v1431 = vand.u32 2147483647, %v1421
        %vm1432 = vcmp.eq.f32.partialorder %v1431, 8.507059e+37
        %v1433 = vand.u32 %v1421, 2147483648
        %v1434 = vor.u32 1.1754944e-38, %v1433
        %v1435 = vsel %vm1432, %v1434, %v1430
        %v1436 = vmul.f32 1.0, %v1435
        %v1437 = vadd.f32 %v1395, %v1219
        %v1438 = vmul.f32 %v1416, %v1437
        %v1439 = vadd.f32 %v1336, %v1438
        %v1440 = vtanh.pop %v1439
        %v1441 = vsub.f32 1.0, %v1436
        %v1442 = vmul.f32 %v1441, %v1440
        %v1443 = vmul.f32 %v1436, %v1332
        %v1444 = vadd.f32 %v1442, %v1443
        %s1445 = scalar_lea.vmem [#allocation3], 48
        %v1446 = vld [vmem:[%s1445] sm:$0xff]
        %v1447 = vld [vmem:[%s1445 + $0x8] sm:$0xff]
        %v1448 = vld [vmem:[%s1445 + $0x10] sm:$0xff]
        %1449 = vmatpush.msra.mxu0 %v1214
        %1450 = vmatpush.msra.mxu0 %v1211
        %1451 = vmatpush.msra.mxu0 %v1208
        %1452 = vmatpush.msra.mxu0 %v1205
        %1453 = vmatpush.msra.mxu0 %v1202
        %1454 = vmatpush.msra.mxu0 %v1199
        %1455 = vmatpush.msra.mxu0 %v1196
        %1456 = vmatpush.msra.mxu0 %v1193
        %1457 = vmatpush.msra.mxu0 %v1190
        %1458 = vmatpush.msra.mxu0 %v1187
        %1459 = vmatpush.msra.mxu0 %v1184
        %1460 = vmatpush.msra.mxu0 %v1181
        %1461 = vmatpush.msra.mxu0 %v1178
        %1462 = vmatpush.msra.mxu0 %v1175
        %1463 = vmatpush.msra.mxu0 %v1172
        %1464 = vmatpush.msra.mxu0 %v1169
        %1465 = vmatmul.f32.gmra.mxu0 %v1444
        %v1466 = vpop.f32.mrf.mxu0
        %v1467 = vadd.f32 0.0, %v1466
        %1468 = vdwg.mxu0
        %1469 = vmatpush.msra.mxu0 %v1215
        %1470 = vmatpush.msra.mxu0 %v1212
        %1471 = vmatpush.msra.mxu0 %v1209
        %1472 = vmatpush.msra.mxu0 %v1206
        %1473 = vmatpush.msra.mxu0 %v1203
        %1474 = vmatpush.msra.mxu0 %v1200
        %1475 = vmatpush.msra.mxu0 %v1197
        %1476 = vmatpush.msra.mxu0 %v1194
        %1477 = vmatpush.msra.mxu0 %v1191
        %1478 = vmatpush.msra.mxu0 %v1188
        %1479 = vmatpush.msra.mxu0 %v1185
        %1480 = vmatpush.msra.mxu0 %v1182
        %1481 = vmatpush.msra.mxu0 %v1179
        %1482 = vmatpush.msra.mxu0 %v1176
        %1483 = vmatpush.msra.mxu0 %v1173
        %1484 = vmatpush.msra.mxu0 %v1170
        %1485 = vmatmul.f32.gmra.mxu0 %v1444
        %v1486 = vpop.f32.mrf.mxu0
        %v1487 = vadd.f32 0.0, %v1486
        %1488 = vdwg.mxu0
        %1489 = vmatpush.msra.mxu0 %v1216
        %1490 = vmatpush.msra.mxu0 %v1213
        %1491 = vmatpush.msra.mxu0 %v1210
        %1492 = vmatpush.msra.mxu0 %v1207
        %1493 = vmatpush.msra.mxu0 %v1204
        %1494 = vmatpush.msra.mxu0 %v1201
        %1495 = vmatpush.msra.mxu0 %v1198
        %1496 = vmatpush.msra.mxu0 %v1195
        %1497 = vmatpush.msra.mxu0 %v1192
        %1498 = vmatpush.msra.mxu0 %v1189
        %1499 = vmatpush.msra.mxu0 %v1186
        %1500 = vmatpush.msra.mxu0 %v1183
        %1501 = vmatpush.msra.mxu0 %v1180
        %1502 = vmatpush.msra.mxu0 %v1177
        %1503 = vmatpush.msra.mxu0 %v1174
        %1504 = vmatpush.msra.mxu0 %v1171
        %1505 = vmatmul.f32.gmra.mxu0 %v1444
        %v1506 = vpop.f32.mrf.mxu0
        %v1507 = vadd.f32 0.0, %v1506
        %1508 = vdwg.mxu0
        %v1509 = vadd.f32 %v1446, %v1467
        %v1510 = vxor.u32 %v1509, 2147483648
        %v1511 = vmul.f32 %v1510, 1.442695
        %v1512 = vpow.pop %v1511
        %v1513 = vadd.f32 %v1512, 1.0
        %v1514 = vrcp.pop %v1513
        %v1515 = vmul.f32 %v1513, %v1514
        %v1516 = vsub.f32 1.0, %v1515
        %v1517 = vmul.f32 %v1514, %v1516
        %v1518 = vadd.f32 %v1514, %v1517
        %vm1519 = vweird.f32 %v1513
        %vm1520 = vweird.f32 %v1514
        %vm1521 = vmor %vm1519, %vm1520
        %v1522 = vsel %vm1521, %v1514, %v1518
        %v1523 = vand.u32 2147483647, %v1513
        %vm1524 = vcmp.eq.f32.partialorder %v1523, 8.507059e+37
        %v1525 = vand.u32 %v1513, 2147483648
        %v1526 = vor.u32 1.1754944e-38, %v1525
        %v1527 = vsel %vm1524, %v1526, %v1522
        %v1528 = vmul.f32 1.0, %v1527
        %v1529 = vadd.f32 %v1447, %v1487
        %v1530 = vxor.u32 %v1529, 2147483648
        %v1531 = vmul.f32 %v1530, 1.442695
        %v1532 = vpow.pop %v1531
        %v1533 = vadd.f32 %v1532, 1.0
        %v1534 = vrcp.pop %v1533
        %v1535 = vmul.f32 %v1533, %v1534
        %v1536 = vsub.f32 1.0, %v1535
        %v1537 = vmul.f32 %v1534, %v1536
        %v1538 = vadd.f32 %v1534, %v1537
        %vm1539 = vweird.f32 %v1533
        %vm1540 = vweird.f32 %v1534
        %vm1541 = vmor %vm1539, %vm1540
        %v1542 = vsel %vm1541, %v1534, %v1538
        %v1543 = vand.u32 2147483647, %v1533
        %vm1544 = vcmp.eq.f32.partialorder %v1543, 8.507059e+37
        %v1545 = vand.u32 %v1533, 2147483648
        %v1546 = vor.u32 1.1754944e-38, %v1545
        %v1547 = vsel %vm1544, %v1546, %v1542
        %v1548 = vmul.f32 1.0, %v1547
        %v1549 = vadd.f32 %v1507, %v1219
        %v1550 = vmul.f32 %v1528, %v1549
        %v1551 = vadd.f32 %v1448, %v1550
        %v1552 = vtanh.pop %v1551
        %v1553 = vsub.f32 1.0, %v1548
        %v1554 = vmul.f32 %v1553, %v1552
        %v1555 = vmul.f32 %v1548, %v1444
        %v1556 = vadd.f32 %v1554, %v1555
        %s1557 = scalar_lea.vmem [#allocation3], 72
        %v1558 = vld [vmem:[%s1557] sm:$0xff]
        %v1559 = vld [vmem:[%s1557 + $0x8] sm:$0xff]
        %v1560 = vld [vmem:[%s1557 + $0x10] sm:$0xff]
        %1561 = vmatpush.msra.mxu0 %v1214
        %1562 = vmatpush.msra.mxu0 %v1211
        %1563 = vmatpush.msra.mxu0 %v1208
        %1564 = vmatpush.msra.mxu0 %v1205
        %1565 = vmatpush.msra.mxu0 %v1202
        %1566 = vmatpush.msra.mxu0 %v1199
        %1567 = vmatpush.msra.mxu0 %v1196
        %1568 = vmatpush.msra.mxu0 %v1193
        %1569 = vmatpush.msra.mxu0 %v1190
        %1570 = vmatpush.msra.mxu0 %v1187
        %1571 = vmatpush.msra.mxu0 %v1184
        %1572 = vmatpush.msra.mxu0 %v1181
        %1573 = vmatpush.msra.mxu0 %v1178
        %1574 = vmatpush.msra.mxu0 %v1175
        %1575 = vmatpush.msra.mxu0 %v1172
        %1576 = vmatpush.msra.mxu0 %v1169
        %1577 = vmatmul.f32.gmra.mxu0 %v1556
        %v1578 = vpop.f32.mrf.mxu0
        %v1579 = vadd.f32 0.0, %v1578
        %1580 = vdwg.mxu0
        %1581 = vmatpush.msra.mxu0 %v1215
        %1582 = vmatpush.msra.mxu0 %v1212
        %1583 = vmatpush.msra.mxu0 %v1209
        %1584 = vmatpush.msra.mxu0 %v1206
        %1585 = vmatpush.msra.mxu0 %v1203
        %1586 = vmatpush.msra.mxu0 %v1200
        %1587 = vmatpush.msra.mxu0 %v1197
        %1588 = vmatpush.msra.mxu0 %v1194
        %1589 = vmatpush.msra.mxu0 %v1191
        %1590 = vmatpush.msra.mxu0 %v1188
        %1591 = vmatpush.msra.mxu0 %v1185
        %1592 = vmatpush.msra.mxu0 %v1182
        %1593 = vmatpush.msra.mxu0 %v1179
        %1594 = vmatpush.msra.mxu0 %v1176
        %1595 = vmatpush.msra.mxu0 %v1173
        %1596 = vmatpush.msra.mxu0 %v1170
        %1597 = vmatmul.f32.gmra.mxu0 %v1556
        %v1598 = vpop.f32.mrf.mxu0
        %v1599 = vadd.f32 0.0, %v1598
        %1600 = vdwg.mxu0
        %1601 = vmatpush.msra.mxu0 %v1216
        %1602 = vmatpush.msra.mxu0 %v1213
        %1603 = vmatpush.msra.mxu0 %v1210
        %1604 = vmatpush.msra.mxu0 %v1207
        %1605 = vmatpush.msra.mxu0 %v1204
        %1606 = vmatpush.msra.mxu0 %v1201
        %1607 = vmatpush.msra.mxu0 %v1198
        %1608 = vmatpush.msra.mxu0 %v1195
        %1609 = vmatpush.msra.mxu0 %v1192
        %1610 = vmatpush.msra.mxu0 %v1189
        %1611 = vmatpush.msra.mxu0 %v1186
        %1612 = vmatpush.msra.mxu0 %v1183
        %1613 = vmatpush.msra.mxu0 %v1180
        %1614 = vmatpush.msra.mxu0 %v1177
        %1615 = vmatpush.msra.mxu0 %v1174
        %1616 = vmatpush.msra.mxu0 %v1171
        %1617 = vmatmul.f32.gmra.mxu0 %v1556
        %v1618 = vpop.f32.mrf.mxu0
        %v1619 = vadd.f32 0.0, %v1618
        %1620 = vdwg.mxu0
        %v1621 = vadd.f32 %v1558, %v1579
        %v1622 = vxor.u32 %v1621, 2147483648
        %v1623 = vmul.f32 %v1622, 1.442695
        %v1624 = vpow.pop %v1623
        %v1625 = vadd.f32 %v1624, 1.0
        %v1626 = vrcp.pop %v1625
        %v1627 = vmul.f32 %v1625, %v1626
        %v1628 = vsub.f32 1.0, %v1627
        %v1629 = vmul.f32 %v1626, %v1628
        %v1630 = vadd.f32 %v1626, %v1629
        %vm1631 = vweird.f32 %v1625
        %vm1632 = vweird.f32 %v1626
        %vm1633 = vmor %vm1631, %vm1632
        %v1634 = vsel %vm1633, %v1626, %v1630
        %v1635 = vand.u32 2147483647, %v1625
        %vm1636 = vcmp.eq.f32.partialorder %v1635, 8.507059e+37
        %v1637 = vand.u32 %v1625, 2147483648
        %v1638 = vor.u32 1.1754944e-38, %v1637
        %v1639 = vsel %vm1636, %v1638, %v1634
        %v1640 = vmul.f32 1.0, %v1639
        %v1641 = vadd.f32 %v1559, %v1599
        %v1642 = vxor.u32 %v1641, 2147483648
        %v1643 = vmul.f32 %v1642, 1.442695
        %v1644 = vpow.pop %v1643
        %v1645 = vadd.f32 %v1644, 1.0
        %v1646 = vrcp.pop %v1645
        %v1647 = vmul.f32 %v1645, %v1646
        %v1648 = vsub.f32 1.0, %v1647
        %v1649 = vmul.f32 %v1646, %v1648
        %v1650 = vadd.f32 %v1646, %v1649
        %vm1651 = vweird.f32 %v1645
        %vm1652 = vweird.f32 %v1646
        %vm1653 = vmor %vm1651, %vm1652
        %v1654 = vsel %vm1653, %v1646, %v1650
        %v1655 = vand.u32 2147483647, %v1645
        %vm1656 = vcmp.eq.f32.partialorder %v1655, 8.507059e+37
        %v1657 = vand.u32 %v1645, 2147483648
        %v1658 = vor.u32 1.1754944e-38, %v1657
        %v1659 = vsel %vm1656, %v1658, %v1654
        %v1660 = vmul.f32 1.0, %v1659
        %v1661 = vadd.f32 %v1619, %v1219
        %v1662 = vmul.f32 %v1640, %v1661
        %v1663 = vadd.f32 %v1560, %v1662
        %v1664 = vtanh.pop %v1663
        %v1665 = vsub.f32 1.0, %v1660
        %v1666 = vmul.f32 %v1665, %v1664
        %v1667 = vmul.f32 %v1660, %v1556
        %v1668 = vadd.f32 %v1666, %v1667
        %s1669 = scalar_lea.vmem [#allocation3], 96
        %v1670 = vld [vmem:[%s1669] sm:$0xff]
        %v1671 = vld [vmem:[%s1669 + $0x8] sm:$0xff]
        %v1672 = vld [vmem:[%s1669 + $0x10] sm:$0xff]
        %1673 = vmatpush.msra.mxu0 %v1214
        %1674 = vmatpush.msra.mxu0 %v1211
        %1675 = vmatpush.msra.mxu0 %v1208
        %1676 = vmatpush.msra.mxu0 %v1205
        %1677 = vmatpush.msra.mxu0 %v1202
        %1678 = vmatpush.msra.mxu0 %v1199
        %1679 = vmatpush.msra.mxu0 %v1196
        %1680 = vmatpush.msra.mxu0 %v1193
        %1681 = vmatpush.msra.mxu0 %v1190
        %1682 = vmatpush.msra.mxu0 %v1187
        %1683 = vmatpush.msra.mxu0 %v1184
        %1684 = vmatpush.msra.mxu0 %v1181
        %1685 = vmatpush.msra.mxu0 %v1178
        %1686 = vmatpush.msra.mxu0 %v1175
        %1687 = vmatpush.msra.mxu0 %v1172
        %1688 = vmatpush.msra.mxu0 %v1169
        %1689 = vmatmul.f32.gmra.mxu0 %v1668
        %v1690 = vpop.f32.mrf.mxu0
        %v1691 = vadd.f32 0.0, %v1690
        %1692 = vdwg.mxu0
        %1693 = vmatpush.msra.mxu0 %v1215
        %1694 = vmatpush.msra.mxu0 %v1212
        %1695 = vmatpush.msra.mxu0 %v1209
        %1696 = vmatpush.msra.mxu0 %v1206
        %1697 = vmatpush.msra.mxu0 %v1203
        %1698 = vmatpush.msra.mxu0 %v1200
        %1699 = vmatpush.msra.mxu0 %v1197
        %1700 = vmatpush.msra.mxu0 %v1194
        %1701 = vmatpush.msra.mxu0 %v1191
        %1702 = vmatpush.msra.mxu0 %v1188
        %1703 = vmatpush.msra.mxu0 %v1185
        %1704 = vmatpush.msra.mxu0 %v1182
        %1705 = vmatpush.msra.mxu0 %v1179
        %1706 = vmatpush.msra.mxu0 %v1176
        %1707 = vmatpush.msra.mxu0 %v1173
        %1708 = vmatpush.msra.mxu0 %v1170
        %1709 = vmatmul.f32.gmra.mxu0 %v1668
        %v1710 = vpop.f32.mrf.mxu0
        %v1711 = vadd.f32 0.0, %v1710
        %1712 = vdwg.mxu0
        %1713 = vmatpush.msra.mxu0 %v1216
        %1714 = vmatpush.msra.mxu0 %v1213
        %1715 = vmatpush.msra.mxu0 %v1210
        %1716 = vmatpush.msra.mxu0 %v1207
        %1717 = vmatpush.msra.mxu0 %v1204
        %1718 = vmatpush.msra.mxu0 %v1201
        %1719 = vmatpush.msra.mxu0 %v1198
        %1720 = vmatpush.msra.mxu0 %v1195
        %1721 = vmatpush.msra.mxu0 %v1192
        %1722 = vmatpush.msra.mxu0 %v1189
        %1723 = vmatpush.msra.mxu0 %v1186
        %1724 = vmatpush.msra.mxu0 %v1183
        %1725 = vmatpush.msra.mxu0 %v1180
        %1726 = vmatpush.msra.mxu0 %v1177
        %1727 = vmatpush.msra.mxu0 %v1174
        %1728 = vmatpush.msra.mxu0 %v1171
        %1729 = vmatmul.f32.gmra.mxu0 %v1668
        %v1730 = vpop.f32.mrf.mxu0
        %v1731 = vadd.f32 0.0, %v1730
        %1732 = vdwg.mxu0
        %v1733 = vadd.f32 %v1670, %v1691
        %v1734 = vxor.u32 %v1733, 2147483648
        %v1735 = vmul.f32 %v1734, 1.442695
        %v1736 = vpow.pop %v1735
        %v1737 = vadd.f32 %v1736, 1.0
        %v1738 = vrcp.pop %v1737
        %v1739 = vmul.f32 %v1737, %v1738
        %v1740 = vsub.f32 1.0, %v1739
        %v1741 = vmul.f32 %v1738, %v1740
        %v1742 = vadd.f32 %v1738, %v1741
        %vm1743 = vweird.f32 %v1737
        %vm1744 = vweird.f32 %v1738
        %vm1745 = vmor %vm1743, %vm1744
        %v1746 = vsel %vm1745, %v1738, %v1742
        %v1747 = vand.u32 2147483647, %v1737
        %vm1748 = vcmp.eq.f32.partialorder %v1747, 8.507059e+37
        %v1749 = vand.u32 %v1737, 2147483648
        %v1750 = vor.u32 1.1754944e-38, %v1749
        %v1751 = vsel %vm1748, %v1750, %v1746
        %v1752 = vmul.f32 1.0, %v1751
        %v1753 = vadd.f32 %v1671, %v1711
        %v1754 = vxor.u32 %v1753, 2147483648
        %v1755 = vmul.f32 %v1754, 1.442695
        %v1756 = vpow.pop %v1755
        %v1757 = vadd.f32 %v1756, 1.0
        %v1758 = vrcp.pop %v1757
        %v1759 = vmul.f32 %v1757, %v1758
        %v1760 = vsub.f32 1.0, %v1759
        %v1761 = vmul.f32 %v1758, %v1760
        %v1762 = vadd.f32 %v1758, %v1761
        %vm1763 = vweird.f32 %v1757
        %vm1764 = vweird.f32 %v1758
        %vm1765 = vmor %vm1763, %vm1764
        %v1766 = vsel %vm1765, %v1758, %v1762
        %v1767 = vand.u32 2147483647, %v1757
        %vm1768 = vcmp.eq.f32.partialorder %v1767, 8.507059e+37
        %v1769 = vand.u32 %v1757, 2147483648
        %v1770 = vor.u32 1.1754944e-38, %v1769
        %v1771 = vsel %vm1768, %v1770, %v1766
        %v1772 = vmul.f32 1.0, %v1771
        %v1773 = vadd.f32 %v1731, %v1219
        %v1774 = vmul.f32 %v1752, %v1773
        %v1775 = vadd.f32 %v1672, %v1774
        %v1776 = vtanh.pop %v1775
        %v1777 = vsub.f32 1.0, %v1772
        %v1778 = vmul.f32 %v1777, %v1776
        %v1779 = vmul.f32 %v1772, %v1668
        %v1780 = vadd.f32 %v1778, %v1779
        %s1781 = scalar_lea.vmem [#allocation3], 120
        %v1782 = vld [vmem:[%s1781] sm:$0xff]
        %v1783 = vld [vmem:[%s1781 + $0x8] sm:$0xff]
        %v1784 = vld [vmem:[%s1781 + $0x10] sm:$0xff]
        %1785 = vmatpush.msra.mxu0 %v1214
        %1786 = vmatpush.msra.mxu0 %v1211
        %1787 = vmatpush.msra.mxu0 %v1208
        %1788 = vmatpush.msra.mxu0 %v1205
        %1789 = vmatpush.msra.mxu0 %v1202
        %1790 = vmatpush.msra.mxu0 %v1199
        %1791 = vmatpush.msra.mxu0 %v1196
        %1792 = vmatpush.msra.mxu0 %v1193
        %1793 = vmatpush.msra.mxu0 %v1190
        %1794 = vmatpush.msra.mxu0 %v1187
        %1795 = vmatpush.msra.mxu0 %v1184
        %1796 = vmatpush.msra.mxu0 %v1181
        %1797 = vmatpush.msra.mxu0 %v1178
        %1798 = vmatpush.msra.mxu0 %v1175
        %1799 = vmatpush.msra.mxu0 %v1172
        %1800 = vmatpush.msra.mxu0 %v1169
        %1801 = vmatmul.f32.gmra.mxu0 %v1780
        %v1802 = vpop.f32.mrf.mxu0
        %v1803 = vadd.f32 0.0, %v1802
        %1804 = vdwg.mxu0
        %1805 = vmatpush.msra.mxu0 %v1215
        %1806 = vmatpush.msra.mxu0 %v1212
        %1807 = vmatpush.msra.mxu0 %v1209
        %1808 = vmatpush.msra.mxu0 %v1206
        %1809 = vmatpush.msra.mxu0 %v1203
        %1810 = vmatpush.msra.mxu0 %v1200
        %1811 = vmatpush.msra.mxu0 %v1197
        %1812 = vmatpush.msra.mxu0 %v1194
        %1813 = vmatpush.msra.mxu0 %v1191
        %1814 = vmatpush.msra.mxu0 %v1188
        %1815 = vmatpush.msra.mxu0 %v1185
        %1816 = vmatpush.msra.mxu0 %v1182
        %1817 = vmatpush.msra.mxu0 %v1179
        %1818 = vmatpush.msra.mxu0 %v1176
        %1819 = vmatpush.msra.mxu0 %v1173
        %1820 = vmatpush.msra.mxu0 %v1170
        %1821 = vmatmul.f32.gmra.mxu0 %v1780
        %v1822 = vpop.f32.mrf.mxu0
        %v1823 = vadd.f32 0.0, %v1822
        %1824 = vdwg.mxu0
        %1825 = vmatpush.msra.mxu0 %v1216
        %1826 = vmatpush.msra.mxu0 %v1213
        %1827 = vmatpush.msra.mxu0 %v1210
        %1828 = vmatpush.msra.mxu0 %v1207
        %1829 = vmatpush.msra.mxu0 %v1204
        %1830 = vmatpush.msra.mxu0 %v1201
        %1831 = vmatpush.msra.mxu0 %v1198
        %1832 = vmatpush.msra.mxu0 %v1195
        %1833 = vmatpush.msra.mxu0 %v1192
        %1834 = vmatpush.msra.mxu0 %v1189
        %1835 = vmatpush.msra.mxu0 %v1186
        %1836 = vmatpush.msra.mxu0 %v1183
        %1837 = vmatpush.msra.mxu0 %v1180
        %1838 = vmatpush.msra.mxu0 %v1177
        %1839 = vmatpush.msra.mxu0 %v1174
        %1840 = vmatpush.msra.mxu0 %v1171
        %1841 = vmatmul.f32.gmra.mxu0 %v1780
        %v1842 = vpop.f32.mrf.mxu0
        %v1843 = vadd.f32 0.0, %v1842
        %1844 = vdwg.mxu0
        %v1845 = vadd.f32 %v1782, %v1803
        %v1846 = vxor.u32 %v1845, 2147483648
        %v1847 = vmul.f32 %v1846, 1.442695
        %v1848 = vpow.pop %v1847
        %v1849 = vadd.f32 %v1848, 1.0
        %v1850 = vrcp.pop %v1849
        %v1851 = vmul.f32 %v1849, %v1850
        %v1852 = vsub.f32 1.0, %v1851
        %v1853 = vmul.f32 %v1850, %v1852
        %v1854 = vadd.f32 %v1850, %v1853
        %vm1855 = vweird.f32 %v1849
        %vm1856 = vweird.f32 %v1850
        %vm1857 = vmor %vm1855, %vm1856
        %v1858 = vsel %vm1857, %v1850, %v1854
        %v1859 = vand.u32 2147483647, %v1849
        %vm1860 = vcmp.eq.f32.partialorder %v1859, 8.507059e+37
        %v1861 = vand.u32 %v1849, 2147483648
        %v1862 = vor.u32 1.1754944e-38, %v1861
        %v1863 = vsel %vm1860, %v1862, %v1858
        %v1864 = vmul.f32 1.0, %v1863
        %v1865 = vadd.f32 %v1783, %v1823
        %v1866 = vxor.u32 %v1865, 2147483648
        %v1867 = vmul.f32 %v1866, 1.442695
        %v1868 = vpow.pop %v1867
        %v1869 = vadd.f32 %v1868, 1.0
        %v1870 = vrcp.pop %v1869
        %v1871 = vmul.f32 %v1869, %v1870
        %v1872 = vsub.f32 1.0, %v1871
        %v1873 = vmul.f32 %v1870, %v1872
        %v1874 = vadd.f32 %v1870, %v1873
        %vm1875 = vweird.f32 %v1869
        %vm1876 = vweird.f32 %v1870
        %vm1877 = vmor %vm1875, %vm1876
        %v1878 = vsel %vm1877, %v1870, %v1874
        %v1879 = vand.u32 2147483647, %v1869
        %vm1880 = vcmp.eq.f32.partialorder %v1879, 8.507059e+37
        %v1881 = vand.u32 %v1869, 2147483648
        %v1882 = vor.u32 1.1754944e-38, %v1881
        %v1883 = vsel %vm1880, %v1882, %v1878
        %v1884 = vmul.f32 1.0, %v1883
        %v1885 = vadd.f32 %v1843, %v1219
        %v1886 = vmul.f32 %v1864, %v1885
        %v1887 = vadd.f32 %v1784, %v1886
        %v1888 = vtanh.pop %v1887
        %v1889 = vsub.f32 1.0, %v1884
        %v1890 = vmul.f32 %v1889, %v1888
        %v1891 = vmul.f32 %v1884, %v1780
        %v1892 = vadd.f32 %v1890, %v1891
        %s1893 = scalar_lea.vmem [#allocation3], 144
        %v1894 = vld [vmem:[%s1893] sm:$0xff]
        %v1895 = vld [vmem:[%s1893 + $0x8] sm:$0xff]
        %v1896 = vld [vmem:[%s1893 + $0x10] sm:$0xff]
        %1897 = vmatpush.msra.mxu0 %v1214
        %1898 = vmatpush.msra.mxu0 %v1211
        %1899 = vmatpush.msra.mxu0 %v1208
        %1900 = vmatpush.msra.mxu0 %v1205
        %1901 = vmatpush.msra.mxu0 %v1202
        %1902 = vmatpush.msra.mxu0 %v1199
        %1903 = vmatpush.msra.mxu0 %v1196
        %1904 = vmatpush.msra.mxu0 %v1193
        %1905 = vmatpush.msra.mxu0 %v1190
        %1906 = vmatpush.msra.mxu0 %v1187
        %1907 = vmatpush.msra.mxu0 %v1184
        %1908 = vmatpush.msra.mxu0 %v1181
        %1909 = vmatpush.msra.mxu0 %v1178
        %1910 = vmatpush.msra.mxu0 %v1175
        %1911 = vmatpush.msra.mxu0 %v1172
        %1912 = vmatpush.msra.mxu0 %v1169
        %1913 = vmatmul.f32.gmra.mxu0 %v1892
        %v1914 = vpop.f32.mrf.mxu0
        %v1915 = vadd.f32 0.0, %v1914
        %1916 = vdwg.mxu0
        %1917 = vmatpush.msra.mxu0 %v1215
        %1918 = vmatpush.msra.mxu0 %v1212
        %1919 = vmatpush.msra.mxu0 %v1209
        %1920 = vmatpush.msra.mxu0 %v1206
        %1921 = vmatpush.msra.mxu0 %v1203
        %1922 = vmatpush.msra.mxu0 %v1200
        %1923 = vmatpush.msra.mxu0 %v1197
        %1924 = vmatpush.msra.mxu0 %v1194
        %1925 = vmatpush.msra.mxu0 %v1191
        %1926 = vmatpush.msra.mxu0 %v1188
        %1927 = vmatpush.msra.mxu0 %v1185
        %1928 = vmatpush.msra.mxu0 %v1182
        %1929 = vmatpush.msra.mxu0 %v1179
        %1930 = vmatpush.msra.mxu0 %v1176
        %1931 = vmatpush.msra.mxu0 %v1173
        %1932 = vmatpush.msra.mxu0 %v1170
        %1933 = vmatmul.f32.gmra.mxu0 %v1892
        %v1934 = vpop.f32.mrf.mxu0
        %v1935 = vadd.f32 0.0, %v1934
        %1936 = vdwg.mxu0
        %1937 = vmatpush.msra.mxu0 %v1216
        %1938 = vmatpush.msra.mxu0 %v1213
        %1939 = vmatpush.msra.mxu0 %v1210
        %1940 = vmatpush.msra.mxu0 %v1207
        %1941 = vmatpush.msra.mxu0 %v1204
        %1942 = vmatpush.msra.mxu0 %v1201
        %1943 = vmatpush.msra.mxu0 %v1198
        %1944 = vmatpush.msra.mxu0 %v1195
        %1945 = vmatpush.msra.mxu0 %v1192
        %1946 = vmatpush.msra.mxu0 %v1189
        %1947 = vmatpush.msra.mxu0 %v1186
        %1948 = vmatpush.msra.mxu0 %v1183
        %1949 = vmatpush.msra.mxu0 %v1180
        %1950 = vmatpush.msra.mxu0 %v1177
        %1951 = vmatpush.msra.mxu0 %v1174
        %1952 = vmatpush.msra.mxu0 %v1171
        %1953 = vmatmul.f32.gmra.mxu0 %v1892
        %v1954 = vpop.f32.mrf.mxu0
        %v1955 = vadd.f32 0.0, %v1954
        %1956 = vdwg.mxu0
        %v1957 = vadd.f32 %v1894, %v1915
        %v1958 = vxor.u32 %v1957, 2147483648
        %v1959 = vmul.f32 %v1958, 1.442695
        %v1960 = vpow.pop %v1959
        %v1961 = vadd.f32 %v1960, 1.0
        %v1962 = vrcp.pop %v1961
        %v1963 = vmul.f32 %v1961, %v1962
        %v1964 = vsub.f32 1.0, %v1963
        %v1965 = vmul.f32 %v1962, %v1964
        %v1966 = vadd.f32 %v1962, %v1965
        %vm1967 = vweird.f32 %v1961
        %vm1968 = vweird.f32 %v1962
        %vm1969 = vmor %vm1967, %vm1968
        %v1970 = vsel %vm1969, %v1962, %v1966
        %v1971 = vand.u32 2147483647, %v1961
        %vm1972 = vcmp.eq.f32.partialorder %v1971, 8.507059e+37
        %v1973 = vand.u32 %v1961, 2147483648
        %v1974 = vor.u32 1.1754944e-38, %v1973
        %v1975 = vsel %vm1972, %v1974, %v1970
        %v1976 = vmul.f32 1.0, %v1975
        %v1977 = vadd.f32 %v1895, %v1935
        %v1978 = vxor.u32 %v1977, 2147483648
        %v1979 = vmul.f32 %v1978, 1.442695
        %v1980 = vpow.pop %v1979
        %v1981 = vadd.f32 %v1980, 1.0
        %v1982 = vrcp.pop %v1981
        %v1983 = vmul.f32 %v1981, %v1982
        %v1984 = vsub.f32 1.0, %v1983
        %v1985 = vmul.f32 %v1982, %v1984
        %v1986 = vadd.f32 %v1982, %v1985
        %vm1987 = vweird.f32 %v1981
        %vm1988 = vweird.f32 %v1982
        %vm1989 = vmor %vm1987, %vm1988
        %v1990 = vsel %vm1989, %v1982, %v1986
        %v1991 = vand.u32 2147483647, %v1981
        %vm1992 = vcmp.eq.f32.partialorder %v1991, 8.507059e+37
        %v1993 = vand.u32 %v1981, 2147483648
        %v1994 = vor.u32 1.1754944e-38, %v1993
        %v1995 = vsel %vm1992, %v1994, %v1990
        %v1996 = vmul.f32 1.0, %v1995
        %v1997 = vadd.f32 %v1955, %v1219
        %v1998 = vmul.f32 %v1976, %v1997
        %v1999 = vadd.f32 %v1896, %v1998
        %v2000 = vtanh.pop %v1999
        %v2001 = vsub.f32 1.0, %v1996
        %v2002 = vmul.f32 %v2001, %v2000
        %v2003 = vmul.f32 %v1996, %v1892
        %v2004 = vadd.f32 %v2002, %v2003
        %s2005 = scalar_lea.vmem [#allocation3], 168
        %v2006 = vld [vmem:[%s2005] sm:$0xff]
        %v2007 = vld [vmem:[%s2005 + $0x8] sm:$0xff]
        %v2008 = vld [vmem:[%s2005 + $0x10] sm:$0xff]
        %2009 = vmatpush.msra.mxu0 %v1214
        %2010 = vmatpush.msra.mxu0 %v1211
        %2011 = vmatpush.msra.mxu0 %v1208
        %2012 = vmatpush.msra.mxu0 %v1205
        %2013 = vmatpush.msra.mxu0 %v1202
        %2014 = vmatpush.msra.mxu0 %v1199
        %2015 = vmatpush.msra.mxu0 %v1196
        %2016 = vmatpush.msra.mxu0 %v1193
        %2017 = vmatpush.msra.mxu0 %v1190
        %2018 = vmatpush.msra.mxu0 %v1187
        %2019 = vmatpush.msra.mxu0 %v1184
        %2020 = vmatpush.msra.mxu0 %v1181
        %2021 = vmatpush.msra.mxu0 %v1178
        %2022 = vmatpush.msra.mxu0 %v1175
        %2023 = vmatpush.msra.mxu0 %v1172
        %2024 = vmatpush.msra.mxu0 %v1169
        %2025 = vmatmul.f32.gmra.mxu0 %v2004
        %v2026 = vpop.f32.mrf.mxu0
        %v2027 = vadd.f32 0.0, %v2026
        %2028 = vdwg.mxu0
        %2029 = vmatpush.msra.mxu0 %v1215
        %2030 = vmatpush.msra.mxu0 %v1212
        %2031 = vmatpush.msra.mxu0 %v1209
        %2032 = vmatpush.msra.mxu0 %v1206
        %2033 = vmatpush.msra.mxu0 %v1203
        %2034 = vmatpush.msra.mxu0 %v1200
        %2035 = vmatpush.msra.mxu0 %v1197
        %2036 = vmatpush.msra.mxu0 %v1194
        %2037 = vmatpush.msra.mxu0 %v1191
        %2038 = vmatpush.msra.mxu0 %v1188
        %2039 = vmatpush.msra.mxu0 %v1185
        %2040 = vmatpush.msra.mxu0 %v1182
        %2041 = vmatpush.msra.mxu0 %v1179
        %2042 = vmatpush.msra.mxu0 %v1176
        %2043 = vmatpush.msra.mxu0 %v1173
        %2044 = vmatpush.msra.mxu0 %v1170
        %2045 = vmatmul.f32.gmra.mxu0 %v2004
        %v2046 = vpop.f32.mrf.mxu0
        %v2047 = vadd.f32 0.0, %v2046
        %2048 = vdwg.mxu0
        %2049 = vmatpush.msra.mxu0 %v1216
        %2050 = vmatpush.msra.mxu0 %v1213
        %2051 = vmatpush.msra.mxu0 %v1210
        %2052 = vmatpush.msra.mxu0 %v1207
        %2053 = vmatpush.msra.mxu0 %v1204
        %2054 = vmatpush.msra.mxu0 %v1201
        %2055 = vmatpush.msra.mxu0 %v1198
        %2056 = vmatpush.msra.mxu0 %v1195
        %2057 = vmatpush.msra.mxu0 %v1192
        %2058 = vmatpush.msra.mxu0 %v1189
        %2059 = vmatpush.msra.mxu0 %v1186
        %2060 = vmatpush.msra.mxu0 %v1183
        %2061 = vmatpush.msra.mxu0 %v1180
        %2062 = vmatpush.msra.mxu0 %v1177
        %2063 = vmatpush.msra.mxu0 %v1174
        %2064 = vmatpush.msra.mxu0 %v1171
        %2065 = vmatmul.f32.gmra.mxu0 %v2004
        %v2066 = vpop.f32.mrf.mxu0
        %v2067 = vadd.f32 0.0, %v2066
        %2068 = vdwg.mxu0
        %v2069 = vadd.f32 %v2006, %v2027
        %v2070 = vxor.u32 %v2069, 2147483648
        %v2071 = vmul.f32 %v2070, 1.442695
        %v2072 = vpow.pop %v2071
        %v2073 = vadd.f32 %v2072, 1.0
        %v2074 = vrcp.pop %v2073
        %v2075 = vmul.f32 %v2073, %v2074
        %v2076 = vsub.f32 1.0, %v2075
        %v2077 = vmul.f32 %v2074, %v2076
        %v2078 = vadd.f32 %v2074, %v2077
        %vm2079 = vweird.f32 %v2073
        %vm2080 = vweird.f32 %v2074
        %vm2081 = vmor %vm2079, %vm2080
        %v2082 = vsel %vm2081, %v2074, %v2078
        %v2083 = vand.u32 2147483647, %v2073
        %vm2084 = vcmp.eq.f32.partialorder %v2083, 8.507059e+37
        %v2085 = vand.u32 %v2073, 2147483648
        %v2086 = vor.u32 1.1754944e-38, %v2085
        %v2087 = vsel %vm2084, %v2086, %v2082
        %v2088 = vmul.f32 1.0, %v2087
        %v2089 = vadd.f32 %v2007, %v2047
        %v2090 = vxor.u32 %v2089, 2147483648
        %v2091 = vmul.f32 %v2090, 1.442695
        %v2092 = vpow.pop %v2091
        %v2093 = vadd.f32 %v2092, 1.0
        %v2094 = vrcp.pop %v2093
        %v2095 = vmul.f32 %v2093, %v2094
        %v2096 = vsub.f32 1.0, %v2095
        %v2097 = vmul.f32 %v2094, %v2096
        %v2098 = vadd.f32 %v2094, %v2097
        %vm2099 = vweird.f32 %v2093
        %vm2100 = vweird.f32 %v2094
        %vm2101 = vmor %vm2099, %vm2100
        %v2102 = vsel %vm2101, %v2094, %v2098
        %v2103 = vand.u32 2147483647, %v2093
        %vm2104 = vcmp.eq.f32.partialorder %v2103, 8.507059e+37
        %v2105 = vand.u32 %v2093, 2147483648
        %v2106 = vor.u32 1.1754944e-38, %v2105
        %v2107 = vsel %vm2104, %v2106, %v2102
        %v2108 = vmul.f32 1.0, %v2107
        %v2109 = vadd.f32 %v2067, %v1219
        %v2110 = vmul.f32 %v2088, %v2109
        %v2111 = vadd.f32 %v2008, %v2110
        %v2112 = vtanh.pop %v2111
        %v2113 = vsub.f32 1.0, %v2108
        %v2114 = vmul.f32 %v2113, %v2112
        %v2115 = vmul.f32 %v2108, %v2004
        %v2116 = vadd.f32 %v2114, %v2115
        %s2117 = scalar_lea.vmem [#allocation3], 192
        %v2118 = vld [vmem:[%s2117] sm:$0xff]
        %v2119 = vld [vmem:[%s2117 + $0x8] sm:$0xff]
        %v2120 = vld [vmem:[%s2117 + $0x10] sm:$0xff]
        %2121 = vmatpush.msra.mxu0 %v1214
        %2122 = vmatpush.msra.mxu0 %v1211
        %2123 = vmatpush.msra.mxu0 %v1208
        %2124 = vmatpush.msra.mxu0 %v1205
        %2125 = vmatpush.msra.mxu0 %v1202
        %2126 = vmatpush.msra.mxu0 %v1199
        %2127 = vmatpush.msra.mxu0 %v1196
        %2128 = vmatpush.msra.mxu0 %v1193
        %2129 = vmatpush.msra.mxu0 %v1190
        %2130 = vmatpush.msra.mxu0 %v1187
        %2131 = vmatpush.msra.mxu0 %v1184
        %2132 = vmatpush.msra.mxu0 %v1181
        %2133 = vmatpush.msra.mxu0 %v1178
        %2134 = vmatpush.msra.mxu0 %v1175
        %2135 = vmatpush.msra.mxu0 %v1172
        %2136 = vmatpush.msra.mxu0 %v1169
        %2137 = vmatmul.f32.gmra.mxu0 %v2116
        %v2138 = vpop.f32.mrf.mxu0
        %v2139 = vadd.f32 0.0, %v2138
        %2140 = vdwg.mxu0
        %2141 = vmatpush.msra.mxu0 %v1215
        %2142 = vmatpush.msra.mxu0 %v1212
        %2143 = vmatpush.msra.mxu0 %v1209
        %2144 = vmatpush.msra.mxu0 %v1206
        %2145 = vmatpush.msra.mxu0 %v1203
        %2146 = vmatpush.msra.mxu0 %v1200
        %2147 = vmatpush.msra.mxu0 %v1197
        %2148 = vmatpush.msra.mxu0 %v1194
        %2149 = vmatpush.msra.mxu0 %v1191
        %2150 = vmatpush.msra.mxu0 %v1188
        %2151 = vmatpush.msra.mxu0 %v1185
        %2152 = vmatpush.msra.mxu0 %v1182
        %2153 = vmatpush.msra.mxu0 %v1179
        %2154 = vmatpush.msra.mxu0 %v1176
        %2155 = vmatpush.msra.mxu0 %v1173
        %2156 = vmatpush.msra.mxu0 %v1170
        %2157 = vmatmul.f32.gmra.mxu0 %v2116
        %v2158 = vpop.f32.mrf.mxu0
        %v2159 = vadd.f32 0.0, %v2158
        %2160 = vdwg.mxu0
        %2161 = vmatpush.msra.mxu0 %v1216
        %2162 = vmatpush.msra.mxu0 %v1213
        %2163 = vmatpush.msra.mxu0 %v1210
        %2164 = vmatpush.msra.mxu0 %v1207
        %2165 = vmatpush.msra.mxu0 %v1204
        %2166 = vmatpush.msra.mxu0 %v1201
        %2167 = vmatpush.msra.mxu0 %v1198
        %2168 = vmatpush.msra.mxu0 %v1195
        %2169 = vmatpush.msra.mxu0 %v1192
        %2170 = vmatpush.msra.mxu0 %v1189
        %2171 = vmatpush.msra.mxu0 %v1186
        %2172 = vmatpush.msra.mxu0 %v1183
        %2173 = vmatpush.msra.mxu0 %v1180
        %2174 = vmatpush.msra.mxu0 %v1177
        %2175 = vmatpush.msra.mxu0 %v1174
        %2176 = vmatpush.msra.mxu0 %v1171
        %2177 = vmatmul.f32.gmra.mxu0 %v2116
        %v2178 = vpop.f32.mrf.mxu0
        %v2179 = vadd.f32 0.0, %v2178
        %2180 = vdwg.mxu0
        %v2181 = vadd.f32 %v2118, %v2139
        %v2182 = vxor.u32 %v2181, 2147483648
        %v2183 = vmul.f32 %v2182, 1.442695
        %v2184 = vpow.pop %v2183
        %v2185 = vadd.f32 %v2184, 1.0
        %v2186 = vrcp.pop %v2185
        %v2187 = vmul.f32 %v2185, %v2186
        %v2188 = vsub.f32 1.0, %v2187
        %v2189 = vmul.f32 %v2186, %v2188
        %v2190 = vadd.f32 %v2186, %v2189
        %vm2191 = vweird.f32 %v2185
        %vm2192 = vweird.f32 %v2186
        %vm2193 = vmor %vm2191, %vm2192
        %v2194 = vsel %vm2193, %v2186, %v2190
        %v2195 = vand.u32 2147483647, %v2185
        %vm2196 = vcmp.eq.f32.partialorder %v2195, 8.507059e+37
        %v2197 = vand.u32 %v2185, 2147483648
        %v2198 = vor.u32 1.1754944e-38, %v2197
        %v2199 = vsel %vm2196, %v2198, %v2194
        %v2200 = vmul.f32 1.0, %v2199
        %v2201 = vadd.f32 %v2119, %v2159
        %v2202 = vxor.u32 %v2201, 2147483648
        %v2203 = vmul.f32 %v2202, 1.442695
        %v2204 = vpow.pop %v2203
        %v2205 = vadd.f32 %v2204, 1.0
        %v2206 = vrcp.pop %v2205
        %v2207 = vmul.f32 %v2205, %v2206
        %v2208 = vsub.f32 1.0, %v2207
        %v2209 = vmul.f32 %v2206, %v2208
        %v2210 = vadd.f32 %v2206, %v2209
        %vm2211 = vweird.f32 %v2205
        %vm2212 = vweird.f32 %v2206
        %vm2213 = vmor %vm2211, %vm2212
        %v2214 = vsel %vm2213, %v2206, %v2210
        %v2215 = vand.u32 2147483647, %v2205
        %vm2216 = vcmp.eq.f32.partialorder %v2215, 8.507059e+37
        %v2217 = vand.u32 %v2205, 2147483648
        %v2218 = vor.u32 1.1754944e-38, %v2217
        %v2219 = vsel %vm2216, %v2218, %v2214
        %v2220 = vmul.f32 1.0, %v2219
        %v2221 = vadd.f32 %v2179, %v1219
        %v2222 = vmul.f32 %v2200, %v2221
        %v2223 = vadd.f32 %v2120, %v2222
        %v2224 = vtanh.pop %v2223
        %v2225 = vsub.f32 1.0, %v2220
        %v2226 = vmul.f32 %v2225, %v2224
        %v2227 = vmul.f32 %v2220, %v2116
        %v2228 = vadd.f32 %v2226, %v2227
        %s2229 = scalar_lea.vmem [#allocation3], 216
        %v2230 = vld [vmem:[%s2229] sm:$0xff]
        %v2231 = vld [vmem:[%s2229 + $0x8] sm:$0xff]
        %v2232 = vld [vmem:[%s2229 + $0x10] sm:$0xff]
        %2233 = vmatpush.msra.mxu0 %v1214
        %2234 = vmatpush.msra.mxu0 %v1211
        %2235 = vmatpush.msra.mxu0 %v1208
        %2236 = vmatpush.msra.mxu0 %v1205
        %2237 = vmatpush.msra.mxu0 %v1202
        %2238 = vmatpush.msra.mxu0 %v1199
        %2239 = vmatpush.msra.mxu0 %v1196
        %2240 = vmatpush.msra.mxu0 %v1193
        %2241 = vmatpush.msra.mxu0 %v1190
        %2242 = vmatpush.msra.mxu0 %v1187
        %2243 = vmatpush.msra.mxu0 %v1184
        %2244 = vmatpush.msra.mxu0 %v1181
        %2245 = vmatpush.msra.mxu0 %v1178
        %2246 = vmatpush.msra.mxu0 %v1175
        %2247 = vmatpush.msra.mxu0 %v1172
        %2248 = vmatpush.msra.mxu0 %v1169
        %2249 = vmatmul.f32.gmra.mxu0 %v2228
        %v2250 = vpop.f32.mrf.mxu0
        %v2251 = vadd.f32 0.0, %v2250
        %2252 = vdwg.mxu0
        %2253 = vmatpush.msra.mxu0 %v1215
        %2254 = vmatpush.msra.mxu0 %v1212
        %2255 = vmatpush.msra.mxu0 %v1209
        %2256 = vmatpush.msra.mxu0 %v1206
        %2257 = vmatpush.msra.mxu0 %v1203
        %2258 = vmatpush.msra.mxu0 %v1200
        %2259 = vmatpush.msra.mxu0 %v1197
        %2260 = vmatpush.msra.mxu0 %v1194
        %2261 = vmatpush.msra.mxu0 %v1191
        %2262 = vmatpush.msra.mxu0 %v1188
        %2263 = vmatpush.msra.mxu0 %v1185
        %2264 = vmatpush.msra.mxu0 %v1182
        %2265 = vmatpush.msra.mxu0 %v1179
        %2266 = vmatpush.msra.mxu0 %v1176
        %2267 = vmatpush.msra.mxu0 %v1173
        %2268 = vmatpush.msra.mxu0 %v1170
        %2269 = vmatmul.f32.gmra.mxu0 %v2228
        %v2270 = vpop.f32.mrf.mxu0
        %v2271 = vadd.f32 0.0, %v2270
        %2272 = vdwg.mxu0
        %2273 = vmatpush.msra.mxu0 %v1216
        %2274 = vmatpush.msra.mxu0 %v1213
        %2275 = vmatpush.msra.mxu0 %v1210
        %2276 = vmatpush.msra.mxu0 %v1207
        %2277 = vmatpush.msra.mxu0 %v1204
        %2278 = vmatpush.msra.mxu0 %v1201
        %2279 = vmatpush.msra.mxu0 %v1198
        %2280 = vmatpush.msra.mxu0 %v1195
        %2281 = vmatpush.msra.mxu0 %v1192
        %2282 = vmatpush.msra.mxu0 %v1189
        %2283 = vmatpush.msra.mxu0 %v1186
        %2284 = vmatpush.msra.mxu0 %v1183
        %2285 = vmatpush.msra.mxu0 %v1180
        %2286 = vmatpush.msra.mxu0 %v1177
        %2287 = vmatpush.msra.mxu0 %v1174
        %2288 = vmatpush.msra.mxu0 %v1171
        %2289 = vmatmul.f32.gmra.mxu0 %v2228
        %v2290 = vpop.f32.mrf.mxu0
        %v2291 = vadd.f32 0.0, %v2290
        %2292 = vdwg.mxu0
        %v2293 = vadd.f32 %v2230, %v2251
        %v2294 = vxor.u32 %v2293, 2147483648
        %v2295 = vmul.f32 %v2294, 1.442695
        %v2296 = vpow.pop %v2295
        %v2297 = vadd.f32 %v2296, 1.0
        %v2298 = vrcp.pop %v2297
        %v2299 = vmul.f32 %v2297, %v2298
        %v2300 = vsub.f32 1.0, %v2299
        %v2301 = vmul.f32 %v2298, %v2300
        %v2302 = vadd.f32 %v2298, %v2301
        %vm2303 = vweird.f32 %v2297
        %vm2304 = vweird.f32 %v2298
        %vm2305 = vmor %vm2303, %vm2304
        %v2306 = vsel %vm2305, %v2298, %v2302
        %v2307 = vand.u32 2147483647, %v2297
        %vm2308 = vcmp.eq.f32.partialorder %v2307, 8.507059e+37
        %v2309 = vand.u32 %v2297, 2147483648
        %v2310 = vor.u32 1.1754944e-38, %v2309
        %v2311 = vsel %vm2308, %v2310, %v2306
        %v2312 = vmul.f32 1.0, %v2311
        %v2313 = vadd.f32 %v2231, %v2271
        %v2314 = vxor.u32 %v2313, 2147483648
        %v2315 = vmul.f32 %v2314, 1.442695
        %v2316 = vpow.pop %v2315
        %v2317 = vadd.f32 %v2316, 1.0
        %v2318 = vrcp.pop %v2317
        %v2319 = vmul.f32 %v2317, %v2318
        %v2320 = vsub.f32 1.0, %v2319
        %v2321 = vmul.f32 %v2318, %v2320
        %v2322 = vadd.f32 %v2318, %v2321
        %vm2323 = vweird.f32 %v2317
        %vm2324 = vweird.f32 %v2318
        %vm2325 = vmor %vm2323, %vm2324
        %v2326 = vsel %vm2325, %v2318, %v2322
        %v2327 = vand.u32 2147483647, %v2317
        %vm2328 = vcmp.eq.f32.partialorder %v2327, 8.507059e+37
        %v2329 = vand.u32 %v2317, 2147483648
        %v2330 = vor.u32 1.1754944e-38, %v2329
        %v2331 = vsel %vm2328, %v2330, %v2326
        %v2332 = vmul.f32 1.0, %v2331
        %v2333 = vadd.f32 %v2291, %v1219
        %v2334 = vmul.f32 %v2312, %v2333
        %v2335 = vadd.f32 %v2232, %v2334
        %v2336 = vtanh.pop %v2335
        %v2337 = vsub.f32 1.0, %v2332
        %v2338 = vmul.f32 %v2337, %v2336
        %v2339 = vmul.f32 %v2332, %v2228
        %v2340 = vadd.f32 %v2338, %v2339
        %s2341 = scalar_lea.vmem [#allocation3], 240
        %v2342 = vld [vmem:[%s2341] sm:$0xff]
        %v2343 = vld [vmem:[%s2341 + $0x8] sm:$0xff]
        %v2344 = vld [vmem:[%s2341 + $0x10] sm:$0xff]
        %2345 = vmatpush.msra.mxu0 %v1214
        %2346 = vmatpush.msra.mxu0 %v1211
        %2347 = vmatpush.msra.mxu0 %v1208
        %2348 = vmatpush.msra.mxu0 %v1205
        %2349 = vmatpush.msra.mxu0 %v1202
        %2350 = vmatpush.msra.mxu0 %v1199
        %2351 = vmatpush.msra.mxu0 %v1196
        %2352 = vmatpush.msra.mxu0 %v1193
        %2353 = vmatpush.msra.mxu0 %v1190
        %2354 = vmatpush.msra.mxu0 %v1187
        %2355 = vmatpush.msra.mxu0 %v1184
        %2356 = vmatpush.msra.mxu0 %v1181
        %2357 = vmatpush.msra.mxu0 %v1178
        %2358 = vmatpush.msra.mxu0 %v1175
        %2359 = vmatpush.msra.mxu0 %v1172
        %2360 = vmatpush.msra.mxu0 %v1169
        %2361 = vmatmul.f32.gmra.mxu0 %v2340
        %v2362 = vpop.f32.mrf.mxu0
        %v2363 = vadd.f32 0.0, %v2362
        %2364 = vdwg.mxu0
        %2365 = vmatpush.msra.mxu0 %v1215
        %2366 = vmatpush.msra.mxu0 %v1212
        %2367 = vmatpush.msra.mxu0 %v1209
        %2368 = vmatpush.msra.mxu0 %v1206
        %2369 = vmatpush.msra.mxu0 %v1203
        %2370 = vmatpush.msra.mxu0 %v1200
        %2371 = vmatpush.msra.mxu0 %v1197
        %2372 = vmatpush.msra.mxu0 %v1194
        %2373 = vmatpush.msra.mxu0 %v1191
        %2374 = vmatpush.msra.mxu0 %v1188
        %2375 = vmatpush.msra.mxu0 %v1185
        %2376 = vmatpush.msra.mxu0 %v1182
        %2377 = vmatpush.msra.mxu0 %v1179
        %2378 = vmatpush.msra.mxu0 %v1176
        %2379 = vmatpush.msra.mxu0 %v1173
        %2380 = vmatpush.msra.mxu0 %v1170
        %2381 = vmatmul.f32.gmra.mxu0 %v2340
        %v2382 = vpop.f32.mrf.mxu0
        %v2383 = vadd.f32 0.0, %v2382
        %2384 = vdwg.mxu0
        %2385 = vmatpush.msra.mxu0 %v1216
        %2386 = vmatpush.msra.mxu0 %v1213
        %2387 = vmatpush.msra.mxu0 %v1210
        %2388 = vmatpush.msra.mxu0 %v1207
        %2389 = vmatpush.msra.mxu0 %v1204
        %2390 = vmatpush.msra.mxu0 %v1201
        %2391 = vmatpush.msra.mxu0 %v1198
        %2392 = vmatpush.msra.mxu0 %v1195
        %2393 = vmatpush.msra.mxu0 %v1192
        %2394 = vmatpush.msra.mxu0 %v1189
        %2395 = vmatpush.msra.mxu0 %v1186
        %2396 = vmatpush.msra.mxu0 %v1183
        %2397 = vmatpush.msra.mxu0 %v1180
        %2398 = vmatpush.msra.mxu0 %v1177
        %2399 = vmatpush.msra.mxu0 %v1174
        %2400 = vmatpush.msra.mxu0 %v1171
        %2401 = vmatmul.f32.gmra.mxu0 %v2340
        %v2402 = vpop.f32.mrf.mxu0
        %v2403 = vadd.f32 0.0, %v2402
        %2404 = vdwg.mxu0
        %v2405 = vadd.f32 %v2342, %v2363
        %v2406 = vxor.u32 %v2405, 2147483648
        %v2407 = vmul.f32 %v2406, 1.442695
        %v2408 = vpow.pop %v2407
        %v2409 = vadd.f32 %v2408, 1.0
        %v2410 = vrcp.pop %v2409
        %v2411 = vmul.f32 %v2409, %v2410
        %v2412 = vsub.f32 1.0, %v2411
        %v2413 = vmul.f32 %v2410, %v2412
        %v2414 = vadd.f32 %v2410, %v2413
        %vm2415 = vweird.f32 %v2409
        %vm2416 = vweird.f32 %v2410
        %vm2417 = vmor %vm2415, %vm2416
        %v2418 = vsel %vm2417, %v2410, %v2414
        %v2419 = vand.u32 2147483647, %v2409
        %vm2420 = vcmp.eq.f32.partialorder %v2419, 8.507059e+37
        %v2421 = vand.u32 %v2409, 2147483648
        %v2422 = vor.u32 1.1754944e-38, %v2421
        %v2423 = vsel %vm2420, %v2422, %v2418
        %v2424 = vmul.f32 1.0, %v2423
        %v2425 = vadd.f32 %v2343, %v2383
        %v2426 = vxor.u32 %v2425, 2147483648
        %v2427 = vmul.f32 %v2426, 1.442695
        %v2428 = vpow.pop %v2427
        %v2429 = vadd.f32 %v2428, 1.0
        %v2430 = vrcp.pop %v2429
        %v2431 = vmul.f32 %v2429, %v2430
        %v2432 = vsub.f32 1.0, %v2431
        %v2433 = vmul.f32 %v2430, %v2432
        %v2434 = vadd.f32 %v2430, %v2433
        %vm2435 = vweird.f32 %v2429
        %vm2436 = vweird.f32 %v2430
        %vm2437 = vmor %vm2435, %vm2436
        %v2438 = vsel %vm2437, %v2430, %v2434
        %v2439 = vand.u32 2147483647, %v2429
        %vm2440 = vcmp.eq.f32.partialorder %v2439, 8.507059e+37
        %v2441 = vand.u32 %v2429, 2147483648
        %v2442 = vor.u32 1.1754944e-38, %v2441
        %v2443 = vsel %vm2440, %v2442, %v2438
        %v2444 = vmul.f32 1.0, %v2443
        %v2445 = vadd.f32 %v2403, %v1219
        %v2446 = vmul.f32 %v2424, %v2445
        %v2447 = vadd.f32 %v2344, %v2446
        %v2448 = vtanh.pop %v2447
        %v2449 = vsub.f32 1.0, %v2444
        %v2450 = vmul.f32 %v2449, %v2448
        %v2451 = vmul.f32 %v2444, %v2340
        %v2452 = vadd.f32 %v2450, %v2451
        %s2453 = scalar_lea.vmem [#allocation3], 264
        %v2454 = vld [vmem:[%s2453] sm:$0xff]
        %v2455 = vld [vmem:[%s2453 + $0x8] sm:$0xff]
        %v2456 = vld [vmem:[%s2453 + $0x10] sm:$0xff]
        %2457 = vmatpush.msra.mxu0 %v1214
        %2458 = vmatpush.msra.mxu0 %v1211
        %2459 = vmatpush.msra.mxu0 %v1208
        %2460 = vmatpush.msra.mxu0 %v1205
        %2461 = vmatpush.msra.mxu0 %v1202
        %2462 = vmatpush.msra.mxu0 %v1199
        %2463 = vmatpush.msra.mxu0 %v1196
        %2464 = vmatpush.msra.mxu0 %v1193
        %2465 = vmatpush.msra.mxu0 %v1190
        %2466 = vmatpush.msra.mxu0 %v1187
        %2467 = vmatpush.msra.mxu0 %v1184
        %2468 = vmatpush.msra.mxu0 %v1181
        %2469 = vmatpush.msra.mxu0 %v1178
        %2470 = vmatpush.msra.mxu0 %v1175
        %2471 = vmatpush.msra.mxu0 %v1172
        %2472 = vmatpush.msra.mxu0 %v1169
        %2473 = vmatmul.f32.gmra.mxu0 %v2452
        %v2474 = vpop.f32.mrf.mxu0
        %v2475 = vadd.f32 0.0, %v2474
        %2476 = vdwg.mxu0
        %2477 = vmatpush.msra.mxu0 %v1215
        %2478 = vmatpush.msra.mxu0 %v1212
        %2479 = vmatpush.msra.mxu0 %v1209
        %2480 = vmatpush.msra.mxu0 %v1206
        %2481 = vmatpush.msra.mxu0 %v1203
        %2482 = vmatpush.msra.mxu0 %v1200
        %2483 = vmatpush.msra.mxu0 %v1197
        %2484 = vmatpush.msra.mxu0 %v1194
        %2485 = vmatpush.msra.mxu0 %v1191
        %2486 = vmatpush.msra.mxu0 %v1188
        %2487 = vmatpush.msra.mxu0 %v1185
        %2488 = vmatpush.msra.mxu0 %v1182
        %2489 = vmatpush.msra.mxu0 %v1179
        %2490 = vmatpush.msra.mxu0 %v1176
        %2491 = vmatpush.msra.mxu0 %v1173
        %2492 = vmatpush.msra.mxu0 %v1170
        %2493 = vmatmul.f32.gmra.mxu0 %v2452
        %v2494 = vpop.f32.mrf.mxu0
        %v2495 = vadd.f32 0.0, %v2494
        %2496 = vdwg.mxu0
        %2497 = vmatpush.msra.mxu0 %v1216
        %2498 = vmatpush.msra.mxu0 %v1213
        %2499 = vmatpush.msra.mxu0 %v1210
        %2500 = vmatpush.msra.mxu0 %v1207
        %2501 = vmatpush.msra.mxu0 %v1204
        %2502 = vmatpush.msra.mxu0 %v1201
        %2503 = vmatpush.msra.mxu0 %v1198
        %2504 = vmatpush.msra.mxu0 %v1195
        %2505 = vmatpush.msra.mxu0 %v1192
        %2506 = vmatpush.msra.mxu0 %v1189
        %2507 = vmatpush.msra.mxu0 %v1186
        %2508 = vmatpush.msra.mxu0 %v1183
        %2509 = vmatpush.msra.mxu0 %v1180
        %2510 = vmatpush.msra.mxu0 %v1177
        %2511 = vmatpush.msra.mxu0 %v1174
        %2512 = vmatpush.msra.mxu0 %v1171
        %2513 = vmatmul.f32.gmra.mxu0 %v2452
        %v2514 = vpop.f32.mrf.mxu0
        %v2515 = vadd.f32 0.0, %v2514
        %2516 = vdwg.mxu0
        %v2517 = vadd.f32 %v2454, %v2475
        %v2518 = vxor.u32 %v2517, 2147483648
        %v2519 = vmul.f32 %v2518, 1.442695
        %v2520 = vpow.pop %v2519
        %v2521 = vadd.f32 %v2520, 1.0
        %v2522 = vrcp.pop %v2521
        %v2523 = vmul.f32 %v2521, %v2522
        %v2524 = vsub.f32 1.0, %v2523
        %v2525 = vmul.f32 %v2522, %v2524
        %v2526 = vadd.f32 %v2522, %v2525
        %vm2527 = vweird.f32 %v2521
        %vm2528 = vweird.f32 %v2522
        %vm2529 = vmor %vm2527, %vm2528
        %v2530 = vsel %vm2529, %v2522, %v2526
        %v2531 = vand.u32 2147483647, %v2521
        %vm2532 = vcmp.eq.f32.partialorder %v2531, 8.507059e+37
        %v2533 = vand.u32 %v2521, 2147483648
        %v2534 = vor.u32 1.1754944e-38, %v2533
        %v2535 = vsel %vm2532, %v2534, %v2530
        %v2536 = vmul.f32 1.0, %v2535
        %v2537 = vadd.f32 %v2455, %v2495
        %v2538 = vxor.u32 %v2537, 2147483648
        %v2539 = vmul.f32 %v2538, 1.442695
        %v2540 = vpow.pop %v2539
        %v2541 = vadd.f32 %v2540, 1.0
        %v2542 = vrcp.pop %v2541
        %v2543 = vmul.f32 %v2541, %v2542
        %v2544 = vsub.f32 1.0, %v2543
        %v2545 = vmul.f32 %v2542, %v2544
        %v2546 = vadd.f32 %v2542, %v2545
        %vm2547 = vweird.f32 %v2541
        %vm2548 = vweird.f32 %v2542
        %vm2549 = vmor %vm2547, %vm2548
        %v2550 = vsel %vm2549, %v2542, %v2546
        %v2551 = vand.u32 2147483647, %v2541
        %vm2552 = vcmp.eq.f32.partialorder %v2551, 8.507059e+37
        %v2553 = vand.u32 %v2541, 2147483648
        %v2554 = vor.u32 1.1754944e-38, %v2553
        %v2555 = vsel %vm2552, %v2554, %v2550
        %v2556 = vmul.f32 1.0, %v2555
        %v2557 = vadd.f32 %v2515, %v1219
        %v2558 = vmul.f32 %v2536, %v2557
        %v2559 = vadd.f32 %v2456, %v2558
        %v2560 = vtanh.pop %v2559
        %v2561 = vsub.f32 1.0, %v2556
        %v2562 = vmul.f32 %v2561, %v2560
        %v2563 = vmul.f32 %v2556, %v2452
        %v2564 = vadd.f32 %v2562, %v2563
        %s2565 = scalar_lea.vmem [#allocation3], 288
        %v2566 = vld [vmem:[%s2565] sm:$0xff]
        %v2567 = vld [vmem:[%s2565 + $0x8] sm:$0xff]
        %v2568 = vld [vmem:[%s2565 + $0x10] sm:$0xff]
        %2569 = vmatpush.msra.mxu0 %v1214
        %2570 = vmatpush.msra.mxu0 %v1211
        %2571 = vmatpush.msra.mxu0 %v1208
        %2572 = vmatpush.msra.mxu0 %v1205
        %2573 = vmatpush.msra.mxu0 %v1202
        %2574 = vmatpush.msra.mxu0 %v1199
        %2575 = vmatpush.msra.mxu0 %v1196
        %2576 = vmatpush.msra.mxu0 %v1193
        %2577 = vmatpush.msra.mxu0 %v1190
        %2578 = vmatpush.msra.mxu0 %v1187
        %2579 = vmatpush.msra.mxu0 %v1184
        %2580 = vmatpush.msra.mxu0 %v1181
        %2581 = vmatpush.msra.mxu0 %v1178
        %2582 = vmatpush.msra.mxu0 %v1175
        %2583 = vmatpush.msra.mxu0 %v1172
        %2584 = vmatpush.msra.mxu0 %v1169
        %2585 = vmatmul.f32.gmra.mxu0 %v2564
        %v2586 = vpop.f32.mrf.mxu0
        %v2587 = vadd.f32 0.0, %v2586
        %2588 = vdwg.mxu0
        %2589 = vmatpush.msra.mxu0 %v1215
        %2590 = vmatpush.msra.mxu0 %v1212
        %2591 = vmatpush.msra.mxu0 %v1209
        %2592 = vmatpush.msra.mxu0 %v1206
        %2593 = vmatpush.msra.mxu0 %v1203
        %2594 = vmatpush.msra.mxu0 %v1200
        %2595 = vmatpush.msra.mxu0 %v1197
        %2596 = vmatpush.msra.mxu0 %v1194
        %2597 = vmatpush.msra.mxu0 %v1191
        %2598 = vmatpush.msra.mxu0 %v1188
        %2599 = vmatpush.msra.mxu0 %v1185
        %2600 = vmatpush.msra.mxu0 %v1182
        %2601 = vmatpush.msra.mxu0 %v1179
        %2602 = vmatpush.msra.mxu0 %v1176
        %2603 = vmatpush.msra.mxu0 %v1173
        %2604 = vmatpush.msra.mxu0 %v1170
        %2605 = vmatmul.f32.gmra.mxu0 %v2564
        %v2606 = vpop.f32.mrf.mxu0
        %v2607 = vadd.f32 0.0, %v2606
        %2608 = vdwg.mxu0
        %2609 = vmatpush.msra.mxu0 %v1216
        %2610 = vmatpush.msra.mxu0 %v1213
        %2611 = vmatpush.msra.mxu0 %v1210
        %2612 = vmatpush.msra.mxu0 %v1207
        %2613 = vmatpush.msra.mxu0 %v1204
        %2614 = vmatpush.msra.mxu0 %v1201
        %2615 = vmatpush.msra.mxu0 %v1198
        %2616 = vmatpush.msra.mxu0 %v1195
        %2617 = vmatpush.msra.mxu0 %v1192
        %2618 = vmatpush.msra.mxu0 %v1189
        %2619 = vmatpush.msra.mxu0 %v1186
        %2620 = vmatpush.msra.mxu0 %v1183
        %2621 = vmatpush.msra.mxu0 %v1180
        %2622 = vmatpush.msra.mxu0 %v1177
        %2623 = vmatpush.msra.mxu0 %v1174
        %2624 = vmatpush.msra.mxu0 %v1171
        %2625 = vmatmul.f32.gmra.mxu0 %v2564
        %v2626 = vpop.f32.mrf.mxu0
        %v2627 = vadd.f32 0.0, %v2626
        %2628 = vdwg.mxu0
        %v2629 = vadd.f32 %v2566, %v2587
        %v2630 = vxor.u32 %v2629, 2147483648
        %v2631 = vmul.f32 %v2630, 1.442695
        %v2632 = vpow.pop %v2631
        %v2633 = vadd.f32 %v2632, 1.0
        %v2634 = vrcp.pop %v2633
        %v2635 = vmul.f32 %v2633, %v2634
        %v2636 = vsub.f32 1.0, %v2635
        %v2637 = vmul.f32 %v2634, %v2636
        %v2638 = vadd.f32 %v2634, %v2637
        %vm2639 = vweird.f32 %v2633
        %vm2640 = vweird.f32 %v2634
        %vm2641 = vmor %vm2639, %vm2640
        %v2642 = vsel %vm2641, %v2634, %v2638
        %v2643 = vand.u32 2147483647, %v2633
        %vm2644 = vcmp.eq.f32.partialorder %v2643, 8.507059e+37
        %v2645 = vand.u32 %v2633, 2147483648
        %v2646 = vor.u32 1.1754944e-38, %v2645
        %v2647 = vsel %vm2644, %v2646, %v2642
        %v2648 = vmul.f32 1.0, %v2647
        %v2649 = vadd.f32 %v2567, %v2607
        %v2650 = vxor.u32 %v2649, 2147483648
        %v2651 = vmul.f32 %v2650, 1.442695
        %v2652 = vpow.pop %v2651
        %v2653 = vadd.f32 %v2652, 1.0
        %v2654 = vrcp.pop %v2653
        %v2655 = vmul.f32 %v2653, %v2654
        %v2656 = vsub.f32 1.0, %v2655
        %v2657 = vmul.f32 %v2654, %v2656
        %v2658 = vadd.f32 %v2654, %v2657
        %vm2659 = vweird.f32 %v2653
        %vm2660 = vweird.f32 %v2654
        %vm2661 = vmor %vm2659, %vm2660
        %v2662 = vsel %vm2661, %v2654, %v2658
        %v2663 = vand.u32 2147483647, %v2653
        %vm2664 = vcmp.eq.f32.partialorder %v2663, 8.507059e+37
        %v2665 = vand.u32 %v2653, 2147483648
        %v2666 = vor.u32 1.1754944e-38, %v2665
        %v2667 = vsel %vm2664, %v2666, %v2662
        %v2668 = vmul.f32 1.0, %v2667
        %v2669 = vadd.f32 %v2627, %v1219
        %v2670 = vmul.f32 %v2648, %v2669
        %v2671 = vadd.f32 %v2568, %v2670
        %v2672 = vtanh.pop %v2671
        %v2673 = vsub.f32 1.0, %v2668
        %v2674 = vmul.f32 %v2673, %v2672
        %v2675 = vmul.f32 %v2668, %v2564
        %v2676 = vadd.f32 %v2674, %v2675
        %s2677 = scalar_lea.vmem [#allocation3], 312
        %v2678 = vld [vmem:[%s2677] sm:$0xff]
        %v2679 = vld [vmem:[%s2677 + $0x8] sm:$0xff]
        %v2680 = vld [vmem:[%s2677 + $0x10] sm:$0xff]
        %2681 = vmatpush.msra.mxu0 %v1214
        %2682 = vmatpush.msra.mxu0 %v1211
        %2683 = vmatpush.msra.mxu0 %v1208
        %2684 = vmatpush.msra.mxu0 %v1205
        %2685 = vmatpush.msra.mxu0 %v1202
        %2686 = vmatpush.msra.mxu0 %v1199
        %2687 = vmatpush.msra.mxu0 %v1196
        %2688 = vmatpush.msra.mxu0 %v1193
        %2689 = vmatpush.msra.mxu0 %v1190
        %2690 = vmatpush.msra.mxu0 %v1187
        %2691 = vmatpush.msra.mxu0 %v1184
        %2692 = vmatpush.msra.mxu0 %v1181
        %2693 = vmatpush.msra.mxu0 %v1178
        %2694 = vmatpush.msra.mxu0 %v1175
        %2695 = vmatpush.msra.mxu0 %v1172
        %2696 = vmatpush.msra.mxu0 %v1169
        %2697 = vmatmul.f32.gmra.mxu0 %v2676
        %v2698 = vpop.f32.mrf.mxu0
        %v2699 = vadd.f32 0.0, %v2698
        %2700 = vdwg.mxu0
        %2701 = vmatpush.msra.mxu0 %v1215
        %2702 = vmatpush.msra.mxu0 %v1212
        %2703 = vmatpush.msra.mxu0 %v1209
        %2704 = vmatpush.msra.mxu0 %v1206
        %2705 = vmatpush.msra.mxu0 %v1203
        %2706 = vmatpush.msra.mxu0 %v1200
        %2707 = vmatpush.msra.mxu0 %v1197
        %2708 = vmatpush.msra.mxu0 %v1194
        %2709 = vmatpush.msra.mxu0 %v1191
        %2710 = vmatpush.msra.mxu0 %v1188
        %2711 = vmatpush.msra.mxu0 %v1185
        %2712 = vmatpush.msra.mxu0 %v1182
        %2713 = vmatpush.msra.mxu0 %v1179
        %2714 = vmatpush.msra.mxu0 %v1176
        %2715 = vmatpush.msra.mxu0 %v1173
        %2716 = vmatpush.msra.mxu0 %v1170
        %2717 = vmatmul.f32.gmra.mxu0 %v2676
        %v2718 = vpop.f32.mrf.mxu0
        %v2719 = vadd.f32 0.0, %v2718
        %2720 = vdwg.mxu0
        %2721 = vmatpush.msra.mxu0 %v1216
        %2722 = vmatpush.msra.mxu0 %v1213
        %2723 = vmatpush.msra.mxu0 %v1210
        %2724 = vmatpush.msra.mxu0 %v1207
        %2725 = vmatpush.msra.mxu0 %v1204
        %2726 = vmatpush.msra.mxu0 %v1201
        %2727 = vmatpush.msra.mxu0 %v1198
        %2728 = vmatpush.msra.mxu0 %v1195
        %2729 = vmatpush.msra.mxu0 %v1192
        %2730 = vmatpush.msra.mxu0 %v1189
        %2731 = vmatpush.msra.mxu0 %v1186
        %2732 = vmatpush.msra.mxu0 %v1183
        %2733 = vmatpush.msra.mxu0 %v1180
        %2734 = vmatpush.msra.mxu0 %v1177
        %2735 = vmatpush.msra.mxu0 %v1174
        %2736 = vmatpush.msra.mxu0 %v1171
        %2737 = vmatmul.f32.gmra.mxu0 %v2676
        %v2738 = vpop.f32.mrf.mxu0
        %v2739 = vadd.f32 0.0, %v2738
        %2740 = vdwg.mxu0
        %v2741 = vadd.f32 %v2678, %v2699
        %v2742 = vxor.u32 %v2741, 2147483648
        %v2743 = vmul.f32 %v2742, 1.442695
        %v2744 = vpow.pop %v2743
        %v2745 = vadd.f32 %v2744, 1.0
        %v2746 = vrcp.pop %v2745
        %v2747 = vmul.f32 %v2745, %v2746
        %v2748 = vsub.f32 1.0, %v2747
        %v2749 = vmul.f32 %v2746, %v2748
        %v2750 = vadd.f32 %v2746, %v2749
        %vm2751 = vweird.f32 %v2745
        %vm2752 = vweird.f32 %v2746
        %vm2753 = vmor %vm2751, %vm2752
        %v2754 = vsel %vm2753, %v2746, %v2750
        %v2755 = vand.u32 2147483647, %v2745
        %vm2756 = vcmp.eq.f32.partialorder %v2755, 8.507059e+37
        %v2757 = vand.u32 %v2745, 2147483648
        %v2758 = vor.u32 1.1754944e-38, %v2757
        %v2759 = vsel %vm2756, %v2758, %v2754
        %v2760 = vmul.f32 1.0, %v2759
        %v2761 = vadd.f32 %v2679, %v2719
        %v2762 = vxor.u32 %v2761, 2147483648
        %v2763 = vmul.f32 %v2762, 1.442695
        %v2764 = vpow.pop %v2763
        %v2765 = vadd.f32 %v2764, 1.0
        %v2766 = vrcp.pop %v2765
        %v2767 = vmul.f32 %v2765, %v2766
        %v2768 = vsub.f32 1.0, %v2767
        %v2769 = vmul.f32 %v2766, %v2768
        %v2770 = vadd.f32 %v2766, %v2769
        %vm2771 = vweird.f32 %v2765
        %vm2772 = vweird.f32 %v2766
        %vm2773 = vmor %vm2771, %vm2772
        %v2774 = vsel %vm2773, %v2766, %v2770
        %v2775 = vand.u32 2147483647, %v2765
        %vm2776 = vcmp.eq.f32.partialorder %v2775, 8.507059e+37
        %v2777 = vand.u32 %v2765, 2147483648
        %v2778 = vor.u32 1.1754944e-38, %v2777
        %v2779 = vsel %vm2776, %v2778, %v2774
        %v2780 = vmul.f32 1.0, %v2779
        %v2781 = vadd.f32 %v2739, %v1219
        %v2782 = vmul.f32 %v2760, %v2781
        %v2783 = vadd.f32 %v2680, %v2782
        %v2784 = vtanh.pop %v2783
        %v2785 = vsub.f32 1.0, %v2780
        %v2786 = vmul.f32 %v2785, %v2784
        %v2787 = vmul.f32 %v2780, %v2676
        %v2788 = vadd.f32 %v2786, %v2787
        %s2789 = scalar_lea.vmem [#allocation3], 336
        %v2790 = vld [vmem:[%s2789] sm:$0xff]
        %v2791 = vld [vmem:[%s2789 + $0x8] sm:$0xff]
        %v2792 = vld [vmem:[%s2789 + $0x10] sm:$0xff]
        %2793 = vmatpush.msra.mxu0 %v1214
        %2794 = vmatpush.msra.mxu0 %v1211
        %2795 = vmatpush.msra.mxu0 %v1208
        %2796 = vmatpush.msra.mxu0 %v1205
        %2797 = vmatpush.msra.mxu0 %v1202
        %2798 = vmatpush.msra.mxu0 %v1199
        %2799 = vmatpush.msra.mxu0 %v1196
        %2800 = vmatpush.msra.mxu0 %v1193
        %2801 = vmatpush.msra.mxu0 %v1190
        %2802 = vmatpush.msra.mxu0 %v1187
        %2803 = vmatpush.msra.mxu0 %v1184
        %2804 = vmatpush.msra.mxu0 %v1181
        %2805 = vmatpush.msra.mxu0 %v1178
        %2806 = vmatpush.msra.mxu0 %v1175
        %2807 = vmatpush.msra.mxu0 %v1172
        %2808 = vmatpush.msra.mxu0 %v1169
        %2809 = vmatmul.f32.gmra.mxu0 %v2788
        %v2810 = vpop.f32.mrf.mxu0
        %v2811 = vadd.f32 0.0, %v2810
        %2812 = vdwg.mxu0
        %2813 = vmatpush.msra.mxu0 %v1215
        %2814 = vmatpush.msra.mxu0 %v1212
        %2815 = vmatpush.msra.mxu0 %v1209
        %2816 = vmatpush.msra.mxu0 %v1206
        %2817 = vmatpush.msra.mxu0 %v1203
        %2818 = vmatpush.msra.mxu0 %v1200
        %2819 = vmatpush.msra.mxu0 %v1197
        %2820 = vmatpush.msra.mxu0 %v1194
        %2821 = vmatpush.msra.mxu0 %v1191
        %2822 = vmatpush.msra.mxu0 %v1188
        %2823 = vmatpush.msra.mxu0 %v1185
        %2824 = vmatpush.msra.mxu0 %v1182
        %2825 = vmatpush.msra.mxu0 %v1179
        %2826 = vmatpush.msra.mxu0 %v1176
        %2827 = vmatpush.msra.mxu0 %v1173
        %2828 = vmatpush.msra.mxu0 %v1170
        %2829 = vmatmul.f32.gmra.mxu0 %v2788
        %v2830 = vpop.f32.mrf.mxu0
        %v2831 = vadd.f32 0.0, %v2830
        %2832 = vdwg.mxu0
        %2833 = vmatpush.msra.mxu0 %v1216
        %2834 = vmatpush.msra.mxu0 %v1213
        %2835 = vmatpush.msra.mxu0 %v1210
        %2836 = vmatpush.msra.mxu0 %v1207
        %2837 = vmatpush.msra.mxu0 %v1204
        %2838 = vmatpush.msra.mxu0 %v1201
        %2839 = vmatpush.msra.mxu0 %v1198
        %2840 = vmatpush.msra.mxu0 %v1195
        %2841 = vmatpush.msra.mxu0 %v1192
        %2842 = vmatpush.msra.mxu0 %v1189
        %2843 = vmatpush.msra.mxu0 %v1186
        %2844 = vmatpush.msra.mxu0 %v1183
        %2845 = vmatpush.msra.mxu0 %v1180
        %2846 = vmatpush.msra.mxu0 %v1177
        %2847 = vmatpush.msra.mxu0 %v1174
        %2848 = vmatpush.msra.mxu0 %v1171
        %2849 = vmatmul.f32.gmra.mxu0 %v2788
        %v2850 = vpop.f32.mrf.mxu0
        %v2851 = vadd.f32 0.0, %v2850
        %2852 = vdwg.mxu0
        %v2853 = vadd.f32 %v2790, %v2811
        %v2854 = vxor.u32 %v2853, 2147483648
        %v2855 = vmul.f32 %v2854, 1.442695
        %v2856 = vpow.pop %v2855
        %v2857 = vadd.f32 %v2856, 1.0
        %v2858 = vrcp.pop %v2857
        %v2859 = vmul.f32 %v2857, %v2858
        %v2860 = vsub.f32 1.0, %v2859
        %v2861 = vmul.f32 %v2858, %v2860
        %v2862 = vadd.f32 %v2858, %v2861
        %vm2863 = vweird.f32 %v2857
        %vm2864 = vweird.f32 %v2858
        %vm2865 = vmor %vm2863, %vm2864
        %v2866 = vsel %vm2865, %v2858, %v2862
        %v2867 = vand.u32 2147483647, %v2857
        %vm2868 = vcmp.eq.f32.partialorder %v2867, 8.507059e+37
        %v2869 = vand.u32 %v2857, 2147483648
        %v2870 = vor.u32 1.1754944e-38, %v2869
        %v2871 = vsel %vm2868, %v2870, %v2866
        %v2872 = vmul.f32 1.0, %v2871
        %v2873 = vadd.f32 %v2791, %v2831
        %v2874 = vxor.u32 %v2873, 2147483648
        %v2875 = vmul.f32 %v2874, 1.442695
        %v2876 = vpow.pop %v2875
        %v2877 = vadd.f32 %v2876, 1.0
        %v2878 = vrcp.pop %v2877
        %v2879 = vmul.f32 %v2877, %v2878
        %v2880 = vsub.f32 1.0, %v2879
        %v2881 = vmul.f32 %v2878, %v2880
        %v2882 = vadd.f32 %v2878, %v2881
        %vm2883 = vweird.f32 %v2877
        %vm2884 = vweird.f32 %v2878
        %vm2885 = vmor %vm2883, %vm2884
        %v2886 = vsel %vm2885, %v2878, %v2882
        %v2887 = vand.u32 2147483647, %v2877
        %vm2888 = vcmp.eq.f32.partialorder %v2887, 8.507059e+37
        %v2889 = vand.u32 %v2877, 2147483648
        %v2890 = vor.u32 1.1754944e-38, %v2889
        %v2891 = vsel %vm2888, %v2890, %v2886
        %v2892 = vmul.f32 1.0, %v2891
        %v2893 = vadd.f32 %v2851, %v1219
        %v2894 = vmul.f32 %v2872, %v2893
        %v2895 = vadd.f32 %v2792, %v2894
        %v2896 = vtanh.pop %v2895
        %v2897 = vsub.f32 1.0, %v2892
        %v2898 = vmul.f32 %v2897, %v2896
        %v2899 = vmul.f32 %v2892, %v2788
        %v2900 = vadd.f32 %v2898, %v2899
        %s2901 = scalar_lea.vmem [#allocation3], 360
        %v2902 = vld [vmem:[%s2901] sm:$0xff]
        %v2903 = vld [vmem:[%s2901 + $0x8] sm:$0xff]
        %v2904 = vld [vmem:[%s2901 + $0x10] sm:$0xff]
        %2905 = vmatpush.msra.mxu0 %v1214
        %2906 = vmatpush.msra.mxu0 %v1211
        %2907 = vmatpush.msra.mxu0 %v1208
        %2908 = vmatpush.msra.mxu0 %v1205
        %2909 = vmatpush.msra.mxu0 %v1202
        %2910 = vmatpush.msra.mxu0 %v1199
        %2911 = vmatpush.msra.mxu0 %v1196
        %2912 = vmatpush.msra.mxu0 %v1193
        %2913 = vmatpush.msra.mxu0 %v1190
        %2914 = vmatpush.msra.mxu0 %v1187
        %2915 = vmatpush.msra.mxu0 %v1184
        %2916 = vmatpush.msra.mxu0 %v1181
        %2917 = vmatpush.msra.mxu0 %v1178
        %2918 = vmatpush.msra.mxu0 %v1175
        %2919 = vmatpush.msra.mxu0 %v1172
        %2920 = vmatpush.msra.mxu0 %v1169
        %2921 = vmatmul.f32.gmra.mxu0 %v2900
        %v2922 = vpop.f32.mrf.mxu0
        %v2923 = vadd.f32 0.0, %v2922
        %2924 = vdwg.mxu0
        %2925 = vmatpush.msra.mxu0 %v1215
        %2926 = vmatpush.msra.mxu0 %v1212
        %2927 = vmatpush.msra.mxu0 %v1209
        %2928 = vmatpush.msra.mxu0 %v1206
        %2929 = vmatpush.msra.mxu0 %v1203
        %2930 = vmatpush.msra.mxu0 %v1200
        %2931 = vmatpush.msra.mxu0 %v1197
        %2932 = vmatpush.msra.mxu0 %v1194
        %2933 = vmatpush.msra.mxu0 %v1191
        %2934 = vmatpush.msra.mxu0 %v1188
        %2935 = vmatpush.msra.mxu0 %v1185
        %2936 = vmatpush.msra.mxu0 %v1182
        %2937 = vmatpush.msra.mxu0 %v1179
        %2938 = vmatpush.msra.mxu0 %v1176
        %2939 = vmatpush.msra.mxu0 %v1173
        %2940 = vmatpush.msra.mxu0 %v1170
        %2941 = vmatmul.f32.gmra.mxu0 %v2900
        %v2942 = vpop.f32.mrf.mxu0
        %v2943 = vadd.f32 0.0, %v2942
        %2944 = vdwg.mxu0
        %2945 = vmatpush.msra.mxu0 %v1216
        %2946 = vmatpush.msra.mxu0 %v1213
        %2947 = vmatpush.msra.mxu0 %v1210
        %2948 = vmatpush.msra.mxu0 %v1207
        %2949 = vmatpush.msra.mxu0 %v1204
        %2950 = vmatpush.msra.mxu0 %v1201
        %2951 = vmatpush.msra.mxu0 %v1198
        %2952 = vmatpush.msra.mxu0 %v1195
        %2953 = vmatpush.msra.mxu0 %v1192
        %2954 = vmatpush.msra.mxu0 %v1189
        %2955 = vmatpush.msra.mxu0 %v1186
        %2956 = vmatpush.msra.mxu0 %v1183
        %2957 = vmatpush.msra.mxu0 %v1180
        %2958 = vmatpush.msra.mxu0 %v1177
        %2959 = vmatpush.msra.mxu0 %v1174
        %2960 = vmatpush.msra.mxu0 %v1171
        %2961 = vmatmul.f32.gmra.mxu0 %v2900
        %v2962 = vpop.f32.mrf.mxu0
        %v2963 = vadd.f32 0.0, %v2962
        %2964 = vdwg.mxu0
        %v2965 = vadd.f32 %v2902, %v2923
        %v2966 = vxor.u32 %v2965, 2147483648
        %v2967 = vmul.f32 %v2966, 1.442695
        %v2968 = vpow.pop %v2967
        %v2969 = vadd.f32 %v2968, 1.0
        %v2970 = vrcp.pop %v2969
        %v2971 = vmul.f32 %v2969, %v2970
        %v2972 = vsub.f32 1.0, %v2971
        %v2973 = vmul.f32 %v2970, %v2972
        %v2974 = vadd.f32 %v2970, %v2973
        %vm2975 = vweird.f32 %v2969
        %vm2976 = vweird.f32 %v2970
        %vm2977 = vmor %vm2975, %vm2976
        %v2978 = vsel %vm2977, %v2970, %v2974
        %v2979 = vand.u32 2147483647, %v2969
        %vm2980 = vcmp.eq.f32.partialorder %v2979, 8.507059e+37
        %v2981 = vand.u32 %v2969, 2147483648
        %v2982 = vor.u32 1.1754944e-38, %v2981
        %v2983 = vsel %vm2980, %v2982, %v2978
        %v2984 = vmul.f32 1.0, %v2983
        %v2985 = vadd.f32 %v2903, %v2943
        %v2986 = vxor.u32 %v2985, 2147483648
        %v2987 = vmul.f32 %v2986, 1.442695
        %v2988 = vpow.pop %v2987
        %v2989 = vadd.f32 %v2988, 1.0
        %v2990 = vrcp.pop %v2989
        %v2991 = vmul.f32 %v2989, %v2990
        %v2992 = vsub.f32 1.0, %v2991
        %v2993 = vmul.f32 %v2990, %v2992
        %v2994 = vadd.f32 %v2990, %v2993
        %vm2995 = vweird.f32 %v2989
        %vm2996 = vweird.f32 %v2990
        %vm2997 = vmor %vm2995, %vm2996
        %v2998 = vsel %vm2997, %v2990, %v2994
        %v2999 = vand.u32 2147483647, %v2989
        %vm3000 = vcmp.eq.f32.partialorder %v2999, 8.507059e+37
        %v3001 = vand.u32 %v2989, 2147483648
        %v3002 = vor.u32 1.1754944e-38, %v3001
        %v3003 = vsel %vm3000, %v3002, %v2998
        %v3004 = vmul.f32 1.0, %v3003
        %v3005 = vadd.f32 %v2963, %v1219
        %v3006 = vmul.f32 %v2984, %v3005
        %v3007 = vadd.f32 %v2904, %v3006
        %v3008 = vtanh.pop %v3007
        %v3009 = vsub.f32 1.0, %v3004
        %v3010 = vmul.f32 %v3009, %v3008
        %v3011 = vmul.f32 %v3004, %v2900
        %v3012 = vadd.f32 %v3010, %v3011
        %3013 = vst [vmem:[#allocation2] sm:$0xff] %v3012
        %s3014 = smul.u32 %s683, 16
        %v3015 = vld [vmem:[%s1] sm:$0xff]
        %v3016 = vstv %s3014
        %vm3017 = vcmp.lt.s32.totalorder %v3016, %v3015
        %s3018 = sadd.s32 %s3014, 1
        %v3019 = vstv %s3018
        %vm3020 = vcmp.lt.s32.totalorder %v3019, %v3015
        %s3021 = sadd.s32 %s3014, 2
        %v3022 = vstv %s3021
        %vm3023 = vcmp.lt.s32.totalorder %v3022, %v3015
        %s3024 = sadd.s32 %s3014, 3
        %v3025 = vstv %s3024
        %vm3026 = vcmp.lt.s32.totalorder %v3025, %v3015
        %s3027 = sadd.s32 %s3014, 4
        %v3028 = vstv %s3027
        %vm3029 = vcmp.lt.s32.totalorder %v3028, %v3015
        %s3030 = sadd.s32 %s3014, 5
        %v3031 = vstv %s3030
        %vm3032 = vcmp.lt.s32.totalorder %v3031, %v3015
        %s3033 = sadd.s32 %s3014, 6
        %v3034 = vstv %s3033
        %vm3035 = vcmp.lt.s32.totalorder %v3034, %v3015
        %s3036 = sadd.s32 %s3014, 7
        %v3037 = vstv %s3036
        %vm3038 = vcmp.lt.s32.totalorder %v3037, %v3015
        %s3039 = sadd.s32 %s3014, 8
        %v3040 = vstv %s3039
        %vm3041 = vcmp.lt.s32.totalorder %v3040, %v3015
        %s3042 = sadd.s32 %s3014, 9
        %v3043 = vstv %s3042
        %vm3044 = vcmp.lt.s32.totalorder %v3043, %v3015
        %s3045 = sadd.s32 %s3014, 10
        %v3046 = vstv %s3045
        %vm3047 = vcmp.lt.s32.totalorder %v3046, %v3015
        %s3048 = sadd.s32 %s3014, 11
        %v3049 = vstv %s3048
        %vm3050 = vcmp.lt.s32.totalorder %v3049, %v3015
        %s3051 = sadd.s32 %s3014, 12
        %v3052 = vstv %s3051
        %vm3053 = vcmp.lt.s32.totalorder %v3052, %v3015
        %s3054 = sadd.s32 %s3014, 13
        %v3055 = vstv %s3054
        %vm3056 = vcmp.lt.s32.totalorder %v3055, %v3015
        %s3057 = sadd.s32 %s3014, 14
        %v3058 = vstv %s3057
        %vm3059 = vcmp.lt.s32.totalorder %v3058, %v3015
        %s3060 = sadd.s32 %s3014, 15
        %v3061 = vstv %s3060
        %vm3062 = vcmp.lt.s32.totalorder %v3061, %v3015
        %v3063 = vsel %vm3017, 1, 0
        %v3064 = vsel %vm3020, 1, 0
        %v3065 = vsel %vm3023, 1, 0
        %v3066 = vsel %vm3026, 1, 0
        %v3067 = vsel %vm3029, 1, 0
        %v3068 = vsel %vm3032, 1, 0
        %v3069 = vsel %vm3035, 1, 0
        %v3070 = vsel %vm3038, 1, 0
        %v3071 = vsel %vm3041, 1, 0
        %v3072 = vsel %vm3044, 1, 0
        %v3073 = vsel %vm3047, 1, 0
        %v3074 = vsel %vm3050, 1, 0
        %v3075 = vsel %vm3053, 1, 0
        %v3076 = vsel %vm3056, 1, 0
        %v3077 = vsel %vm3059, 1, 0
        %v3078 = vsel %vm3062, 1, 0
        %v3079 = vcvt.s32.f32 %v3063
        %v3080 = vcvt.s32.f32 %v3064
        %v3081 = vcvt.s32.f32 %v3065
        %v3082 = vcvt.s32.f32 %v3066
        %v3083 = vcvt.s32.f32 %v3067
        %v3084 = vcvt.s32.f32 %v3068
        %v3085 = vcvt.s32.f32 %v3069
        %v3086 = vcvt.s32.f32 %v3070
        %v3087 = vcvt.s32.f32 %v3071
        %v3088 = vcvt.s32.f32 %v3072
        %v3089 = vcvt.s32.f32 %v3073
        %v3090 = vcvt.s32.f32 %v3074
        %v3091 = vcvt.s32.f32 %v3075
        %v3092 = vcvt.s32.f32 %v3076
        %v3093 = vcvt.s32.f32 %v3077
        %v3094 = vcvt.s32.f32 %v3078
        %3096 = vset.pattern.permute.xlu0 0
        %3097 = vperm.xlu0 %3096, %v3079
        %v3098 = vpop.permute.xlu0 %3097
        %3101 = vset.pattern.permute.xlu0 0
        %3102 = vperm.xlu0 %3101, %v3080
        %v3103 = vpop.permute.xlu0 %3102
        %3106 = vset.pattern.permute.xlu0 0
        %3107 = vperm.xlu0 %3106, %v3081
        %v3108 = vpop.permute.xlu0 %3107
        %3111 = vset.pattern.permute.xlu0 0
        %3112 = vperm.xlu0 %3111, %v3082
        %v3113 = vpop.permute.xlu0 %3112
        %3116 = vset.pattern.permute.xlu0 0
        %3117 = vperm.xlu0 %3116, %v3083
        %v3118 = vpop.permute.xlu0 %3117
        %3121 = vset.pattern.permute.xlu0 0
        %3122 = vperm.xlu0 %3121, %v3084
        %v3123 = vpop.permute.xlu0 %3122
        %3126 = vset.pattern.permute.xlu0 0
        %3127 = vperm.xlu0 %3126, %v3085
        %v3128 = vpop.permute.xlu0 %3127
        %3131 = vset.pattern.permute.xlu0 0
        %3132 = vperm.xlu0 %3131, %v3086
        %v3133 = vpop.permute.xlu0 %3132
        %3136 = vset.pattern.permute.xlu0 0
        %3137 = vperm.xlu0 %3136, %v3087
        %v3138 = vpop.permute.xlu0 %3137
        %3141 = vset.pattern.permute.xlu0 0
        %3142 = vperm.xlu0 %3141, %v3088
        %v3143 = vpop.permute.xlu0 %3142
        %3146 = vset.pattern.permute.xlu0 0
        %3147 = vperm.xlu0 %3146, %v3089
        %v3148 = vpop.permute.xlu0 %3147
        %3151 = vset.pattern.permute.xlu0 0
        %3152 = vperm.xlu0 %3151, %v3090
        %v3153 = vpop.permute.xlu0 %3152
        %3156 = vset.pattern.permute.xlu0 0
        %3157 = vperm.xlu0 %3156, %v3091
        %v3158 = vpop.permute.xlu0 %3157
        %3161 = vset.pattern.permute.xlu0 0
        %3162 = vperm.xlu0 %3161, %v3092
        %v3163 = vpop.permute.xlu0 %3162
        %3166 = vset.pattern.permute.xlu0 0
        %3167 = vperm.xlu0 %3166, %v3093
        %v3168 = vpop.permute.xlu0 %3167
        %3171 = vset.pattern.permute.xlu0 0
        %3172 = vperm.xlu0 %3171, %v3094
        %v3173 = vpop.permute.xlu0 %3172
        %v3175 = vmul.f32 %v1332, %v3098
        %v3176 = vmul.f32 %v1444, %v3103
        %v3177 = vmul.f32 %v1556, %v3108
        %v3178 = vmul.f32 %v1668, %v3113
        %v3179 = vmul.f32 %v1780, %v3118
        %v3180 = vmul.f32 %v1892, %v3123
        %v3181 = vmul.f32 %v2004, %v3128
        %v3182 = vmul.f32 %v2116, %v3133
        %v3183 = vmul.f32 %v2228, %v3138
        %v3184 = vmul.f32 %v2340, %v3143
        %v3185 = vmul.f32 %v2452, %v3148
        %v3186 = vmul.f32 %v2564, %v3153
        %v3187 = vmul.f32 %v2676, %v3158
        %v3188 = vmul.f32 %v2788, %v3163
        %v3189 = vmul.f32 %v2900, %v3168
        %v3190 = vmul.f32 %v3012, %v3173
        %s3191 = smul.u32 %s579, 128
        %s3192 = scalar_lea.vmem [#allocation4], %s3191
        %3193 = vst [vmem:[%s3192] sm:$0xff] %v3175
        %3194 = vst [vmem:[%s3192 + $0x8] sm:$0xff] %v3176
        %3195 = vst [vmem:[%s3192 + $0x10] sm:$0xff] %v3177
        %3196 = vst [vmem:[%s3192 + $0x18] sm:$0xff] %v3178
        %3197 = vst [vmem:[%s3192 + $0x20] sm:$0xff] %v3179
        %3198 = vst [vmem:[%s3192 + $0x28] sm:$0xff] %v3180
        %3199 = vst [vmem:[%s3192 + $0x30] sm:$0xff] %v3181
        %3200 = vst [vmem:[%s3192 + $0x38] sm:$0xff] %v3182
        %3201 = vst [vmem:[%s3192 + $0x40] sm:$0xff] %v3183
        %3202 = vst [vmem:[%s3192 + $0x48] sm:$0xff] %v3184
        %3203 = vst [vmem:[%s3192 + $0x50] sm:$0xff] %v3185
        %3204 = vst [vmem:[%s3192 + $0x58] sm:$0xff] %v3186
        %3205 = vst [vmem:[%s3192 + $0x60] sm:$0xff] %v3187
        %3206 = vst [vmem:[%s3192 + $0x68] sm:$0xff] %v3188
        %3207 = vst [vmem:[%s3192 + $0x70] sm:$0xff] %v3189
        %3208 = vst [vmem:[%s3192 + $0x78] sm:$0xff] %v3190
        %s3209 = smul.u32 %s580, 128
        %s3210 = scalar_lea.vmem [#allocation4], %s3209
        %v3211 = vld [vmem:[%s3210] sm:$0xff]
        %v3212 = vld [vmem:[%s3210 + $0x8] sm:$0xff]
        %v3213 = vld [vmem:[%s3210 + $0x10] sm:$0xff]
        %v3214 = vld [vmem:[%s3210 + $0x18] sm:$0xff]
        %v3215 = vld [vmem:[%s3210 + $0x20] sm:$0xff]
        %v3216 = vld [vmem:[%s3210 + $0x28] sm:$0xff]
        %v3217 = vld [vmem:[%s3210 + $0x30] sm:$0xff]
        %v3218 = vld [vmem:[%s3210 + $0x38] sm:$0xff]
        %v3219 = vld [vmem:[%s3210 + $0x40] sm:$0xff]
        %v3220 = vld [vmem:[%s3210 + $0x48] sm:$0xff]
        %v3221 = vld [vmem:[%s3210 + $0x50] sm:$0xff]
        %v3222 = vld [vmem:[%s3210 + $0x58] sm:$0xff]
        %v3223 = vld [vmem:[%s3210 + $0x60] sm:$0xff]
        %v3224 = vld [vmem:[%s3210 + $0x68] sm:$0xff]
        %v3225 = vld [vmem:[%s3210 + $0x70] sm:$0xff]
        %v3226 = vld [vmem:[%s3210 + $0x78] sm:$0xff]
        %v3227 = vpack.c.bf16 %v3212, %v3211
        %v3228 = vpack.c.bf16 %v3214, %v3213
        %v3229 = vpack.c.bf16 %v3216, %v3215
        %v3230 = vpack.c.bf16 %v3218, %v3217
        %v3231 = vpack.c.bf16 %v3220, %v3219
        %v3232 = vpack.c.bf16 %v3222, %v3221
        %v3233 = vpack.c.bf16 %v3224, %v3223
        %v3234 = vpack.c.bf16 %v3226, %v3225
        %v3235 = vld [vmem:[#allocation18] sm:$0xff]
        %v3236 = vld [vmem:[#allocation18 + $0x8] sm:$0xff]
        %v3237 = vld [vmem:[#allocation18 + $0x10] sm:$0xff]
        %v3238 = vld [vmem:[#allocation18 + $0x18] sm:$0xff]
        %v3239 = vld [vmem:[#allocation18 + $0x20] sm:$0xff]
        %v3240 = vld [vmem:[#allocation18 + $0x28] sm:$0xff]
        %v3241 = vld [vmem:[#allocation18 + $0x30] sm:$0xff]
        %v3242 = vld [vmem:[#allocation18 + $0x38] sm:$0xff]
        %v3243 = vld [vmem:[#allocation18 + $0x40] sm:$0xff]
        %v3244 = vld [vmem:[#allocation18 + $0x48] sm:$0xff]
        %v3245 = vld [vmem:[#allocation18 + $0x50] sm:$0xff]
        %v3246 = vld [vmem:[#allocation18 + $0x58] sm:$0xff]
        %v3247 = vld [vmem:[#allocation18 + $0x60] sm:$0xff]
        %v3248 = vld [vmem:[#allocation18 + $0x68] sm:$0xff]
        %v3249 = vld [vmem:[#allocation18 + $0x70] sm:$0xff]
        %v3250 = vld [vmem:[#allocation18 + $0x78] sm:$0xff]
        %s3251 = smul.u32 %s580, 32
        %s3252 = smul.addr %s3251, 8
        %s3253 = scalar_lea.vmem [#allocation5], %s3252
        %v3254 = vld [vmem:[%s3253] sm:$0xff]
        %v3255 = vld [vmem:[%s3253 + $0x8] sm:$0xff]
        %v3256 = vld [vmem:[%s3253 + $0x10] sm:$0xff]
        %v3257 = vld [vmem:[%s3253 + $0x18] sm:$0xff]
        %v3258 = vld [vmem:[%s3253 + $0x20] sm:$0xff]
        %v3259 = vld [vmem:[%s3253 + $0x28] sm:$0xff]
        %v3260 = vld [vmem:[%s3253 + $0x30] sm:$0xff]
        %v3261 = vld [vmem:[%s3253 + $0x38] sm:$0xff]
        %v3262 = vld [vmem:[%s3253 + $0x40] sm:$0xff]
        %v3263 = vld [vmem:[%s3253 + $0x48] sm:$0xff]
        %v3264 = vld [vmem:[%s3253 + $0x50] sm:$0xff]
        %v3265 = vld [vmem:[%s3253 + $0x58] sm:$0xff]
        %v3266 = vld [vmem:[%s3253 + $0x60] sm:$0xff]
        %v3267 = vld [vmem:[%s3253 + $0x68] sm:$0xff]
        %v3268 = vld [vmem:[%s3253 + $0x70] sm:$0xff]
        %v3269 = vld [vmem:[%s3253 + $0x78] sm:$0xff]
        %v3270 = vld [vmem:[%s3253 + $0x80] sm:$0xff]
        %v3271 = vld [vmem:[%s3253 + $0x88] sm:$0xff]
        %v3272 = vld [vmem:[%s3253 + $0x90] sm:$0xff]
        %v3273 = vld [vmem:[%s3253 + $0x98] sm:$0xff]
        %v3274 = vld [vmem:[%s3253 + $0xa0] sm:$0xff]
        %v3275 = vld [vmem:[%s3253 + $0xa8] sm:$0xff]
        %v3276 = vld [vmem:[%s3253 + $0xb0] sm:$0xff]
        %v3277 = vld [vmem:[%s3253 + $0xb8] sm:$0xff]
        %v3278 = vld [vmem:[%s3253 + $0xc0] sm:$0xff]
        %v3279 = vld [vmem:[%s3253 + $0xc8] sm:$0xff]
        %v3280 = vld [vmem:[%s3253 + $0xd0] sm:$0xff]
        %v3281 = vld [vmem:[%s3253 + $0xd8] sm:$0xff]
        %v3282 = vld [vmem:[%s3253 + $0xe0] sm:$0xff]
        %v3283 = vld [vmem:[%s3253 + $0xe8] sm:$0xff]
        %v3284 = vld [vmem:[%s3253 + $0xf0] sm:$0xff]
        %v3285 = vld [vmem:[%s3253 + $0xf8] sm:$0xff]
        %v3302 = vunpack.c.l.b16 %v3235
        %v3303 = vunpack.c.h.b16 %v3235
        %v3304 = vunpack.c.l.b16 %v3236
        %v3305 = vunpack.c.h.b16 %v3236
        %v3306 = vunpack.c.l.b16 %v3237
        %v3307 = vunpack.c.h.b16 %v3237
        %v3308 = vunpack.c.l.b16 %v3238
        %v3309 = vunpack.c.h.b16 %v3238
        %v3310 = vunpack.c.l.b16 %v3239
        %v3311 = vunpack.c.h.b16 %v3239
        %v3312 = vunpack.c.l.b16 %v3240
        %v3313 = vunpack.c.h.b16 %v3240
        %v3314 = vunpack.c.l.b16 %v3241
        %v3315 = vunpack.c.h.b16 %v3241
        %v3316 = vunpack.c.l.b16 %v3242
        %v3317 = vunpack.c.h.b16 %v3242
        %v3318 = vunpack.c.l.b16 %v3243
        %v3319 = vunpack.c.h.b16 %v3243
        %v3320 = vunpack.c.l.b16 %v3244
        %v3321 = vunpack.c.h.b16 %v3244
        %v3322 = vunpack.c.l.b16 %v3245
        %v3323 = vunpack.c.h.b16 %v3245
        %v3324 = vunpack.c.l.b16 %v3246
        %v3325 = vunpack.c.h.b16 %v3246
        %v3326 = vunpack.c.l.b16 %v3247
        %v3327 = vunpack.c.h.b16 %v3247
        %v3328 = vunpack.c.l.b16 %v3248
        %v3329 = vunpack.c.h.b16 %v3248
        %v3330 = vunpack.c.l.b16 %v3249
        %v3331 = vunpack.c.h.b16 %v3249
        %v3332 = vunpack.c.l.b16 %v3250
        %v3333 = vunpack.c.h.b16 %v3250
        %v3334 = vpack.c.b16 %v3304, %v3302
        %v3335 = vpack.c.b16 %v3305, %v3303
        %v3336 = vpack.c.b16 %v3308, %v3306
        %v3337 = vpack.c.b16 %v3309, %v3307
        %v3338 = vpack.c.b16 %v3312, %v3310
        %v3339 = vpack.c.b16 %v3313, %v3311
        %v3340 = vpack.c.b16 %v3316, %v3314
        %v3341 = vpack.c.b16 %v3317, %v3315
        %v3342 = vpack.c.b16 %v3320, %v3318
        %v3343 = vpack.c.b16 %v3321, %v3319
        %v3344 = vpack.c.b16 %v3324, %v3322
        %v3345 = vpack.c.b16 %v3325, %v3323
        %v3346 = vpack.c.b16 %v3328, %v3326
        %v3347 = vpack.c.b16 %v3329, %v3327
        %v3348 = vpack.c.b16 %v3332, %v3330
        %v3349 = vpack.c.b16 %v3333, %v3331
        %3366 = vmatpush.bf16.msra.mxu0 %v3348
        %3367 = vmatpush.bf16.msra.mxu0 %v3346
        %3368 = vmatpush.bf16.msra.mxu0 %v3344
        %3369 = vmatpush.bf16.msra.mxu0 %v3342
        %3370 = vmatpush.bf16.msra.mxu0 %v3340
        %3371 = vmatpush.bf16.msra.mxu0 %v3338
        %3372 = vmatpush.bf16.msra.mxu0 %v3336
        %3373 = vmatpush.bf16.msra.mxu0 %v3334
        %3374 = vmatmul.bf16.gmra.mxu0 %v3227
        %v3375 = vpop.f32.mrf.mxu0
        %v3376 = vadd.f32 %v3254, %v3375
        %v3377 = vpop.f32.mrf.mxu0
        %v3378 = vadd.f32 %v3256, %v3377
        %3379 = vmatmul.bf16.gmra.mxu0 %v3228
        %v3380 = vpop.f32.mrf.mxu0
        %v3381 = vadd.f32 %v3258, %v3380
        %v3382 = vpop.f32.mrf.mxu0
        %v3383 = vadd.f32 %v3260, %v3382
        %3384 = vmatmul.bf16.gmra.mxu0 %v3229
        %v3385 = vpop.f32.mrf.mxu0
        %v3386 = vadd.f32 %v3262, %v3385
        %v3387 = vpop.f32.mrf.mxu0
        %v3388 = vadd.f32 %v3264, %v3387
        %3389 = vmatmul.bf16.gmra.mxu0 %v3230
        %v3390 = vpop.f32.mrf.mxu0
        %v3391 = vadd.f32 %v3266, %v3390
        %v3392 = vpop.f32.mrf.mxu0
        %v3393 = vadd.f32 %v3268, %v3392
        %3394 = vmatmul.bf16.gmra.mxu0 %v3231
        %v3395 = vpop.f32.mrf.mxu0
        %v3396 = vadd.f32 %v3270, %v3395
        %v3397 = vpop.f32.mrf.mxu0
        %v3398 = vadd.f32 %v3272, %v3397
        %3399 = vmatmul.bf16.gmra.mxu0 %v3232
        %v3400 = vpop.f32.mrf.mxu0
        %v3401 = vadd.f32 %v3274, %v3400
        %v3402 = vpop.f32.mrf.mxu0
        %v3403 = vadd.f32 %v3276, %v3402
        %3404 = vmatmul.bf16.gmra.mxu0 %v3233
        %v3405 = vpop.f32.mrf.mxu0
        %v3406 = vadd.f32 %v3278, %v3405
        %v3407 = vpop.f32.mrf.mxu0
        %v3408 = vadd.f32 %v3280, %v3407
        %3409 = vmatmul.bf16.gmra.mxu0 %v3234
        %v3410 = vpop.f32.mrf.mxu0
        %v3411 = vadd.f32 %v3282, %v3410
        %v3412 = vpop.f32.mrf.mxu0
        %v3413 = vadd.f32 %v3284, %v3412
        %3414 = vdwg.mxu0
        %3415 = vmatpush.bf16.msra.mxu0 %v3349
        %3416 = vmatpush.bf16.msra.mxu0 %v3347
        %3417 = vmatpush.bf16.msra.mxu0 %v3345
        %3418 = vmatpush.bf16.msra.mxu0 %v3343
        %3419 = vmatpush.bf16.msra.mxu0 %v3341
        %3420 = vmatpush.bf16.msra.mxu0 %v3339
        %3421 = vmatpush.bf16.msra.mxu0 %v3337
        %3422 = vmatpush.bf16.msra.mxu0 %v3335
        %3423 = vmatmul.bf16.gmra.mxu0 %v3227
        %v3424 = vpop.f32.mrf.mxu0
        %v3425 = vadd.f32 %v3255, %v3424
        %v3426 = vpop.f32.mrf.mxu0
        %v3427 = vadd.f32 %v3257, %v3426
        %3428 = vmatmul.bf16.gmra.mxu0 %v3228
        %v3429 = vpop.f32.mrf.mxu0
        %v3430 = vadd.f32 %v3259, %v3429
        %v3431 = vpop.f32.mrf.mxu0
        %v3432 = vadd.f32 %v3261, %v3431
        %3433 = vmatmul.bf16.gmra.mxu0 %v3229
        %v3434 = vpop.f32.mrf.mxu0
        %v3435 = vadd.f32 %v3263, %v3434
        %v3436 = vpop.f32.mrf.mxu0
        %v3437 = vadd.f32 %v3265, %v3436
        %3438 = vmatmul.bf16.gmra.mxu0 %v3230
        %v3439 = vpop.f32.mrf.mxu0
        %v3440 = vadd.f32 %v3267, %v3439
        %v3441 = vpop.f32.mrf.mxu0
        %v3442 = vadd.f32 %v3269, %v3441
        %3443 = vmatmul.bf16.gmra.mxu0 %v3231
        %v3444 = vpop.f32.mrf.mxu0
        %v3445 = vadd.f32 %v3271, %v3444
        %v3446 = vpop.f32.mrf.mxu0
        %v3447 = vadd.f32 %v3273, %v3446
        %3448 = vmatmul.bf16.gmra.mxu0 %v3232
        %v3449 = vpop.f32.mrf.mxu0
        %v3450 = vadd.f32 %v3275, %v3449
        %v3451 = vpop.f32.mrf.mxu0
        %v3452 = vadd.f32 %v3277, %v3451
        %3453 = vmatmul.bf16.gmra.mxu0 %v3233
        %v3454 = vpop.f32.mrf.mxu0
        %v3455 = vadd.f32 %v3279, %v3454
        %v3456 = vpop.f32.mrf.mxu0
        %v3457 = vadd.f32 %v3281, %v3456
        %3458 = vmatmul.bf16.gmra.mxu0 %v3234
        %v3459 = vpop.f32.mrf.mxu0
        %v3460 = vadd.f32 %v3283, %v3459
        %v3461 = vpop.f32.mrf.mxu0
        %v3462 = vadd.f32 %v3285, %v3461
        %3463 = vdwg.mxu0
        %v3464 = vld [vmem:[#allocation6] sm:$0xff]
        %v3465 = vld [vmem:[#allocation6 + $0x8] sm:$0xff]
        %v3466 = vadd.f32 %v3376, %v3464
        %v3467 = vadd.f32 %v3425, %v3465
        %v3468 = vadd.f32 %v3378, %v3464
        %v3469 = vadd.f32 %v3427, %v3465
        %v3470 = vadd.f32 %v3381, %v3464
        %v3471 = vadd.f32 %v3430, %v3465
        %v3472 = vadd.f32 %v3383, %v3464
        %v3473 = vadd.f32 %v3432, %v3465
        %v3474 = vadd.f32 %v3386, %v3464
        %v3475 = vadd.f32 %v3435, %v3465
        %v3476 = vadd.f32 %v3388, %v3464
        %v3477 = vadd.f32 %v3437, %v3465
        %v3478 = vadd.f32 %v3391, %v3464
        %v3479 = vadd.f32 %v3440, %v3465
        %v3480 = vadd.f32 %v3393, %v3464
        %v3481 = vadd.f32 %v3442, %v3465
        %v3482 = vadd.f32 %v3396, %v3464
        %v3483 = vadd.f32 %v3445, %v3465
        %v3484 = vadd.f32 %v3398, %v3464
        %v3485 = vadd.f32 %v3447, %v3465
        %v3486 = vadd.f32 %v3401, %v3464
        %v3487 = vadd.f32 %v3450, %v3465
        %v3488 = vadd.f32 %v3403, %v3464
        %v3489 = vadd.f32 %v3452, %v3465
        %v3490 = vadd.f32 %v3406, %v3464
        %v3491 = vadd.f32 %v3455, %v3465
        %v3492 = vadd.f32 %v3408, %v3464
        %v3493 = vadd.f32 %v3457, %v3465
        %v3494 = vadd.f32 %v3411, %v3464
        %v3495 = vadd.f32 %v3460, %v3465
        %v3496 = vadd.f32 %v3413, %v3464
        %v3497 = vadd.f32 %v3462, %v3465
        %v3498 = vmax.f32 %v3466, %v3467
        %v3499 = vmax.f32 %v3468, %v3469
        %v3500 = vmax.f32 %v3470, %v3471
        %v3501 = vmax.f32 %v3472, %v3473
        %v3502 = vmax.f32 %v3474, %v3475
        %v3503 = vmax.f32 %v3476, %v3477
        %v3504 = vmax.f32 %v3478, %v3479
        %v3505 = vmax.f32 %v3480, %v3481
        %v3506 = vmax.f32 %v3482, %v3483
        %v3507 = vmax.f32 %v3484, %v3485
        %v3508 = vmax.f32 %v3486, %v3487
        %v3509 = vmax.f32 %v3488, %v3489
        %v3510 = vmax.f32 %v3490, %v3491
        %v3511 = vmax.f32 %v3492, %v3493
        %v3512 = vmax.f32 %v3494, %v3495
        %v3513 = vmax.f32 %v3496, %v3497
        %v3514 = vpack.c.bf16 %v3499, %v3498
        %v3515 = vpack.c.bf16 %v3501, %v3500
        %v3516 = vpack.c.bf16 %v3503, %v3502
        %v3517 = vpack.c.bf16 %v3505, %v3504
        %v3518 = vpack.c.bf16 %v3507, %v3506
        %v3519 = vpack.c.bf16 %v3509, %v3508
        %v3520 = vpack.c.bf16 %v3511, %v3510
        %v3521 = vpack.c.bf16 %v3513, %v3512
        %v3522 = vld [vmem:[#allocation19] sm:$0xf]
        %v3523 = vld [vmem:[#allocation19 + $0x4] sm:$0xf]
        %v3524 = vld [vmem:[#allocation19 + $0x8] sm:$0xf]
        %v3525 = vld [vmem:[#allocation19 + $0xc] sm:$0xf]
        %v3526 = vld [vmem:[#allocation19 + $0x10] sm:$0xf]
        %v3527 = vld [vmem:[#allocation19 + $0x14] sm:$0xf]
        %v3528 = vld [vmem:[#allocation19 + $0x18] sm:$0xf]
        %v3529 = vld [vmem:[#allocation19 + $0x1c] sm:$0xf]
        %v3530 = vld [vmem:[#allocation19 + $0x20] sm:$0xf]
        %v3531 = vld [vmem:[#allocation19 + $0x24] sm:$0xf]
        %v3532 = vld [vmem:[#allocation19 + $0x28] sm:$0xf]
        %v3533 = vld [vmem:[#allocation19 + $0x2c] sm:$0xf]
        %v3534 = vld [vmem:[#allocation19 + $0x30] sm:$0xf]
        %v3535 = vld [vmem:[#allocation19 + $0x34] sm:$0xf]
        %v3536 = vld [vmem:[#allocation19 + $0x38] sm:$0xf]
        %v3537 = vld [vmem:[#allocation19 + $0x3c] sm:$0xf]
        %v3554 = vunpack.c.l.b16 %v3522
        %v3555 = vunpack.c.l.b16 %v3523
        %v3556 = vunpack.c.l.b16 %v3524
        %v3557 = vunpack.c.l.b16 %v3525
        %v3558 = vunpack.c.l.b16 %v3526
        %v3559 = vunpack.c.l.b16 %v3527
        %v3560 = vunpack.c.l.b16 %v3528
        %v3561 = vunpack.c.l.b16 %v3529
        %v3562 = vunpack.c.l.b16 %v3530
        %v3563 = vunpack.c.l.b16 %v3531
        %v3564 = vunpack.c.l.b16 %v3532
        %v3565 = vunpack.c.l.b16 %v3533
        %v3566 = vunpack.c.l.b16 %v3534
        %v3567 = vunpack.c.l.b16 %v3535
        %v3568 = vunpack.c.l.b16 %v3536
        %v3569 = vunpack.c.l.b16 %v3537
        %v3570 = vpack.c.b16 %v3555, %v3554
        %v3571 = vpack.c.b16 %v3557, %v3556
        %v3572 = vpack.c.b16 %v3559, %v3558
        %v3573 = vpack.c.b16 %v3561, %v3560
        %v3574 = vpack.c.b16 %v3563, %v3562
        %v3575 = vpack.c.b16 %v3565, %v3564
        %v3576 = vpack.c.b16 %v3567, %v3566
        %v3577 = vpack.c.b16 %v3569, %v3568
        %3586 = vmatpush.bf16.msra.mxu0 %v3577
        %3587 = vmatpush.bf16.msra.mxu0 %v3576
        %3588 = vmatpush.bf16.msra.mxu0 %v3575
        %3589 = vmatpush.bf16.msra.mxu0 %v3574
        %3590 = vmatpush.bf16.msra.mxu0 %v3573
        %3591 = vmatpush.bf16.msra.mxu0 %v3572
        %3592 = vmatpush.bf16.msra.mxu0 %v3571
        %3593 = vmatpush.bf16.msra.mxu0 %v3570
        %3594 = vmatmul.bf16.gmra.mxu0 %v3514
        %v3595 = vpop.f32.mrf.mxu0
        %v3596 = vadd.f32 0.0, %v3595
        %v3597 = vpop.f32.mrf.mxu0
        %v3598 = vadd.f32 0.0, %v3597
        %3599 = vmatmul.bf16.gmra.mxu0 %v3515
        %v3600 = vpop.f32.mrf.mxu0
        %v3601 = vadd.f32 0.0, %v3600
        %v3602 = vpop.f32.mrf.mxu0
        %v3603 = vadd.f32 0.0, %v3602
        %3604 = vmatmul.bf16.gmra.mxu0 %v3516
        %v3605 = vpop.f32.mrf.mxu0
        %v3606 = vadd.f32 0.0, %v3605
        %v3607 = vpop.f32.mrf.mxu0
        %v3608 = vadd.f32 0.0, %v3607
        %3609 = vmatmul.bf16.gmra.mxu0 %v3517
        %v3610 = vpop.f32.mrf.mxu0
        %v3611 = vadd.f32 0.0, %v3610
        %v3612 = vpop.f32.mrf.mxu0
        %v3613 = vadd.f32 0.0, %v3612
        %3614 = vmatmul.bf16.gmra.mxu0 %v3518
        %v3615 = vpop.f32.mrf.mxu0
        %v3616 = vadd.f32 0.0, %v3615
        %v3617 = vpop.f32.mrf.mxu0
        %v3618 = vadd.f32 0.0, %v3617
        %3619 = vmatmul.bf16.gmra.mxu0 %v3519
        %v3620 = vpop.f32.mrf.mxu0
        %v3621 = vadd.f32 0.0, %v3620
        %v3622 = vpop.f32.mrf.mxu0
        %v3623 = vadd.f32 0.0, %v3622
        %3624 = vmatmul.bf16.gmra.mxu0 %v3520
        %v3625 = vpop.f32.mrf.mxu0
        %v3626 = vadd.f32 0.0, %v3625
        %v3627 = vpop.f32.mrf.mxu0
        %v3628 = vadd.f32 0.0, %v3627
        %3629 = vmatmul.bf16.gmra.mxu0 %v3521
        %v3630 = vpop.f32.mrf.mxu0
        %v3631 = vadd.f32 0.0, %v3630
        %v3632 = vpop.f32.mrf.mxu0
        %v3633 = vadd.f32 0.0, %v3632
        %3634 = vdwg.mxu0
        %3635 = vst [vmem:[%s559] sm:$0xff] %v3596
        %3636 = vst [vmem:[%s559 + $0x8] sm:$0xff] %v3598
        %3637 = vst [vmem:[%s559 + $0x10] sm:$0xff] %v3601
        %3638 = vst [vmem:[%s559 + $0x18] sm:$0xff] %v3603
        %3639 = vst [vmem:[%s559 + $0x20] sm:$0xff] %v3606
        %3640 = vst [vmem:[%s559 + $0x28] sm:$0xff] %v3608
        %3641 = vst [vmem:[%s559 + $0x30] sm:$0xff] %v3611
        %3642 = vst [vmem:[%s559 + $0x38] sm:$0xff] %v3613
        %3643 = vst [vmem:[%s559 + $0x40] sm:$0xff] %v3616
        %3644 = vst [vmem:[%s559 + $0x48] sm:$0xff] %v3618
        %3645 = vst [vmem:[%s559 + $0x50] sm:$0xff] %v3621
        %3646 = vst [vmem:[%s559 + $0x58] sm:$0xff] %v3623
        %3647 = vst [vmem:[%s559 + $0x60] sm:$0xff] %v3626
        %3648 = vst [vmem:[%s559 + $0x68] sm:$0xff] %v3628
        %3649 = vst [vmem:[%s559 + $0x70] sm:$0xff] %v3631
        %3650 = vst [vmem:[%s559 + $0x78] sm:$0xff] %v3633
        %s3651 = sand.u32 %s308, 1
        %s3652 = scalar_lea.sflag [#allocation9], %s3651
        %s3653 = sand.u32 %s308, 1
        %s3654 = smul.addr %s3653, 128
        %s3655 = scalar_lea.vmem [#allocation21], %s3654
        // Predicated region
        $region105: #{tpu_custom_call.1} parent=67 // pred_check
          %p3656 = pneg %p318
        $region106: #{tpu_custom_call.1} parent=67 // pred_check_branch
          %3658 = sbr.rel (%p3656) target = $region108
        $region107: #{tpu_custom_call.1} parent=67 // pred_region
          %s3659 = ssub.s32 %s33, 1
          %p3660 = scmp.gt.s32.totalorder %s3659, 0
          %s3661 = scalar_select %p3660, %s3659, 0
          %s3662 = smul.u32 16, %s3661
          %3664 = vsyncadd %s3652, 0
          %s3665 = smul.addr %s3662, 8
          %s3666 = scalar_lea.hbm %s12, %s3665
          %s3667 = sshll.u32 %s3655, 4
          %s3668 = int_to_ptr.vmem [resolvable:$true] %s3667
          %s3669 = sshll.u32 %s3666, 4
          %s3670 = int_to_ptr.hbm [resolvable:$true] %s3669
          %3675 = dma.vmem_to_hbm [thread:$0]  %s3668, 2048, %s3670, %s3652, 128, 128, 8
        $region108: #{tpu_custom_call.1} parent=67 // pred_fallthru
          _
      $region68: #{tpu_custom_call.1} parent=5 // pred_fallthru
        _
      %p3676 = scmp.le.s32.totalorder 2, %s28
      // Predicated region
      $region109: #{tpu_custom_call.1} parent=5 // pred_check
        %p3677 = pneg %p3676
      $region110: #{tpu_custom_call.1} parent=5 // pred_check_branch
        %3679 = sbr.rel (%p3677) target = $region112
      $region111: #{tpu_custom_call.1} parent=5 // pred_region
        %s3680 = ssub.s32 %s28, 2
        // Predicated region
        $region113: #{tpu_custom_call.1} parent=111 // pred_check
          %p3681 = pneg %p324
        $region114: #{tpu_custom_call.1} parent=111 // pred_check_branch
          %3683 = sbr.rel (%p3681) target = $region116
        $region115: #{tpu_custom_call.1} parent=111 // pred_region
          %s3684 = sand.u32 %s309, 1
          %s3685 = scalar_lea.sflag [#allocation9], %s3684
          %s3686 = sand.u32 %s309, 1
          %s3687 = smul.addr %s3686, 128
          %s3688 = scalar_lea.vmem [#allocation21], %s3687
          %3690 = dma.done %s3685, 2048
        $region116: #{tpu_custom_call.1} parent=111 // pred_fallthru
          _
      $region112: #{tpu_custom_call.1} parent=5 // pred_fallthru
        _
    $region6: #{tpu_custom_call.1} parent=1 // loop_footer
      %s32 = sadd.s32 1, %s28
    $region7: #{tpu_custom_call.1} parent=1 // loop_footer_branch
      %27 = sbr.rel target = $region3
    $region8: #{tpu_custom_call.1} parent=1 // loop_exit
      _
    %3691 = vsyncpa [#allocation8], 1
    %s3692 = scalar_lea.sflag [#allocation8], 1
    %3693 = vsyncpa %s3692, 1
    %3694 = vsyncpa [#allocation11], 1
    %3695 = vsyncpa [#allocation14], 1
    %3696 = vsyncpa [#allocation17], 1
    %3697 = vsyncpa [#allocation20], 1
    %3698 = vsyncpa [#allocation9], 1
    %s3699 = scalar_lea.sflag [#allocation9], 1
    %3700 = vsyncpa %s3699, 1

</llo_original>
